<compile_context>
chip_gen: v6e
topology: v6e:2x2x1
jax: 0.10.0
libtpu: 0.0.40
codegen_flags: <defaults>
</compile_context>

<pallas_src>
import functools

import jax
import jax.numpy as jnp
from jax.experimental import pallas as pl
from jax.experimental.pallas import tpu as pltpu


def _round_up(x, m):
    return (x + m - 1) // m * m


# ---------------------------------------------------------------------------
# Tile selection.
# ---------------------------------------------------------------------------
_TK_CANDIDATES = (1024, 896, 768, 640, 512, 384, 256, 128)


def _choose_tk(kp):
    """kp is already a multiple of 128 (prepared weights)."""
    if kp <= 1024:
        return kp                      # single K step
    for cand in _TK_CANDIDATES:
        if kp % cand == 0:
            return cand
    return 128                         # unreachable: kp % 128 == 0


def _choose_tm(m):
    """Returns (tm, Mp); tm is always a multiple of 16.

    Small M (fc/head) -> one block; mid-size M -> two blocks so both v7x
    TensorCores get work; large M -> largest 16-aligned divisor tile <= 512 so
    no extra row padding is needed (fallback: pad to a 512 multiple)."""
    m16 = _round_up(m, 16)
    if m16 <= 64:
        return m16, m16
    if m16 <= 512:
        tm = _round_up(m16 // 2, 16)
        return tm, 2 * tm
    for cand in range(512, 127, -16):
        if m16 % cand == 0:
            return cand, m16
    return 512, _round_up(m16, 512)


# ---------------------------------------------------------------------------
# Fused matmul + bias + (optional) ReLU kernels (bf16 in, f32 accumulate).
# ---------------------------------------------------------------------------
def _matmul_bias_act_kernel(a_ref, b_ref, bias_ref, o_ref, *, apply_relu):
    """Single-K-step version: dot + bias (+ ReLU) epilogue, no scratch."""
    r = jnp.dot(a_ref[...], b_ref[...], preferred_element_type=jnp.float32)
    r = r + bias_ref[...]
    if apply_relu:
        r = jnp.maximum(r, 0.0)
    o_ref[...] = r.astype(o_ref.dtype)


def _matmul_bias_act_reduce_kernel(a_ref, b_ref, bias_ref, o_ref, acc_ref, *,
                                   apply_relu):
    """K tiled on grid axis 1; accumulate in f32 VMEM scratch."""
    k = pl.program_id(1)

    @pl.when(k == 0)
    def _():
        acc_ref[...] = jnp.zeros_like(acc_ref)

    acc_ref[...] += jnp.dot(a_ref[...], b_ref[...],
                            preferred_element_type=jnp.float32)

    @pl.when(k == pl.num_programs(1) - 1)
    def _():
        r = acc_ref[...] + bias_ref[...]
        if apply_relu:
            r = jnp.maximum(r, 0.0)
        o_ref[...] = r.astype(o_ref.dtype)


def matmul_bias_act(a, b_p, bias_p, *, apply_relu, n_out,
                    out_dtype=jnp.float32):
    """act(a @ b + bias).

    `b_p` is a pre-padded (Kp, Np) bf16 weight and `bias_p` a (1, Np) f32 bias
    (Kp, Np multiples of 128; prepared once).  `a` is the raw (M, K)
    activation; it is padded to (Mp, Kp) and cast to bf16 here (fuses under
    jit).  Returns the (M, n_out) `out_dtype` result.
    """
    m, k = a.shape
    kp, np_ = b_p.shape
    assert k <= kp and n_out <= np_

    tk = _choose_tk(kp)
    tm, mp = _choose_tm(m)
    nk = kp // tk
    nm = mp // tm

    a_p = jnp.pad(a, ((0, mp - m), (0, kp - k))).astype(jnp.bfloat16)

    cost = pl.CostEstimate(
        flops=2 * mp * kp * np_,
        transcendentals=0,
        bytes_accessed=a_p.size * 2 + b_p.size * 2
        + mp * np_ * jnp.dtype(out_dtype).itemsize,
    )

    if nk == 1:
        out = pl.pallas_call(
            functools.partial(_matmul_bias_act_kernel, apply_relu=apply_relu),
            out_shape=jax.ShapeDtypeStruct((mp, np_), out_dtype),
            grid_spec=pltpu.PrefetchScalarGridSpec(
                num_scalar_prefetch=0,
                grid=(nm,),
                in_specs=[
                    pl.BlockSpec((tm, kp), lambda i: (i, 0)),
                    pl.BlockSpec((kp, np_), lambda i: (0, 0)),
                    pl.BlockSpec((1, np_), lambda i: (0, 0)),
                ],
                out_specs=pl.BlockSpec((tm, np_), lambda i: (i, 0)),
            ),
            compiler_params=pltpu.CompilerParams(
                dimension_semantics=("parallel",)),
            cost_estimate=cost,
        )(a_p, b_p, bias_p)
    else:
        out = pl.pallas_call(
            functools.partial(_matmul_bias_act_reduce_kernel,
                              apply_relu=apply_relu),
            out_shape=jax.ShapeDtypeStruct((mp, np_), out_dtype),
            grid_spec=pltpu.PrefetchScalarGridSpec(
                num_scalar_prefetch=0,
                grid=(nm, nk),
                in_specs=[
                    pl.BlockSpec((tm, tk), lambda i, kk: (i, kk)),
                    pl.BlockSpec((tk, np_), lambda i, kk: (kk, 0)),
                    pl.BlockSpec((1, np_), lambda i, kk: (0, 0)),
                ],
                out_specs=pl.BlockSpec((tm, np_), lambda i, kk: (i, 0)),
                scratch_shapes=[pltpu.VMEM((tm, np_), jnp.float32)],
            ),
            compiler_params=pltpu.CompilerParams(
                dimension_semantics=("parallel", "arbitrary")),
            cost_estimate=cost,
        )(a_p, b_p, bias_p)

    if mp != m or np_ != n_out:
        out = out[:m, :n_out]
    return out


# ---------------------------------------------------------------------------
# Fused classifier head: fc1 (K-tiled, f32 acc) -> ReLU -> fc2 (+bias).
# ---------------------------------------------------------------------------
def _fc_head_kernel(a_ref, w1_ref, b1_ref, w2_ref, b2_ref, o_ref, acc_ref):
    k = pl.program_id(0)

    @pl.when(k == 0)
    def _():
        acc_ref[...] = jnp.zeros_like(acc_ref)

    acc_ref[...] += jnp.dot(a_ref[...], w1_ref[...],
                            preferred_element_type=jnp.float32)

    @pl.when(k == pl.num_programs(0) - 1)
    def _():
        h = jnp.maximum(acc_ref[...] + b1_ref[...], 0.0)       # fc1 + ReLU
        r = jnp.dot(h.astype(jnp.bfloat16), w2_ref[...],
                    preferred_element_type=jnp.float32)
        o_ref[...] = (r + b2_ref[...]).astype(o_ref.dtype)      # fc2 + bias


def fc_head(a, w1_p, b1_p, w2_p, b2_p, *, n_out):
    """relu(a @ w1 + b1) @ w2 + b2 in a single pallas_call (tiny M)."""
    m, k = a.shape
    kp, hid = w1_p.shape
    hid2, np2 = w2_p.shape
    assert hid == hid2 and k <= kp and n_out <= np2

    tk = _choose_tk(kp)
    nk = kp // tk
    mp = _round_up(m, 16)
    a_p = jnp.pad(a, ((0, mp - m), (0, kp - k))).astype(jnp.bfloat16)

    cost = pl.CostEstimate(
        flops=2 * mp * kp * hid + 2 * mp * hid * np2,
        transcendentals=0,
        bytes_accessed=a_p.size * 2 + w1_p.size * 2 + w2_p.size * 2
        + mp * np2 * 4,
    )

    out = pl.pallas_call(
        _fc_head_kernel,
        out_shape=jax.ShapeDtypeStruct((mp, np2), jnp.float32),
        grid_spec=pltpu.PrefetchScalarGridSpec(
            num_scalar_prefetch=0,
            grid=(nk,),
            in_specs=[
                pl.BlockSpec((mp, tk), lambda kk: (0, kk)),
                pl.BlockSpec((tk, hid), lambda kk: (kk, 0)),
                pl.BlockSpec((1, hid), lambda kk: (0, 0)),
                pl.BlockSpec((hid, np2), lambda kk: (0, 0)),
                pl.BlockSpec((1, np2), lambda kk: (0, 0)),
            ],
            out_specs=pl.BlockSpec((mp, np2), lambda kk: (0, 0)),
            scratch_shapes=[pltpu.VMEM((mp, hid), jnp.float32)],
        ),
        compiler_params=pltpu.CompilerParams(
            dimension_semantics=("arbitrary",)),
        cost_estimate=cost,
    )(a_p, w1_p, b1_p, w2_p, b2_p)

    return out[:m, :n_out]


# ---------------------------------------------------------------------------
# 2x2 / stride-2 max pool (NHWC), lane-dense elementwise-max kernel.
# ---------------------------------------------------------------------------
def _maxpool_kernel(a_ref, b_ref, c_ref, d_ref, o_ref):
    o_ref[...] = jnp.maximum(jnp.maximum(a_ref[...], b_ref[...]),
                             jnp.maximum(c_ref[...], d_ref[...]))


def maxpool2x2_nhwc(x):
    """Max pool on an NHWC tensor (even H, W).  The four taps are presented as
    lane-dense (N*H2, W2*C) slabs so loads/stores use full vector lanes."""
    # TODO(synk): fuse ReLU+pool into the conv matmul epilogue to skip this pass.
    n, h, w, c = x.shape
    h2, w2 = h // 2, w // 2
    shape = (n * h2, w2 * c)
    parts = [x[:, a::2, b::2, :].reshape(shape)
             for a in (0, 1) for b in (0, 1)]
    out = pl.pallas_call(
        _maxpool_kernel,
        out_shape=jax.ShapeDtypeStruct(shape, x.dtype),
        grid=(1,),
        in_specs=[pl.BlockSpec(shape, lambda i: (0, 0))] * 4,
        out_specs=pl.BlockSpec(shape, lambda i: (0, 0)),
    )(*parts)
    return out.reshape(n, h2, w2, c)


# ---------------------------------------------------------------------------
# Conv2d (valid, stride 1) + ReLU as NHWC im2col matmul.
# ---------------------------------------------------------------------------
def _im2col_nhwc(x, k):
    n, h, w, c = x.shape
    oh, ow = h - k + 1, w - k + 1
    cols = [x[:, i:i + oh, j:j + ow, :] for i in range(k) for j in range(k)]
    patches = jnp.stack(cols, axis=3)              # (N, OH, OW, k*k, C)
    return patches.reshape(n * oh * ow, k * k * c), oh, ow


def conv2d_relu_nhwc(x, w_p, bias_p, cout, ksize):
    n = x.shape[0]
    patches, oh, ow = _im2col_nhwc(x, ksize)       # bf16 patches
    out = matmul_bias_act(patches, w_p, bias_p, apply_relu=True, n_out=cout,
                          out_dtype=jnp.bfloat16)
    return out.reshape(n, oh, ow, cout)            # stays NHWC, no transpose


# ---------------------------------------------------------------------------
# Parameters (PyTorch layout) and one-time "weight migration" to kernel layout.
# ---------------------------------------------------------------------------
def init_params(key):
    ks = jax.random.split(key, 10)
    s = 0.05
    return {
        "conv1_w": jax.random.normal(ks[0], (32, 1, 3, 3), jnp.float32) * s,
        "conv1_b": jax.random.normal(ks[1], (32,), jnp.float32) * s,
        "conv2_w": jax.random.normal(ks[2], (64, 32, 3, 3), jnp.float32) * s,
        "conv2_b": jax.random.normal(ks[3], (64,), jnp.float32) * s,
        "conv3_w": jax.random.normal(ks[4], (128, 64, 3, 3), jnp.float32) * s,
        "conv3_b": jax.random.normal(ks[5], (128,), jnp.float32) * s,
        "fc1_w": jax.random.normal(ks[6], (512, 128 * 10 * 10), jnp.float32) * s,
        "fc1_b": jax.random.normal(ks[7], (512,), jnp.float32) * s,
        "fc2_w": jax.random.normal(ks[8], (10, 512), jnp.float32) * s,
        "fc2_b": jax.random.normal(ks[9], (10,), jnp.float32) * s,
    }


def prepare_params(params):
    """One-time migration: conv weights -> (KH*KW*Cin, Cout) bf16 padded to
    128-granules; fc weights -> (K, N) bf16 padded; biases -> (1, Np) f32.
    fc1's K axis is re-ordered from NCHW-flatten to NHWC-flatten order so the
    NHWC conv3 output can be flattened directly (same math as PyTorch)."""
    def conv(wname, bname):
        w, b = params[wname], params[bname]
        cout, cin, kh, kw = w.shape
        k = kh * kw * cin
        w_mat = w.transpose(2, 3, 1, 0).reshape(k, cout)     # (kh, kw, cin) x cout
        kp, np_ = _round_up(k, 128), _round_up(cout, 128)
        w_p = jnp.pad(w_mat, ((0, kp - k), (0, np_ - cout))).astype(jnp.bfloat16)
        b_p = jnp.pad(b.reshape(1, cout), ((0, 0), (0, np_ - cout)))
        return w_p, b_p

    def linear(wname, bname, reorder_nhwc=None):
        w, b = params[wname], params[bname]
        nout, k = w.shape
        if reorder_nhwc is not None:                          # (C, H, W) -> (H, W, C)
            c, hh, ww = reorder_nhwc
            w = w.reshape(nout, c, hh, ww).transpose(0, 2, 3, 1).reshape(nout, k)
        kp, np_ = _round_up(k, 128), _round_up(nout, 128)
        w_p = jnp.pad(w.T, ((0, kp - k), (0, np_ - nout))).astype(jnp.bfloat16)
        b_p = jnp.pad(b.reshape(1, nout), ((0, 0), (0, np_ - nout)))
        return w_p, b_p

    prep = {}
    prep["conv1_w"], prep["conv1_b"] = conv("conv1_w", "conv1_b")
    prep["conv2_w"], prep["conv2_b"] = conv("conv2_w", "conv2_b")
    prep["conv3_w"], prep["conv3_b"] = conv("conv3_w", "conv3_b")
    prep["fc1_w"], prep["fc1_b"] = linear("fc1_w", "fc1_b",
                                          reorder_nhwc=(128, 10, 10))
    prep["fc2_w"], prep["fc2_b"] = linear("fc2_w", "fc2_b")
    return prep


def my_module3_forward(x_nchw, prep):
    x = jnp.transpose(x_nchw, (0, 2, 3, 1)).astype(jnp.bfloat16)  # NCHW->NHWC once
    x = conv2d_relu_nhwc(x, prep["conv1_w"], prep["conv1_b"], 32, 3)   # (N,52,52,32)
    x = maxpool2x2_nhwc(x)                                             # (N,26,26,32)
    x = conv2d_relu_nhwc(x, prep["conv2_w"], prep["conv2_b"], 64, 3)   # (N,24,24,64)
    x = maxpool2x2_nhwc(x)                                             # (N,12,12,64)
    x = conv2d_relu_nhwc(x, prep["conv3_w"], prep["conv3_b"], 128, 3)  # (N,10,10,128)
    n = x.shape[0]
    x = x.reshape(n, 10 * 10 * 128)     # NHWC flatten; fc1 weight pre-reordered
    # Fused fc1 -> ReLU -> fc2 head (single pallas_call, f32 output).
    x = fc_head(x, prep["fc1_w"], prep["fc1_b"],
                prep["fc2_w"], prep["fc2_b"], n_out=10)
    return x


if __name__ == "__main__":
    key = jax.random.PRNGKey(0)
    pkey, xkey = jax.random.split(key)
    params = init_params(pkey)
    prep = prepare_params(params)
    # Spatial size must be 54x54 so the feature stack yields 128x10x10,
    # matching the classifier's fixed-size view(-1, 128*10*10).
    x = jax.random.normal(xkey, (2, 1, 54, 54), jnp.float32)
    fwd = jax.jit(my_module3_forward)
    out = jax.block_until_ready(fwd(x, prep))
    assert out.shape == (2, 10) and out.dtype == jnp.float32
    print("KERNEL_OK")
</pallas_src>

<mosaic_0001>
module attributes {stable_mosaic.version = 11 : i64} {
  func.func @_matmul_bias_act_kernel(%arg0: i32, %arg1: memref<416x128xbf16, #tpu.memory_space<vmem>>, %arg2: memref<128x128xbf16, #tpu.memory_space<vmem>>, %arg3: memref<1x128xf32, #tpu.memory_space<vmem>>, %arg4: memref<416x128xbf16, #tpu.memory_space<vmem>>) attributes {dimension_semantics = [#tpu.dimension_semantics<parallel>], iteration_bounds = array<i64: 13>, scalar_prefetch = 0 : i64, scratch_operands = 0 : i64, tpu.core_type = #tpu.core_type<tc>, window_params = [{transform_indices = @transform_0, window_bounds = array<i64: 416, 128>}, {pipeline_mode = #tpu.pipeline_mode<synchronous>, transform_indices = @transform_1, window_bounds = array<i64: 128, 128>}, {pipeline_mode = #tpu.pipeline_mode<synchronous>, transform_indices = @transform_2, window_bounds = array<i64: 1, 128>}, {transform_indices = @transform_3, window_bounds = array<i64: 416, 128>}]} {
    %c0 = arith.constant 0 : index
    %c0_0 = arith.constant 0 : index
    %0 = vector.load %arg1[%c0, %c0_0] : memref<416x128xbf16, #tpu.memory_space<vmem>>, vector<416x128xbf16>
    %c0_1 = arith.constant 0 : index
    %c0_2 = arith.constant 0 : index
    %1 = vector.load %arg2[%c0_1, %c0_2] : memref<128x128xbf16, #tpu.memory_space<vmem>>, vector<128x128xbf16>
    %cst = arith.constant dense<0.000000e+00> : vector<416x128xf32>
    %2 = tpu.matmul %0, %1, %cst {dimension_numbers = #tpu.dot_dimension_numbers<[1], [0], [0], [1], [0, 0, 1, 1], [], []>} : vector<416x128xbf16>, vector<128x128xbf16>, vector<416x128xf32> -> vector<416x128xf32>
    %c0_3 = arith.constant 0 : index
    %c0_4 = arith.constant 0 : index
    %3 = vector.load %arg3[%c0_3, %c0_4] : memref<1x128xf32, #tpu.memory_space<vmem>>, vector<1x128xf32>
    %4 = vector.broadcast %3 : vector<1x128xf32> to vector<416x128xf32>
    %5 = arith.addf %2, %4 : vector<416x128xf32>
    %cst_5 = arith.constant 0.000000e+00 : f32
    %6 = vector.broadcast %cst_5 : f32 to vector<416x128xf32>
    %7 = arith.maximumf %5, %6 : vector<416x128xf32>
    %8 = arith.truncf %7 : vector<416x128xf32> to vector<416x128xbf16>
    %c0_6 = arith.constant 0 : index
    %c0_7 = arith.constant 0 : index
    %9 = vector.load %arg4[%c0_6, %c0_7] : memref<416x128xbf16, #tpu.memory_space<vmem>>, vector<416x128xbf16>
    tpu.vector_store %arg4[%c0_6, %c0_7], %8 {strides = array<i32>} : memref<416x128xbf16, #tpu.memory_space<vmem>>, vector<416x128xbf16>,
    return
  }
  func.func @transform_0(%arg0: i32) -> (i32, i32) {
    %c0_i32 = arith.constant 0 : i32
    %c0_i32_0 = arith.constant 0 : i32
    return %arg0, %c0_i32 : i32, i32
  }
  func.func @transform_1(%arg0: i32) -> (i32, i32) {
    %c0_i32 = arith.constant 0 : i32
    %c0_i32_0 = arith.constant 0 : i32
    %c0_i32_1 = arith.constant 0 : i32
    return %c0_i32, %c0_i32_0 : i32, i32
  }
  func.func @transform_2(%arg0: i32) -> (i32, i32) {
    %c0_i32 = arith.constant 0 : i32
    %c0_i32_0 = arith.constant 0 : i32
    %c0_i32_1 = arith.constant 0 : i32
    return %c0_i32, %c0_i32_0 : i32, i32
  }
  func.func @transform_3(%arg0: i32) -> (i32, i32) {
    %c0_i32 = arith.constant 0 : i32
    %c0_i32_0 = arith.constant 0 : i32
    return %arg0, %c0_i32 : i32, i32
  }
}

module attributes {stable_mosaic.version = 11 : i64} {
  func.func @_maxpool_kernel(%arg0: i32, %arg1: memref<52x832xbf16, #tpu.memory_space<vmem>>, %arg2: memref<52x832xbf16, #tpu.memory_space<vmem>>, %arg3: memref<52x832xbf16, #tpu.memory_space<vmem>>, %arg4: memref<52x832xbf16, #tpu.memory_space<vmem>>, %arg5: memref<52x832xbf16, #tpu.memory_space<vmem>>) attributes {dimension_semantics = [#tpu.dimension_semantics<arbitrary>], iteration_bounds = array<i64: 1>, scalar_prefetch = 0 : i64, scratch_operands = 0 : i64, tpu.core_type = #tpu.core_type<tc>, window_params = [{pipeline_mode = #tpu.pipeline_mode<synchronous>, transform_indices = @transform_0, window_bounds = array<i64: 52, 832>}, {pipeline_mode = #tpu.pipeline_mode<synchronous>, transform_indices = @transform_1, window_bounds = array<i64: 52, 832>}, {pipeline_mode = #tpu.pipeline_mode<synchronous>, transform_indices = @transform_2, window_bounds = array<i64: 52, 832>}, {pipeline_mode = #tpu.pipeline_mode<synchronous>, transform_indices = @transform_3, window_bounds = array<i64: 52, 832>}, {pipeline_mode = #tpu.pipeline_mode<synchronous>, transform_indices = @transform_4, window_bounds = array<i64: 52, 832>}]} {
    %c0 = arith.constant 0 : index
    %c0_0 = arith.constant 0 : index
    %0 = vector.load %arg1[%c0, %c0_0] : memref<52x832xbf16, #tpu.memory_space<vmem>>, vector<52x832xbf16>
    %c0_1 = arith.constant 0 : index
    %c0_2 = arith.constant 0 : index
    %1 = vector.load %arg2[%c0_1, %c0_2] : memref<52x832xbf16, #tpu.memory_space<vmem>>, vector<52x832xbf16>
    %2 = arith.maximumf %0, %1 : vector<52x832xbf16>
    %c0_3 = arith.constant 0 : index
    %c0_4 = arith.constant 0 : index
    %3 = vector.load %arg3[%c0_3, %c0_4] : memref<52x832xbf16, #tpu.memory_space<vmem>>, vector<52x832xbf16>
    %c0_5 = arith.constant 0 : index
    %c0_6 = arith.constant 0 : index
    %4 = vector.load %arg4[%c0_5, %c0_6] : memref<52x832xbf16, #tpu.memory_space<vmem>>, vector<52x832xbf16>
    %5 = arith.maximumf %3, %4 : vector<52x832xbf16>
    %6 = arith.maximumf %2, %5 : vector<52x832xbf16>
    %c0_7 = arith.constant 0 : index
    %c0_8 = arith.constant 0 : index
    %7 = vector.load %arg5[%c0_7, %c0_8] : memref<52x832xbf16, #tpu.memory_space<vmem>>, vector<52x832xbf16>
    tpu.vector_store %arg5[%c0_7, %c0_8], %6 {strides = array<i32>} : memref<52x832xbf16, #tpu.memory_space<vmem>>, vector<52x832xbf16>,
    return
  }
  func.func @transform_0(%arg0: i32) -> (i32, i32) {
    %c0_i32 = arith.constant 0 : i32
    %c0_i32_0 = arith.constant 0 : i32
    %c0_i32_1 = arith.constant 0 : i32
    return %c0_i32, %c0_i32_0 : i32, i32
  }
  func.func @transform_1(%arg0: i32) -> (i32, i32) {
    %c0_i32 = arith.constant 0 : i32
    %c0_i32_0 = arith.constant 0 : i32
    %c0_i32_1 = arith.constant 0 : i32
    return %c0_i32, %c0_i32_0 : i32, i32
  }
  func.func @transform_2(%arg0: i32) -> (i32, i32) {
    %c0_i32 = arith.constant 0 : i32
    %c0_i32_0 = arith.constant 0 : i32
    %c0_i32_1 = arith.constant 0 : i32
    return %c0_i32, %c0_i32_0 : i32, i32
  }
  func.func @transform_3(%arg0: i32) -> (i32, i32) {
    %c0_i32 = arith.constant 0 : i32
    %c0_i32_0 = arith.constant 0 : i32
    %c0_i32_1 = arith.constant 0 : i32
    return %c0_i32, %c0_i32_0 : i32, i32
  }
  func.func @transform_4(%arg0: i32) -> (i32, i32) {
    %c0_i32 = arith.constant 0 : i32
    %c0_i32_0 = arith.constant 0 : i32
    %c0_i32_1 = arith.constant 0 : i32
    return %c0_i32, %c0_i32_0 : i32, i32
  }
}

module attributes {stable_mosaic.version = 11 : i64} {
  func.func @_matmul_bias_act_kernel(%arg0: i32, %arg1: memref<384x384xbf16, #tpu.memory_space<vmem>>, %arg2: memref<384x128xbf16, #tpu.memory_space<vmem>>, %arg3: memref<1x128xf32, #tpu.memory_space<vmem>>, %arg4: memref<384x128xbf16, #tpu.memory_space<vmem>>) attributes {dimension_semantics = [#tpu.dimension_semantics<parallel>], iteration_bounds = array<i64: 3>, scalar_prefetch = 0 : i64, scratch_operands = 0 : i64, tpu.core_type = #tpu.core_type<tc>, window_params = [{transform_indices = @transform_0, window_bounds = array<i64: 384, 384>}, {pipeline_mode = #tpu.pipeline_mode<synchronous>, transform_indices = @transform_1, window_bounds = array<i64: 384, 128>}, {pipeline_mode = #tpu.pipeline_mode<synchronous>, transform_indices = @transform_2, window_bounds = array<i64: 1, 128>}, {transform_indices = @transform_3, window_bounds = array<i64: 384, 128>}]} {
    %c0 = arith.constant 0 : index
    %c0_0 = arith.constant 0 : index
    %0 = vector.load %arg1[%c0, %c0_0] : memref<384x384xbf16, #tpu.memory_space<vmem>>, vector<384x384xbf16>
    %c0_1 = arith.constant 0 : index
    %c0_2 = arith.constant 0 : index
    %1 = vector.load %arg2[%c0_1, %c0_2] : memref<384x128xbf16, #tpu.memory_space<vmem>>, vector<384x128xbf16>
    %cst = arith.constant dense<0.000000e+00> : vector<384x128xf32>
    %2 = tpu.matmul %0, %1, %cst {dimension_numbers = #tpu.dot_dimension_numbers<[1], [0], [0], [1], [0, 0, 1, 1], [], []>} : vector<384x384xbf16>, vector<384x128xbf16>, vector<384x128xf32> -> vector<384x128xf32>
    %c0_3 = arith.constant 0 : index
    %c0_4 = arith.constant 0 : index
    %3 = vector.load %arg3[%c0_3, %c0_4] : memref<1x128xf32, #tpu.memory_space<vmem>>, vector<1x128xf32>
    %4 = vector.broadcast %3 : vector<1x128xf32> to vector<384x128xf32>
    %5 = arith.addf %2, %4 : vector<384x128xf32>
    %cst_5 = arith.constant 0.000000e+00 : f32
    %6 = vector.broadcast %cst_5 : f32 to vector<384x128xf32>
    %7 = arith.maximumf %5, %6 : vector<384x128xf32>
    %8 = arith.truncf %7 : vector<384x128xf32> to vector<384x128xbf16>
    %c0_6 = arith.constant 0 : index
    %c0_7 = arith.constant 0 : index
    %9 = vector.load %arg4[%c0_6, %c0_7] : memref<384x128xbf16, #tpu.memory_space<vmem>>, vector<384x128xbf16>
    tpu.vector_store %arg4[%c0_6, %c0_7], %8 {strides = array<i32>} : memref<384x128xbf16, #tpu.memory_space<vmem>>, vector<384x128xbf16>,
    return
  }
  func.func @transform_0(%arg0: i32) -> (i32, i32) {
    %c0_i32 = arith.constant 0 : i32
    %c0_i32_0 = arith.constant 0 : i32
    return %arg0, %c0_i32 : i32, i32
  }
  func.func @transform_1(%arg0: i32) -> (i32, i32) {
    %c0_i32 = arith.constant 0 : i32
    %c0_i32_0 = arith.constant 0 : i32
    %c0_i32_1 = arith.constant 0 : i32
    return %c0_i32, %c0_i32_0 : i32, i32
  }
  func.func @transform_2(%arg0: i32) -> (i32, i32) {
    %c0_i32 = arith.constant 0 : i32
    %c0_i32_0 = arith.constant 0 : i32
    %c0_i32_1 = arith.constant 0 : i32
    return %c0_i32, %c0_i32_0 : i32, i32
  }
  func.func @transform_3(%arg0: i32) -> (i32, i32) {
    %c0_i32 = arith.constant 0 : i32
    %c0_i32_0 = arith.constant 0 : i32
    return %arg0, %c0_i32 : i32, i32
  }
}

module attributes {stable_mosaic.version = 11 : i64} {
  func.func @_maxpool_kernel(%arg0: i32, %arg1: memref<24x768xbf16, #tpu.memory_space<vmem>>, %arg2: memref<24x768xbf16, #tpu.memory_space<vmem>>, %arg3: memref<24x768xbf16, #tpu.memory_space<vmem>>, %arg4: memref<24x768xbf16, #tpu.memory_space<vmem>>, %arg5: memref<24x768xbf16, #tpu.memory_space<vmem>>) attributes {dimension_semantics = [#tpu.dimension_semantics<arbitrary>], iteration_bounds = array<i64: 1>, scalar_prefetch = 0 : i64, scratch_operands = 0 : i64, tpu.core_type = #tpu.core_type<tc>, window_params = [{pipeline_mode = #tpu.pipeline_mode<synchronous>, transform_indices = @transform_0, window_bounds = array<i64: 24, 768>}, {pipeline_mode = #tpu.pipeline_mode<synchronous>, transform_indices = @transform_1, window_bounds = array<i64: 24, 768>}, {pipeline_mode = #tpu.pipeline_mode<synchronous>, transform_indices = @transform_2, window_bounds = array<i64: 24, 768>}, {pipeline_mode = #tpu.pipeline_mode<synchronous>, transform_indices = @transform_3, window_bounds = array<i64: 24, 768>}, {pipeline_mode = #tpu.pipeline_mode<synchronous>, transform_indices = @transform_4, window_bounds = array<i64: 24, 768>}]} {
    %c0 = arith.constant 0 : index
    %c0_0 = arith.constant 0 : index
    %0 = vector.load %arg1[%c0, %c0_0] : memref<24x768xbf16, #tpu.memory_space<vmem>>, vector<24x768xbf16>
    %c0_1 = arith.constant 0 : index
    %c0_2 = arith.constant 0 : index
    %1 = vector.load %arg2[%c0_1, %c0_2] : memref<24x768xbf16, #tpu.memory_space<vmem>>, vector<24x768xbf16>
    %2 = arith.maximumf %0, %1 : vector<24x768xbf16>
    %c0_3 = arith.constant 0 : index
    %c0_4 = arith.constant 0 : index
    %3 = vector.load %arg3[%c0_3, %c0_4] : memref<24x768xbf16, #tpu.memory_space<vmem>>, vector<24x768xbf16>
    %c0_5 = arith.constant 0 : index
    %c0_6 = arith.constant 0 : index
    %4 = vector.load %arg4[%c0_5, %c0_6] : memref<24x768xbf16, #tpu.memory_space<vmem>>, vector<24x768xbf16>
    %5 = arith.maximumf %3, %4 : vector<24x768xbf16>
    %6 = arith.maximumf %2, %5 : vector<24x768xbf16>
    %c0_7 = arith.constant 0 : index
    %c0_8 = arith.constant 0 : index
    %7 = vector.load %arg5[%c0_7, %c0_8] : memref<24x768xbf16, #tpu.memory_space<vmem>>, vector<24x768xbf16>
    tpu.vector_store %arg5[%c0_7, %c0_8], %6 {strides = array<i32>} : memref<24x768xbf16, #tpu.memory_space<vmem>>, vector<24x768xbf16>,
    return
  }
  func.func @transform_0(%arg0: i32) -> (i32, i32) {
    %c0_i32 = arith.constant 0 : i32
    %c0_i32_0 = arith.constant 0 : i32
    %c0_i32_1 = arith.constant 0 : i32
    return %c0_i32, %c0_i32_0 : i32, i32
  }
  func.func @transform_1(%arg0: i32) -> (i32, i32) {
    %c0_i32 = arith.constant 0 : i32
    %c0_i32_0 = arith.constant 0 : i32
    %c0_i32_1 = arith.constant 0 : i32
    return %c0_i32, %c0_i32_0 : i32, i32
  }
  func.func @transform_2(%arg0: i32) -> (i32, i32) {
    %c0_i32 = arith.constant 0 : i32
    %c0_i32_0 = arith.constant 0 : i32
    %c0_i32_1 = arith.constant 0 : i32
    return %c0_i32, %c0_i32_0 : i32, i32
  }
  func.func @transform_3(%arg0: i32) -> (i32, i32) {
    %c0_i32 = arith.constant 0 : i32
    %c0_i32_0 = arith.constant 0 : i32
    %c0_i32_1 = arith.constant 0 : i32
    return %c0_i32, %c0_i32_0 : i32, i32
  }
  func.func @transform_4(%arg0: i32) -> (i32, i32) {
    %c0_i32 = arith.constant 0 : i32
    %c0_i32_0 = arith.constant 0 : i32
    %c0_i32_1 = arith.constant 0 : i32
    return %c0_i32, %c0_i32_0 : i32, i32
  }
}

module attributes {stable_mosaic.version = 11 : i64} {
  func.func @_matmul_bias_act_kernel(%arg0: i32, %arg1: memref<112x640xbf16, #tpu.memory_space<vmem>>, %arg2: memref<640x128xbf16, #tpu.memory_space<vmem>>, %arg3: memref<1x128xf32, #tpu.memory_space<vmem>>, %arg4: memref<112x128xbf16, #tpu.memory_space<vmem>>) attributes {dimension_semantics = [#tpu.dimension_semantics<parallel>], iteration_bounds = array<i64: 2>, scalar_prefetch = 0 : i64, scratch_operands = 0 : i64, tpu.core_type = #tpu.core_type<tc>, window_params = [{transform_indices = @transform_0, window_bounds = array<i64: 112, 640>}, {pipeline_mode = #tpu.pipeline_mode<synchronous>, transform_indices = @transform_1, window_bounds = array<i64: 640, 128>}, {pipeline_mode = #tpu.pipeline_mode<synchronous>, transform_indices = @transform_2, window_bounds = array<i64: 1, 128>}, {transform_indices = @transform_3, window_bounds = array<i64: 112, 128>}]} {
    %c0 = arith.constant 0 : index
    %c0_0 = arith.constant 0 : index
    %0 = vector.load %arg1[%c0, %c0_0] : memref<112x640xbf16, #tpu.memory_space<vmem>>, vector<112x640xbf16>
    %c0_1 = arith.constant 0 : index
    %c0_2 = arith.constant 0 : index
    %1 = vector.load %arg2[%c0_1, %c0_2] : memref<640x128xbf16, #tpu.memory_space<vmem>>, vector<640x128xbf16>
    %cst = arith.constant dense<0.000000e+00> : vector<112x128xf32>
    %2 = tpu.matmul %0, %1, %cst {dimension_numbers = #tpu.dot_dimension_numbers<[1], [0], [0], [1], [0, 0, 1, 1], [], []>} : vector<112x640xbf16>, vector<640x128xbf16>, vector<112x128xf32> -> vector<112x128xf32>
    %c0_3 = arith.constant 0 : index
    %c0_4 = arith.constant 0 : index
    %3 = vector.load %arg3[%c0_3, %c0_4] : memref<1x128xf32, #tpu.memory_space<vmem>>, vector<1x128xf32>
    %4 = vector.broadcast %3 : vector<1x128xf32> to vector<112x128xf32>
    %5 = arith.addf %2, %4 : vector<112x128xf32>
    %cst_5 = arith.constant 0.000000e+00 : f32
    %6 = vector.broadcast %cst_5 : f32 to vector<112x128xf32>
    %7 = arith.maximumf %5, %6 : vector<112x128xf32>
    %8 = arith.truncf %7 : vector<112x128xf32> to vector<112x128xbf16>
    %c0_6 = arith.constant 0 : index
    %c0_7 = arith.constant 0 : index
    %9 = vector.load %arg4[%c0_6, %c0_7] : memref<112x128xbf16, #tpu.memory_space<vmem>>, vector<112x128xbf16>
    tpu.vector_store %arg4[%c0_6, %c0_7], %8 {strides = array<i32>} : memref<112x128xbf16, #tpu.memory_space<vmem>>, vector<112x128xbf16>,
    return
  }
  func.func @transform_0(%arg0: i32) -> (i32, i32) {
    %c0_i32 = arith.constant 0 : i32
    %c0_i32_0 = arith.constant 0 : i32
    return %arg0, %c0_i32 : i32, i32
  }
  func.func @transform_1(%arg0: i32) -> (i32, i32) {
    %c0_i32 = arith.constant 0 : i32
    %c0_i32_0 = arith.constant 0 : i32
    %c0_i32_1 = arith.constant 0 : i32
    return %c0_i32, %c0_i32_0 : i32, i32
  }
  func.func @transform_2(%arg0: i32) -> (i32, i32) {
    %c0_i32 = arith.constant 0 : i32
    %c0_i32_0 = arith.constant 0 : i32
    %c0_i32_1 = arith.constant 0 : i32
    return %c0_i32, %c0_i32_0 : i32, i32
  }
  func.func @transform_3(%arg0: i32) -> (i32, i32) {
    %c0_i32 = arith.constant 0 : i32
    %c0_i32_0 = arith.constant 0 : i32
    return %arg0, %c0_i32 : i32, i32
  }
}

module attributes {stable_mosaic.version = 11 : i64} {
  func.func @_fc_head_kernel(%arg0: i32, %arg1: memref<16x640xbf16, #tpu.memory_space<vmem>>, %arg2: memref<640x512xbf16, #tpu.memory_space<vmem>>, %arg3: memref<1x512xf32, #tpu.memory_space<vmem>>, %arg4: memref<512x128xbf16, #tpu.memory_space<vmem>>, %arg5: memref<1x128xf32, #tpu.memory_space<vmem>>, %arg6: memref<16x128xf32, #tpu.memory_space<vmem>>, %arg7: memref<16x512xf32, #tpu.memory_space<vmem>>) attributes {dimension_semantics = [#tpu.dimension_semantics<arbitrary>], iteration_bounds = array<i64: 20>, scalar_prefetch = 0 : i64, scratch_operands = 1 : i64, tpu.core_type = #tpu.core_type<tc>, window_params = [{transform_indices = @transform_0, window_bounds = array<i64: 16, 640>}, {transform_indices = @transform_1, window_bounds = array<i64: 640, 512>}, {pipeline_mode = #tpu.pipeline_mode<synchronous>, transform_indices = @transform_2, window_bounds = array<i64: 1, 512>}, {pipeline_mode = #tpu.pipeline_mode<synchronous>, transform_indices = @transform_3, window_bounds = array<i64: 512, 128>}, {pipeline_mode = #tpu.pipeline_mode<synchronous>, transform_indices = @transform_4, window_bounds = array<i64: 1, 128>}, {pipeline_mode = #tpu.pipeline_mode<synchronous>, transform_indices = @transform_5, window_bounds = array<i64: 16, 128>}]} {
    %c0_i32 = arith.constant 0 : i32
    %0 = arith.cmpi eq, %arg0, %c0_i32 : i32
    %1 = arith.extui %0 : i1 to i32
    %c0_i32_0 = arith.constant 0 : i32
    %2 = arith.cmpi ne, %1, %c0_i32_0 : i32
    scf.if %2 {
      %cst_9 = arith.constant 0.000000e+00 : f32
      %12 = vector.broadcast %cst_9 : f32 to vector<16x512xf32>
      %c0_10 = arith.constant 0 : index
      %c0_11 = arith.constant 0 : index
      %13 = vector.load %arg7[%c0_10, %c0_11] : memref<16x512xf32, #tpu.memory_space<vmem>>, vector<16x512xf32>
      tpu.vector_store %arg7[%c0_10, %c0_11], %12 {strides = array<i32>} : memref<16x512xf32, #tpu.memory_space<vmem>>, vector<16x512xf32>,
    } else {
    }
    %c0 = arith.constant 0 : index
    %c0_1 = arith.constant 0 : index
    %3 = vector.load %arg7[%c0, %c0_1] : memref<16x512xf32, #tpu.memory_space<vmem>>, vector<16x512xf32>
    %c0_2 = arith.constant 0 : index
    %c0_3 = arith.constant 0 : index
    %4 = vector.load %arg1[%c0_2, %c0_3] : memref<16x640xbf16, #tpu.memory_space<vmem>>, vector<16x640xbf16>
    %c0_4 = arith.constant 0 : index
    %c0_5 = arith.constant 0 : index
    %5 = vector.load %arg2[%c0_4, %c0_5] : memref<640x512xbf16, #tpu.memory_space<vmem>>, vector<640x512xbf16>
    %cst = arith.constant dense<0.000000e+00> : vector<16x512xf32>
    %6 = tpu.matmul %4, %5, %cst {dimension_numbers = #tpu.dot_dimension_numbers<[1], [0], [0], [1], [0, 0, 1, 1], [], []>} : vector<16x640xbf16>, vector<640x512xbf16>, vector<16x512xf32> -> vector<16x512xf32>
    %7 = arith.addf %3, %6 : vector<16x512xf32>
    %c0_6 = arith.constant 0 : index
    %c0_7 = arith.constant 0 : index
    %8 = vector.load %arg7[%c0_6, %c0_7] : memref<16x512xf32, #tpu.memory_space<vmem>>, vector<16x512xf32>
    tpu.vector_store %arg7[%c0_6, %c0_7], %7 {strides = array<i32>} : memref<16x512xf32, #tpu.memory_space<vmem>>, vector<16x512xf32>,
    %c19_i32 = arith.constant 19 : i32
    %9 = arith.cmpi eq, %arg0, %c19_i32 : i32
    %10 = arith.extui %9 : i1 to i32
    %c0_i32_8 = arith.constant 0 : i32
    %11 = arith.cmpi ne, %10, %c0_i32_8 : i32
    scf.if %11 {
      %c0_9 = arith.constant 0 : index
      %c0_10 = arith.constant 0 : index
      %12 = vector.load %arg7[%c0_9, %c0_10] : memref<16x512xf32, #tpu.memory_space<vmem>>, vector<16x512xf32>
      %c0_11 = arith.constant 0 : index
      %c0_12 = arith.constant 0 : index
      %13 = vector.load %arg3[%c0_11, %c0_12] : memref<1x512xf32, #tpu.memory_space<vmem>>, vector<1x512xf32>
      %14 = vector.broadcast %13 : vector<1x512xf32> to vector<16x512xf32>
      %15 = arith.addf %12, %14 : vector<16x512xf32>
      %cst_13 = arith.constant 0.000000e+00 : f32
      %16 = vector.broadcast %cst_13 : f32 to vector<16x512xf32>
      %17 = arith.maximumf %15, %16 : vector<16x512xf32>
      %18 = arith.truncf %17 : vector<16x512xf32> to vector<16x512xbf16>
      %c0_14 = arith.constant 0 : index
      %c0_15 = arith.constant 0 : index
      %19 = vector.load %arg4[%c0_14, %c0_15] : memref<512x128xbf16, #tpu.memory_space<vmem>>, vector<512x128xbf16>
      %cst_16 = arith.constant dense<0.000000e+00> : vector<16x128xf32>
      %20 = tpu.matmul %18, %19, %cst_16 {dimension_numbers = #tpu.dot_dimension_numbers<[1], [0], [0], [1], [0, 0, 1, 1], [], []>} : vector<16x512xbf16>, vector<512x128xbf16>, vector<16x128xf32> -> vector<16x128xf32>
      %c0_17 = arith.constant 0 : index
      %c0_18 = arith.constant 0 : index
      %21 = vector.load %arg5[%c0_17, %c0_18] : memref<1x128xf32, #tpu.memory_space<vmem>>, vector<1x128xf32>
      %22 = vector.broadcast %21 : vector<1x128xf32> to vector<16x128xf32>
      %23 = arith.addf %20, %22 : vector<16x128xf32>
      %c0_19 = arith.constant 0 : index
      %c0_20 = arith.constant 0 : index
      %24 = vector.load %arg6[%c0_19, %c0_20] : memref<16x128xf32, #tpu.memory_space<vmem>>, vector<16x128xf32>
      tpu.vector_store %arg6[%c0_19, %c0_20], %23 {strides = array<i32>} : memref<16x128xf32, #tpu.memory_space<vmem>>, vector<16x128xf32>,
    } else {
    }
    return
  }
  func.func @transform_0(%arg0: i32) -> (i32, i32) {
    %c0_i32 = arith.constant 0 : i32
    %c0_i32_0 = arith.constant 0 : i32
    return %c0_i32, %arg0 : i32, i32
  }
  func.func @transform_1(%arg0: i32) -> (i32, i32) {
    %c0_i32 = arith.constant 0 : i32
    %c0_i32_0 = arith.constant 0 : i32
    return %arg0, %c0_i32 : i32, i32
  }
  func.func @transform_2(%arg0: i32) -> (i32, i32) {
    %c0_i32 = arith.constant 0 : i32
    %c0_i32_0 = arith.constant 0 : i32
    %c0_i32_1 = arith.constant 0 : i32
    return %c0_i32, %c0_i32_0 : i32, i32
  }
  func.func @transform_3(%arg0: i32) -> (i32, i32) {
    %c0_i32 = arith.constant 0 : i32
    %c0_i32_0 = arith.constant 0 : i32
    %c0_i32_1 = arith.constant 0 : i32
    return %c0_i32, %c0_i32_0 : i32, i32
  }
  func.func @transform_4(%arg0: i32) -> (i32, i32) {
    %c0_i32 = arith.constant 0 : i32
    %c0_i32_0 = arith.constant 0 : i32
    %c0_i32_1 = arith.constant 0 : i32
    return %c0_i32, %c0_i32_0 : i32, i32
  }
  func.func @transform_5(%arg0: i32) -> (i32, i32) {
    %c0_i32 = arith.constant 0 : i32
    %c0_i32_0 = arith.constant 0 : i32
    %c0_i32_1 = arith.constant 0 : i32
    return %c0_i32, %c0_i32_0 : i32, i32
  }
}

</mosaic_0001>

<llo_original>
// kernel: my_module3_forward.6
$region0: #{my_module3_forward.6}
  #allocation0 [shape = 'u32[]', space=smem, size = 0x4, offset = 0x4, fixed_abs, tag = 'smem constant byte address 0x4 - core index']
  #allocation1 [shape = 'u32[144,128]{1,0:T(1,128)}', space=vmem, size = 0x12000, scoped, tag = 'internal scratch']
  %s0 = inlined_call_operand.vmem [shape: bf16[5408,128], index: 0, kind: input, shape index: {}]
  %s1 = inlined_call_operand.vmem [shape: bf16[128,128], index: 1, kind: input, shape index: {}]
  %s2 = inlined_call_operand.vmem [shape: f32[1,128], index: 2, kind: input, shape index: {}]
  %s3 = inlined_call_operand.vmem [shape: bf16[5408,128], index: 3, kind: output, shape index: {}]
  %s4 = sld [smem:[#allocation0]]
  $region45: #{my_module3_forward.6} parent=0
    _
  %s6 = ssub.s32 1, %s4
  %s7 = scalar_select 0, %s6, %s4
  loop: start=0, step=1, limit=15
  $region2: #{my_module3_forward.6} parent=0 // loop_pre_header
    _
  $region3: #{my_module3_forward.6} parent=0 // loop_header
    %s9 = sphi 0, %s13
    %p10 = scmp.ge.s32.totalorder %s9, 15
    %s19 = sphi 0, %s21
    %s22 = sphi 0, %s19
    %s23 = sphi 0, %s22
    %s39 = sphi 0, %s23
    %s43 = sphi 0, %s43
    %s45 = sphi 0, %s43
    %s46 = sphi 0, %s45
    %s60 = sphi 0, %s46
    %s64 = sphi 0, %s64
    %s66 = sphi 0, %s64
    %s67 = sphi 0, %s66
    %s81 = sphi 0, %s67
    %s87 = sphi 0, %s89
    %s90 = sphi 0, %s87
    %s91 = sphi 0, %s90
    %s107 = sphi 0, %s91
  $region4: #{my_module3_forward.6} parent=0 // loop_header_branch
    %12 = sbr.rel (%p10) target = $region8
  $region5: #{my_module3_forward.6} parent=0 // loop_body
    %s14 = ssub.s32 %s9, 1
    %s15 = ssub.s32 %s9, 2
    %s16 = sadd.s32 %s9, 1
    %s17 = ssub.s32 %s9, %s16
    %p18 = scmp.eq.s32.totalorder %s17, 0
    %s20 = sadd.s32 %s19, 1
    %s21 = scalar_select %p18, %s19, %s20
    %p24 = pneg %p18
    %p25 = scmp.eq.s32.totalorder %s9, 12
    %p26 = por %p24, %p25
    %p27 = scmp.ne.s32.totalorder %s19, %s22
    %p28 = scmp.eq.s32.totalorder %s9, 0
    %p29 = por %p27, %p28
    %p30 = scmp.ne.s32.totalorder %s19, %s22
    %p31 = scmp.eq.s32.totalorder %s14, 12
    %p32 = por %p30, %p31
    %p33 = scmp.ne.s32.totalorder %s22, %s23
    %p34 = scmp.eq.s32.totalorder %s14, 0
    %p35 = por %p33, %p34
    %p36 = scmp.ne.s32.totalorder %s22, %s23
    %p37 = scmp.eq.s32.totalorder %s15, 12
    %p38 = por %p36, %p37
    %p40 = scmp.ne.s32.totalorder %s23, %s39
    %p41 = scmp.eq.s32.totalorder %s15, 0
    %p42 = por %p40, %p41
    %s44 = sadd.s32 %s43, 1
    %p47 = scmp.eq.s32.totalorder %s9, 12
    %p48 = scmp.ne.s32.totalorder %s43, %s45
    %p49 = scmp.eq.s32.totalorder %s9, 0
    %p50 = por %p48, %p49
    %p51 = scmp.ne.s32.totalorder %s43, %s45
    %p52 = scmp.eq.s32.totalorder %s14, 12
    %p53 = por %p51, %p52
    %p54 = scmp.ne.s32.totalorder %s45, %s46
    %p55 = scmp.eq.s32.totalorder %s14, 0
    %p56 = por %p54, %p55
    %p57 = scmp.ne.s32.totalorder %s45, %s46
    %p58 = scmp.eq.s32.totalorder %s15, 12
    %p59 = por %p57, %p58
    %p61 = scmp.ne.s32.totalorder %s46, %s60
    %p62 = scmp.eq.s32.totalorder %s15, 0
    %p63 = por %p61, %p62
    %s65 = sadd.s32 %s64, 1
    %p68 = scmp.eq.s32.totalorder %s9, 12
    %p69 = scmp.ne.s32.totalorder %s64, %s66
    %p70 = scmp.eq.s32.totalorder %s9, 0
    %p71 = por %p69, %p70
    %p72 = scmp.ne.s32.totalorder %s64, %s66
    %p73 = scmp.eq.s32.totalorder %s14, 12
    %p74 = por %p72, %p73
    %p75 = scmp.ne.s32.totalorder %s66, %s67
    %p76 = scmp.eq.s32.totalorder %s14, 0
    %p77 = por %p75, %p76
    %p78 = scmp.ne.s32.totalorder %s66, %s67
    %p79 = scmp.eq.s32.totalorder %s15, 12
    %p80 = por %p78, %p79
    %p82 = scmp.ne.s32.totalorder %s67, %s81
    %p83 = scmp.eq.s32.totalorder %s15, 0
    %p84 = por %p82, %p83
    %s85 = ssub.s32 %s9, %s16
    %p86 = scmp.eq.s32.totalorder %s85, 0
    %s88 = sadd.s32 %s87, 1
    %s89 = scalar_select %p86, %s87, %s88
    %p92 = pneg %p86
    %p93 = scmp.eq.s32.totalorder %s9, 12
    %p94 = por %p92, %p93
    %p95 = scmp.ne.s32.totalorder %s87, %s90
    %p96 = scmp.eq.s32.totalorder %s9, 0
    %p97 = por %p95, %p96
    %p98 = scmp.ne.s32.totalorder %s87, %s90
    %p99 = scmp.eq.s32.totalorder %s14, 12
    %p100 = por %p98, %p99
    %p101 = scmp.ne.s32.totalorder %s90, %s91
    %p102 = scmp.eq.s32.totalorder %s14, 0
    %p103 = por %p101, %p102
    %p104 = scmp.ne.s32.totalorder %s90, %s91
    %p105 = scmp.eq.s32.totalorder %s15, 12
    %p106 = por %p104, %p105
    %p108 = scmp.ne.s32.totalorder %s91, %s107
    %p109 = scmp.eq.s32.totalorder %s15, 0
    %p110 = por %p108, %p109
    %p111 = scmp.le.s32.totalorder 1, %s9
    %p112 = scmp.lt.s32.totalorder %s9, 14
    %p113 = pnand %p111, %p112
    %p114 = pneg %p113
    // Predicated region
    $region9: #{my_module3_forward.6} parent=5 // pred_check
      _
    $region10: #{my_module3_forward.6} parent=5 // pred_check_branch
      %116 = sbr.rel (%p113) target = $region12
    $region11: #{my_module3_forward.6} parent=5 // pred_region
      %s117 = ssub.s32 %s9, 1
      // Predicated region
      $region13: #{my_module3_forward.6} parent=11 // pred_check
        %p118 = pneg %p56
      $region14: #{my_module3_forward.6} parent=11 // pred_check_branch
        %120 = sbr.rel (%p118) target = $region16
      $region15: #{my_module3_forward.6} parent=11 // pred_region
        _
      $region16: #{my_module3_forward.6} parent=11 // pred_fallthru
        _
      // Predicated region
      $region17: #{my_module3_forward.6} parent=11 // pred_check
        %p121 = pneg %p77
      $region18: #{my_module3_forward.6} parent=11 // pred_check_branch
        %123 = sbr.rel (%p121) target = $region20
      $region19: #{my_module3_forward.6} parent=11 // pred_region
        _
      $region20: #{my_module3_forward.6} parent=11 // pred_fallthru
        _
    $region12: #{my_module3_forward.6} parent=5 // pred_fallthru
      _
    %p124 = scmp.lt.s32.totalorder %s9, 13
    // Predicated region
    $region21: #{my_module3_forward.6} parent=5 // pred_check
      %p125 = pneg %p124
    $region22: #{my_module3_forward.6} parent=5 // pred_check_branch
      %127 = sbr.rel (%p125) target = $region24
    $region23: #{my_module3_forward.6} parent=5 // pred_region
      // Predicated region
      $region25: #{my_module3_forward.6} parent=23 // pred_check
        %p128 = pneg %p29
      $region26: #{my_module3_forward.6} parent=23 // pred_check_branch
        %130 = sbr.rel (%p128) target = $region28
      $region27: #{my_module3_forward.6} parent=23 // pred_region
        %s131 = smul.u32 52, %s9
        %p132 = scmp.lt.s32.totalorder %s131, 675
        %s133 = scalar_select %p132, %s131, 675
        %s134 = smul.addr %s133, 4
        %s135 = scalar_lea.vmem %s0, %s134
        %s136 = smul.u32 52, %s9
      $region28: #{my_module3_forward.6} parent=23 // pred_fallthru
        _
    $region24: #{my_module3_forward.6} parent=5 // pred_fallthru
      _
    %p137 = scmp.le.s32.totalorder 1, %s9
    %p138 = scmp.lt.s32.totalorder %s9, 14
    %p139 = pnand %p137, %p138
    %p140 = pneg %p139
    // Predicated region
    $region29: #{my_module3_forward.6} parent=5 // pred_check
      _
    $region30: #{my_module3_forward.6} parent=5 // pred_check_branch
      %142 = sbr.rel (%p139) target = $region32
    $region31: #{my_module3_forward.6} parent=5 // pred_region
      %s143 = ssub.s32 %s9, 1
      %s144 = smul.u32 52, %s14
      %p145 = scmp.lt.s32.totalorder %s144, 675
      %s146 = scalar_select %p145, %s144, 675
      %s147 = smul.addr %s146, 4
      %s148 = scalar_lea.vmem %s0, %s147
      %p149 = pneg %p35
      %p150 = pneg %p32
      %p151 = pneg %p56
      %p152 = pneg %p53
      %p153 = pneg %p77
      %p154 = pneg %p74
      %p155 = pneg %p103
      %p156 = pneg %p100
      %s157 = smul.u32 52, %s14
      %p158 = scmp.lt.s32.totalorder %s157, 675
      %s159 = scalar_select %p158, %s157, 675
      %s160 = smul.addr %s159, 4
      %s161 = scalar_lea.vmem %s3, %s160
      %s162 = smul.u32 52, %s14
      %p163 = scmp.lt.s32.totalorder %s162, 675
      %s164 = scalar_select %p163, %s162, 675
      %s165 = smul.addr %s164, 4
      %s166 = scalar_lea.vmem %s0, %s165
      %s167 = smul.u32 52, %s14
      %s168 = smul.u32 52, %s14
      %p169 = scmp.lt.s32.totalorder %s168, 675
      %s170 = scalar_select %p169, %s168, 675
      %s171 = smul.addr %s170, 4
      %s172 = scalar_lea.vmem %s3, %s171
      %s173 = smul.u32 52, %s14
      %v175 = vld [vmem:[%s166] sm:$0xf]
      %v176 = vld [vmem:[%s166 + $0x4] sm:$0xf]
      %v177 = vld [vmem:[%s166 + $0x8] sm:$0xf]
      %v178 = vld [vmem:[%s166 + $0xc] sm:$0xf]
      %v179 = vld [vmem:[%s166 + $0x10] sm:$0xf]
      %v180 = vld [vmem:[%s166 + $0x14] sm:$0xf]
      %v181 = vld [vmem:[%s166 + $0x18] sm:$0xf]
      %v182 = vld [vmem:[%s166 + $0x1c] sm:$0xf]
      %v183 = vld [vmem:[%s166 + $0x20] sm:$0xf]
      %v184 = vld [vmem:[%s166 + $0x24] sm:$0xf]
      %v185 = vld [vmem:[%s166 + $0x28] sm:$0xf]
      %v186 = vld [vmem:[%s166 + $0x2c] sm:$0xf]
      %v187 = vld [vmem:[%s166 + $0x30] sm:$0xf]
      %v188 = vld [vmem:[%s166 + $0x34] sm:$0xf]
      %v189 = vld [vmem:[%s166 + $0x38] sm:$0xf]
      %v190 = vld [vmem:[%s166 + $0x3c] sm:$0xf]
      %v191 = vld [vmem:[%s166 + $0x40] sm:$0xf]
      %v192 = vld [vmem:[%s166 + $0x44] sm:$0xf]
      %v193 = vld [vmem:[%s166 + $0x48] sm:$0xf]
      %v194 = vld [vmem:[%s166 + $0x4c] sm:$0xf]
      %v195 = vld [vmem:[%s166 + $0x50] sm:$0xf]
      %v196 = vld [vmem:[%s166 + $0x54] sm:$0xf]
      %v197 = vld [vmem:[%s166 + $0x58] sm:$0xf]
      %v198 = vld [vmem:[%s166 + $0x5c] sm:$0xf]
      %v199 = vld [vmem:[%s166 + $0x60] sm:$0xf]
      %v200 = vld [vmem:[%s166 + $0x64] sm:$0xf]
      %v201 = vld [vmem:[%s166 + $0x68] sm:$0xf]
      %v202 = vld [vmem:[%s166 + $0x6c] sm:$0xf]
      %v203 = vld [vmem:[%s166 + $0x70] sm:$0xf]
      %v204 = vld [vmem:[%s166 + $0x74] sm:$0xf]
      %v205 = vld [vmem:[%s166 + $0x78] sm:$0xf]
      %v206 = vld [vmem:[%s166 + $0x7c] sm:$0xf]
      %v207 = vld [vmem:[%s166 + $0x80] sm:$0xf]
      %v208 = vld [vmem:[%s166 + $0x84] sm:$0xf]
      %v209 = vld [vmem:[%s166 + $0x88] sm:$0xf]
      %v210 = vld [vmem:[%s166 + $0x8c] sm:$0xf]
      %v211 = vld [vmem:[%s166 + $0x90] sm:$0xf]
      %v212 = vld [vmem:[%s166 + $0x94] sm:$0xf]
      %v213 = vld [vmem:[%s166 + $0x98] sm:$0xf]
      %v214 = vld [vmem:[%s166 + $0x9c] sm:$0xf]
      %v215 = vld [vmem:[%s166 + $0xa0] sm:$0xf]
      %v216 = vld [vmem:[%s166 + $0xa4] sm:$0xf]
      %v217 = vld [vmem:[%s166 + $0xa8] sm:$0xf]
      %v218 = vld [vmem:[%s166 + $0xac] sm:$0xf]
      %v219 = vld [vmem:[%s166 + $0xb0] sm:$0xf]
      %v220 = vld [vmem:[%s166 + $0xb4] sm:$0xf]
      %v221 = vld [vmem:[%s166 + $0xb8] sm:$0xf]
      %v222 = vld [vmem:[%s166 + $0xbc] sm:$0xf]
      %v223 = vld [vmem:[%s166 + $0xc0] sm:$0xf]
      %v224 = vld [vmem:[%s166 + $0xc4] sm:$0xf]
      %v225 = vld [vmem:[%s166 + $0xc8] sm:$0xf]
      %v226 = vld [vmem:[%s166 + $0xcc] sm:$0xf]
      %v227 = vld [vmem:[%s1] sm:$0xf]
      %v228 = vld [vmem:[%s1 + $0x4] sm:$0xf]
      %v229 = vld [vmem:[%s1 + $0x8] sm:$0xf]
      %v230 = vld [vmem:[%s1 + $0xc] sm:$0xf]
      %v231 = vld [vmem:[%s1 + $0x10] sm:$0xf]
      %v232 = vld [vmem:[%s1 + $0x14] sm:$0xf]
      %v233 = vld [vmem:[%s1 + $0x18] sm:$0xf]
      %v234 = vld [vmem:[%s1 + $0x1c] sm:$0xf]
      %v235 = vld [vmem:[%s1 + $0x20] sm:$0xf]
      %v236 = vld [vmem:[%s1 + $0x24] sm:$0xf]
      %v237 = vld [vmem:[%s1 + $0x28] sm:$0xf]
      %v238 = vld [vmem:[%s1 + $0x2c] sm:$0xf]
      %v239 = vld [vmem:[%s1 + $0x30] sm:$0xf]
      %v240 = vld [vmem:[%s1 + $0x34] sm:$0xf]
      %v241 = vld [vmem:[%s1 + $0x38] sm:$0xf]
      %v242 = vld [vmem:[%s1 + $0x3c] sm:$0xf]
      %v243 = vld [vmem:[%s2] sm:$0x1]
      %v245 = vlaneseq
      %v246 = vshrl.u32 %v245, 7
      %v247 = vsub.s32 0, %v246
      %v248 = vrot.slane %v243, %v247
      %v302 = vunpack.c.l.b16 %v175
      %v303 = vunpack.c.l.b16 %v176
      %v304 = vunpack.c.l.b16 %v177
      %v305 = vunpack.c.l.b16 %v178
      %v306 = vunpack.c.l.b16 %v179
      %v307 = vunpack.c.l.b16 %v180
      %v308 = vunpack.c.l.b16 %v181
      %v309 = vunpack.c.l.b16 %v182
      %v310 = vunpack.c.l.b16 %v183
      %v311 = vunpack.c.l.b16 %v184
      %v312 = vunpack.c.l.b16 %v185
      %v313 = vunpack.c.l.b16 %v186
      %v314 = vunpack.c.l.b16 %v187
      %v315 = vunpack.c.l.b16 %v188
      %v316 = vunpack.c.l.b16 %v189
      %v317 = vunpack.c.l.b16 %v190
      %v318 = vunpack.c.l.b16 %v191
      %v319 = vunpack.c.l.b16 %v192
      %v320 = vunpack.c.l.b16 %v193
      %v321 = vunpack.c.l.b16 %v194
      %v322 = vunpack.c.l.b16 %v195
      %v323 = vunpack.c.l.b16 %v196
      %v324 = vunpack.c.l.b16 %v197
      %v325 = vunpack.c.l.b16 %v198
      %v326 = vunpack.c.l.b16 %v199
      %v327 = vunpack.c.l.b16 %v200
      %v328 = vunpack.c.l.b16 %v201
      %v329 = vunpack.c.l.b16 %v202
      %v330 = vunpack.c.l.b16 %v203
      %v331 = vunpack.c.l.b16 %v204
      %v332 = vunpack.c.l.b16 %v205
      %v333 = vunpack.c.l.b16 %v206
      %v334 = vunpack.c.l.b16 %v207
      %v335 = vunpack.c.l.b16 %v208
      %v336 = vunpack.c.l.b16 %v209
      %v337 = vunpack.c.l.b16 %v210
      %v338 = vunpack.c.l.b16 %v211
      %v339 = vunpack.c.l.b16 %v212
      %v340 = vunpack.c.l.b16 %v213
      %v341 = vunpack.c.l.b16 %v214
      %v342 = vunpack.c.l.b16 %v215
      %v343 = vunpack.c.l.b16 %v216
      %v344 = vunpack.c.l.b16 %v217
      %v345 = vunpack.c.l.b16 %v218
      %v346 = vunpack.c.l.b16 %v219
      %v347 = vunpack.c.l.b16 %v220
      %v348 = vunpack.c.l.b16 %v221
      %v349 = vunpack.c.l.b16 %v222
      %v350 = vunpack.c.l.b16 %v223
      %v351 = vunpack.c.l.b16 %v224
      %v352 = vunpack.c.l.b16 %v225
      %v353 = vunpack.c.l.b16 %v226
      %v354 = vpack.c.b16 %v303, %v302
      %v355 = vpack.c.b16 %v305, %v304
      %v356 = vpack.c.b16 %v307, %v306
      %v357 = vpack.c.b16 %v309, %v308
      %v358 = vpack.c.b16 %v311, %v310
      %v359 = vpack.c.b16 %v313, %v312
      %v360 = vpack.c.b16 %v315, %v314
      %v361 = vpack.c.b16 %v317, %v316
      %v362 = vpack.c.b16 %v319, %v318
      %v363 = vpack.c.b16 %v321, %v320
      %v364 = vpack.c.b16 %v323, %v322
      %v365 = vpack.c.b16 %v325, %v324
      %v366 = vpack.c.b16 %v327, %v326
      %v367 = vpack.c.b16 %v329, %v328
      %v368 = vpack.c.b16 %v331, %v330
      %v369 = vpack.c.b16 %v333, %v332
      %v370 = vpack.c.b16 %v335, %v334
      %v371 = vpack.c.b16 %v337, %v336
      %v372 = vpack.c.b16 %v339, %v338
      %v373 = vpack.c.b16 %v341, %v340
      %v374 = vpack.c.b16 %v343, %v342
      %v375 = vpack.c.b16 %v345, %v344
      %v376 = vpack.c.b16 %v347, %v346
      %v377 = vpack.c.b16 %v349, %v348
      %v378 = vpack.c.b16 %v351, %v350
      %v379 = vpack.c.b16 %v353, %v352
      %v422 = vunpack.c.l.b16 %v227
      %v423 = vunpack.c.l.b16 %v228
      %v424 = vunpack.c.l.b16 %v229
      %v425 = vunpack.c.l.b16 %v230
      %v426 = vunpack.c.l.b16 %v231
      %v427 = vunpack.c.l.b16 %v232
      %v428 = vunpack.c.l.b16 %v233
      %v429 = vunpack.c.l.b16 %v234
      %v430 = vunpack.c.l.b16 %v235
      %v431 = vunpack.c.l.b16 %v236
      %v432 = vunpack.c.l.b16 %v237
      %v433 = vunpack.c.l.b16 %v238
      %v434 = vunpack.c.l.b16 %v239
      %v435 = vunpack.c.l.b16 %v240
      %v436 = vunpack.c.l.b16 %v241
      %v437 = vunpack.c.l.b16 %v242
      %v438 = vpack.c.b16 %v423, %v422
      %v439 = vpack.c.b16 %v425, %v424
      %v440 = vpack.c.b16 %v427, %v426
      %v441 = vpack.c.b16 %v429, %v428
      %v442 = vpack.c.b16 %v431, %v430
      %v443 = vpack.c.b16 %v433, %v432
      %v444 = vpack.c.b16 %v435, %v434
      %v445 = vpack.c.b16 %v437, %v436
      %454 = vmatprep.subr.bf16.mxu0 0
      %455 = vmatpush1.bf16.msra.mxu0 %v445
      %456 = vmatprep.subr.bf16.mxu0 0
      %457 = vmatpush1.bf16.msra.mxu0 %v444
      %458 = vmatprep.subr.bf16.mxu0 0
      %459 = vmatpush1.bf16.msra.mxu0 %v443
      %460 = vmatprep.subr.bf16.mxu0 0
      %461 = vmatpush1.bf16.msra.mxu0 %v442
      %462 = vmatprep.subr.bf16.mxu0 0
      %463 = vmatpush1.bf16.msra.mxu0 %v441
      %464 = vmatprep.subr.bf16.mxu0 0
      %465 = vmatpush1.bf16.msra.mxu0 %v440
      %466 = vmatprep.subr.bf16.mxu0 0
      %467 = vmatpush1.bf16.msra.mxu0 %v439
      %468 = vmatprep.subr.bf16.mxu0 0
      %469 = vmatpush1.bf16.msra.mxu0 %v438
      %470 = vmatprep.subr.bf16.mxu0 0
      %471 = vmatpush2.bf16.msra.mxu0 0
      %472 = vmatprep.subr.bf16.mxu0 0
      %473 = vmatpush2.bf16.msra.mxu0 0
      %474 = vmatprep.subr.bf16.mxu0 0
      %475 = vmatpush2.bf16.msra.mxu0 0
      %476 = vmatprep.subr.bf16.mxu0 0
      %477 = vmatpush2.bf16.msra.mxu0 0
      %478 = vmatprep.subr.bf16.mxu0 0
      %479 = vmatpush2.bf16.msra.mxu0 0
      %480 = vmatprep.subr.bf16.mxu0 0
      %481 = vmatpush2.bf16.msra.mxu0 0
      %482 = vmatprep.subr.bf16.mxu0 0
      %483 = vmatpush2.bf16.msra.mxu0 0
      %484 = vmatprep.subr.bf16.mxu0 0
      %485 = vmatpush2.bf16.msra.mxu0 0
      %486 = vmatprep.mubr.bf16.mxu0 0
      %487 = vmatmul.mubr.bf16.gmra.mxu0 %v354
      %v488 = vpop.f32.mrf.mxu0
      %v489 = vadd.f32 %v248, %v488
      %v490 = vpop.f32.mrf.mxu0
      %v491 = vpop.f32.mrf.mxu0
      %v492 = vadd.f32 %v248, %v491
      %v493 = vpop.f32.mrf.mxu0
      %494 = vmatprep.mubr.bf16.mxu0 0
      %495 = vmatmul.mubr.bf16.gmra.mxu0 %v355
      %v496 = vpop.f32.mrf.mxu0
      %v497 = vadd.f32 %v248, %v496
      %v498 = vpop.f32.mrf.mxu0
      %v499 = vpop.f32.mrf.mxu0
      %v500 = vadd.f32 %v248, %v499
      %v501 = vpop.f32.mrf.mxu0
      %502 = vmatprep.mubr.bf16.mxu0 0
      %503 = vmatmul.mubr.bf16.gmra.mxu0 %v356
      %v504 = vpop.f32.mrf.mxu0
      %v505 = vadd.f32 %v248, %v504
      %v506 = vpop.f32.mrf.mxu0
      %v507 = vpop.f32.mrf.mxu0
      %v508 = vadd.f32 %v248, %v507
      %v509 = vpop.f32.mrf.mxu0
      %510 = vmatprep.mubr.bf16.mxu0 0
      %511 = vmatmul.mubr.bf16.gmra.mxu0 %v357
      %v512 = vpop.f32.mrf.mxu0
      %v513 = vadd.f32 %v248, %v512
      %v514 = vpop.f32.mrf.mxu0
      %v515 = vpop.f32.mrf.mxu0
      %v516 = vadd.f32 %v248, %v515
      %v517 = vpop.f32.mrf.mxu0
      %518 = vmatprep.mubr.bf16.mxu0 0
      %519 = vmatmul.mubr.bf16.gmra.mxu0 %v358
      %v520 = vpop.f32.mrf.mxu0
      %v521 = vadd.f32 %v248, %v520
      %v522 = vpop.f32.mrf.mxu0
      %v523 = vpop.f32.mrf.mxu0
      %v524 = vadd.f32 %v248, %v523
      %v525 = vpop.f32.mrf.mxu0
      %526 = vmatprep.mubr.bf16.mxu0 0
      %527 = vmatmul.mubr.bf16.gmra.mxu0 %v359
      %v528 = vpop.f32.mrf.mxu0
      %v529 = vadd.f32 %v248, %v528
      %v530 = vpop.f32.mrf.mxu0
      %v531 = vpop.f32.mrf.mxu0
      %v532 = vadd.f32 %v248, %v531
      %v533 = vpop.f32.mrf.mxu0
      %534 = vmatprep.mubr.bf16.mxu0 0
      %535 = vmatmul.mubr.bf16.gmra.mxu0 %v360
      %v536 = vpop.f32.mrf.mxu0
      %v537 = vadd.f32 %v248, %v536
      %v538 = vpop.f32.mrf.mxu0
      %v539 = vpop.f32.mrf.mxu0
      %v540 = vadd.f32 %v248, %v539
      %v541 = vpop.f32.mrf.mxu0
      %542 = vmatprep.mubr.bf16.mxu0 0
      %543 = vmatmul.mubr.bf16.gmra.mxu0 %v361
      %v544 = vpop.f32.mrf.mxu0
      %v545 = vadd.f32 %v248, %v544
      %v546 = vpop.f32.mrf.mxu0
      %v547 = vpop.f32.mrf.mxu0
      %v548 = vadd.f32 %v248, %v547
      %v549 = vpop.f32.mrf.mxu0
      %550 = vmatprep.mubr.bf16.mxu0 0
      %551 = vmatmul.mubr.bf16.gmra.mxu0 %v362
      %v552 = vpop.f32.mrf.mxu0
      %v553 = vadd.f32 %v248, %v552
      %v554 = vpop.f32.mrf.mxu0
      %v555 = vpop.f32.mrf.mxu0
      %v556 = vadd.f32 %v248, %v555
      %v557 = vpop.f32.mrf.mxu0
      %558 = vmatprep.mubr.bf16.mxu0 0
      %559 = vmatmul.mubr.bf16.gmra.mxu0 %v363
      %v560 = vpop.f32.mrf.mxu0
      %v561 = vadd.f32 %v248, %v560
      %v562 = vpop.f32.mrf.mxu0
      %v563 = vpop.f32.mrf.mxu0
      %v564 = vadd.f32 %v248, %v563
      %v565 = vpop.f32.mrf.mxu0
      %566 = vmatprep.mubr.bf16.mxu0 0
      %567 = vmatmul.mubr.bf16.gmra.mxu0 %v364
      %v568 = vpop.f32.mrf.mxu0
      %v569 = vadd.f32 %v248, %v568
      %v570 = vpop.f32.mrf.mxu0
      %v571 = vpop.f32.mrf.mxu0
      %v572 = vadd.f32 %v248, %v571
      %v573 = vpop.f32.mrf.mxu0
      %574 = vmatprep.mubr.bf16.mxu0 0
      %575 = vmatmul.mubr.bf16.gmra.mxu0 %v365
      %v576 = vpop.f32.mrf.mxu0
      %v577 = vadd.f32 %v248, %v576
      %v578 = vpop.f32.mrf.mxu0
      %v579 = vpop.f32.mrf.mxu0
      %v580 = vadd.f32 %v248, %v579
      %v581 = vpop.f32.mrf.mxu0
      %582 = vmatprep.mubr.bf16.mxu0 0
      %583 = vmatmul.mubr.bf16.gmra.mxu0 %v366
      %v584 = vpop.f32.mrf.mxu0
      %v585 = vadd.f32 %v248, %v584
      %v586 = vpop.f32.mrf.mxu0
      %v587 = vpop.f32.mrf.mxu0
      %v588 = vadd.f32 %v248, %v587
      %v589 = vpop.f32.mrf.mxu0
      %590 = vmatprep.mubr.bf16.mxu0 0
      %591 = vmatmul.mubr.bf16.gmra.mxu0 %v367
      %v592 = vpop.f32.mrf.mxu0
      %v593 = vadd.f32 %v248, %v592
      %v594 = vpop.f32.mrf.mxu0
      %v595 = vpop.f32.mrf.mxu0
      %v596 = vadd.f32 %v248, %v595
      %v597 = vpop.f32.mrf.mxu0
      %598 = vmatprep.mubr.bf16.mxu0 0
      %599 = vmatmul.mubr.bf16.gmra.mxu0 %v368
      %v600 = vpop.f32.mrf.mxu0
      %v601 = vadd.f32 %v248, %v600
      %v602 = vpop.f32.mrf.mxu0
      %v603 = vpop.f32.mrf.mxu0
      %v604 = vadd.f32 %v248, %v603
      %v605 = vpop.f32.mrf.mxu0
      %606 = vmatprep.mubr.bf16.mxu0 0
      %607 = vmatmul.mubr.bf16.gmra.mxu0 %v369
      %v608 = vpop.f32.mrf.mxu0
      %v609 = vadd.f32 %v248, %v608
      %v610 = vpop.f32.mrf.mxu0
      %v611 = vpop.f32.mrf.mxu0
      %v612 = vadd.f32 %v248, %v611
      %v613 = vpop.f32.mrf.mxu0
      %614 = vmatprep.mubr.bf16.mxu0 0
      %615 = vmatmul.mubr.bf16.gmra.mxu0 %v370
      %v616 = vpop.f32.mrf.mxu0
      %v617 = vadd.f32 %v248, %v616
      %v618 = vpop.f32.mrf.mxu0
      %v619 = vpop.f32.mrf.mxu0
      %v620 = vadd.f32 %v248, %v619
      %v621 = vpop.f32.mrf.mxu0
      %622 = vmatprep.mubr.bf16.mxu0 0
      %623 = vmatmul.mubr.bf16.gmra.mxu0 %v371
      %v624 = vpop.f32.mrf.mxu0
      %v625 = vadd.f32 %v248, %v624
      %v626 = vpop.f32.mrf.mxu0
      %v627 = vpop.f32.mrf.mxu0
      %v628 = vadd.f32 %v248, %v627
      %v629 = vpop.f32.mrf.mxu0
      %630 = vmatprep.mubr.bf16.mxu0 0
      %631 = vmatmul.mubr.bf16.gmra.mxu0 %v372
      %v632 = vpop.f32.mrf.mxu0
      %v633 = vadd.f32 %v248, %v632
      %v634 = vpop.f32.mrf.mxu0
      %v635 = vpop.f32.mrf.mxu0
      %v636 = vadd.f32 %v248, %v635
      %v637 = vpop.f32.mrf.mxu0
      %638 = vmatprep.mubr.bf16.mxu0 0
      %639 = vmatmul.mubr.bf16.gmra.mxu0 %v373
      %v640 = vpop.f32.mrf.mxu0
      %v641 = vadd.f32 %v248, %v640
      %v642 = vpop.f32.mrf.mxu0
      %v643 = vpop.f32.mrf.mxu0
      %v644 = vadd.f32 %v248, %v643
      %v645 = vpop.f32.mrf.mxu0
      %646 = vmatprep.mubr.bf16.mxu0 0
      %647 = vmatmul.mubr.bf16.gmra.mxu0 %v374
      %v648 = vpop.f32.mrf.mxu0
      %v649 = vadd.f32 %v248, %v648
      %v650 = vpop.f32.mrf.mxu0
      %v651 = vpop.f32.mrf.mxu0
      %v652 = vadd.f32 %v248, %v651
      %v653 = vpop.f32.mrf.mxu0
      %654 = vmatprep.mubr.bf16.mxu0 0
      %655 = vmatmul.mubr.bf16.gmra.mxu0 %v375
      %v656 = vpop.f32.mrf.mxu0
      %v657 = vadd.f32 %v248, %v656
      %v658 = vpop.f32.mrf.mxu0
      %v659 = vpop.f32.mrf.mxu0
      %v660 = vadd.f32 %v248, %v659
      %v661 = vpop.f32.mrf.mxu0
      %662 = vmatprep.mubr.bf16.mxu0 0
      %663 = vmatmul.mubr.bf16.gmra.mxu0 %v376
      %v664 = vpop.f32.mrf.mxu0
      %v665 = vadd.f32 %v248, %v664
      %v666 = vpop.f32.mrf.mxu0
      %v667 = vpop.f32.mrf.mxu0
      %v668 = vadd.f32 %v248, %v667
      %v669 = vpop.f32.mrf.mxu0
      %670 = vmatprep.mubr.bf16.mxu0 0
      %671 = vmatmul.mubr.bf16.gmra.mxu0 %v377
      %v672 = vpop.f32.mrf.mxu0
      %v673 = vadd.f32 %v248, %v672
      %v674 = vpop.f32.mrf.mxu0
      %v675 = vpop.f32.mrf.mxu0
      %v676 = vadd.f32 %v248, %v675
      %v677 = vpop.f32.mrf.mxu0
      %678 = vmatprep.mubr.bf16.mxu0 0
      %679 = vmatmul.mubr.bf16.gmra.mxu0 %v378
      %v680 = vpop.f32.mrf.mxu0
      %v681 = vadd.f32 %v248, %v680
      %v682 = vpop.f32.mrf.mxu0
      %v683 = vpop.f32.mrf.mxu0
      %v684 = vadd.f32 %v248, %v683
      %v685 = vpop.f32.mrf.mxu0
      %686 = vmatprep.mubr.bf16.mxu0 0
      %687 = vmatmul.mubr.bf16.gmra.mxu0 %v379
      %v688 = vpop.f32.mrf.mxu0
      %v689 = vadd.f32 %v248, %v688
      %v690 = vpop.f32.mrf.mxu0
      %v691 = vpop.f32.mrf.mxu0
      %v692 = vadd.f32 %v248, %v691
      %v693 = vpop.f32.mrf.mxu0
      %694 = vdwg.mxu0
      %v695 = vmax.f32 %v489, 0.0
      %v696 = vmax.f32 %v492, 0.0
      %v697 = vmax.f32 %v497, 0.0
      %v698 = vmax.f32 %v500, 0.0
      %v699 = vmax.f32 %v505, 0.0
      %v700 = vmax.f32 %v508, 0.0
      %v701 = vmax.f32 %v513, 0.0
      %v702 = vmax.f32 %v516, 0.0
      %v703 = vmax.f32 %v521, 0.0
      %v704 = vmax.f32 %v524, 0.0
      %v705 = vmax.f32 %v529, 0.0
      %v706 = vmax.f32 %v532, 0.0
      %v707 = vmax.f32 %v537, 0.0
      %v708 = vmax.f32 %v540, 0.0
      %v709 = vmax.f32 %v545, 0.0
      %v710 = vmax.f32 %v548, 0.0
      %v711 = vmax.f32 %v553, 0.0
      %v712 = vmax.f32 %v556, 0.0
      %v713 = vmax.f32 %v561, 0.0
      %v714 = vmax.f32 %v564, 0.0
      %v715 = vmax.f32 %v569, 0.0
      %v716 = vmax.f32 %v572, 0.0
      %v717 = vmax.f32 %v577, 0.0
      %v718 = vmax.f32 %v580, 0.0
      %v719 = vmax.f32 %v585, 0.0
      %v720 = vmax.f32 %v588, 0.0
      %v721 = vmax.f32 %v593, 0.0
      %v722 = vmax.f32 %v596, 0.0
      %v723 = vmax.f32 %v601, 0.0
      %v724 = vmax.f32 %v604, 0.0
      %v725 = vmax.f32 %v609, 0.0
      %v726 = vmax.f32 %v612, 0.0
      %v727 = vmax.f32 %v617, 0.0
      %v728 = vmax.f32 %v620, 0.0
      %v729 = vmax.f32 %v625, 0.0
      %v730 = vmax.f32 %v628, 0.0
      %v731 = vmax.f32 %v633, 0.0
      %v732 = vmax.f32 %v636, 0.0
      %v733 = vmax.f32 %v641, 0.0
      %v734 = vmax.f32 %v644, 0.0
      %v735 = vmax.f32 %v649, 0.0
      %v736 = vmax.f32 %v652, 0.0
      %v737 = vmax.f32 %v657, 0.0
      %v738 = vmax.f32 %v660, 0.0
      %v739 = vmax.f32 %v665, 0.0
      %v740 = vmax.f32 %v668, 0.0
      %v741 = vmax.f32 %v673, 0.0
      %v742 = vmax.f32 %v676, 0.0
      %v743 = vmax.f32 %v681, 0.0
      %v744 = vmax.f32 %v684, 0.0
      %v745 = vmax.f32 %v689, 0.0
      %v746 = vmax.f32 %v692, 0.0
      %v747 = vpack.c.bf16 %v696, %v695
      %v748 = vpack.c.bf16 %v698, %v697
      %v749 = vpack.c.bf16 %v700, %v699
      %v750 = vpack.c.bf16 %v702, %v701
      %v751 = vpack.c.bf16 %v704, %v703
      %v752 = vpack.c.bf16 %v706, %v705
      %v753 = vpack.c.bf16 %v708, %v707
      %v754 = vpack.c.bf16 %v710, %v709
      %v755 = vpack.c.bf16 %v712, %v711
      %v756 = vpack.c.bf16 %v714, %v713
      %v757 = vpack.c.bf16 %v716, %v715
      %v758 = vpack.c.bf16 %v718, %v717
      %v759 = vpack.c.bf16 %v720, %v719
      %v760 = vpack.c.bf16 %v722, %v721
      %v761 = vpack.c.bf16 %v724, %v723
      %v762 = vpack.c.bf16 %v726, %v725
      %v763 = vpack.c.bf16 %v728, %v727
      %v764 = vpack.c.bf16 %v730, %v729
      %v765 = vpack.c.bf16 %v732, %v731
      %v766 = vpack.c.bf16 %v734, %v733
      %v767 = vpack.c.bf16 %v736, %v735
      %v768 = vpack.c.bf16 %v738, %v737
      %v769 = vpack.c.bf16 %v740, %v739
      %v770 = vpack.c.bf16 %v742, %v741
      %v771 = vpack.c.bf16 %v744, %v743
      %v772 = vpack.c.bf16 %v746, %v745
      %v799 = vunpack.c.l.b16 %v747
      %v800 = vunpack.c.h.b16 %v747
      %v801 = vunpack.c.l.b16 %v748
      %v802 = vunpack.c.h.b16 %v748
      %v803 = vunpack.c.l.b16 %v749
      %v804 = vunpack.c.h.b16 %v749
      %v805 = vunpack.c.l.b16 %v750
      %v806 = vunpack.c.h.b16 %v750
      %v807 = vunpack.c.l.b16 %v751
      %v808 = vunpack.c.h.b16 %v751
      %v809 = vunpack.c.l.b16 %v752
      %v810 = vunpack.c.h.b16 %v752
      %v811 = vunpack.c.l.b16 %v753
      %v812 = vunpack.c.h.b16 %v753
      %v813 = vunpack.c.l.b16 %v754
      %v814 = vunpack.c.h.b16 %v754
      %v815 = vunpack.c.l.b16 %v755
      %v816 = vunpack.c.h.b16 %v755
      %v817 = vunpack.c.l.b16 %v756
      %v818 = vunpack.c.h.b16 %v756
      %v819 = vunpack.c.l.b16 %v757
      %v820 = vunpack.c.h.b16 %v757
      %v821 = vunpack.c.l.b16 %v758
      %v822 = vunpack.c.h.b16 %v758
      %v823 = vunpack.c.l.b16 %v759
      %v824 = vunpack.c.h.b16 %v759
      %v825 = vunpack.c.l.b16 %v760
      %v826 = vunpack.c.h.b16 %v760
      %v827 = vunpack.c.l.b16 %v761
      %v828 = vunpack.c.h.b16 %v761
      %v829 = vunpack.c.l.b16 %v762
      %v830 = vunpack.c.h.b16 %v762
      %v831 = vunpack.c.l.b16 %v763
      %v832 = vunpack.c.h.b16 %v763
      %v833 = vunpack.c.l.b16 %v764
      %v834 = vunpack.c.h.b16 %v764
      %v835 = vunpack.c.l.b16 %v765
      %v836 = vunpack.c.h.b16 %v765
      %v837 = vunpack.c.l.b16 %v766
      %v838 = vunpack.c.h.b16 %v766
      %v839 = vunpack.c.l.b16 %v767
      %v840 = vunpack.c.h.b16 %v767
      %v841 = vunpack.c.l.b16 %v768
      %v842 = vunpack.c.h.b16 %v768
      %v843 = vunpack.c.l.b16 %v769
      %v844 = vunpack.c.h.b16 %v769
      %v845 = vunpack.c.l.b16 %v770
      %v846 = vunpack.c.h.b16 %v770
      %v847 = vunpack.c.l.b16 %v771
      %v848 = vunpack.c.h.b16 %v771
      %v849 = vunpack.c.l.b16 %v772
      %v850 = vunpack.c.h.b16 %v772
      %v851 = vpack.c.b16 %v799, %v799
      %v852 = vpack.c.b16 %v800, %v800
      %v853 = vpack.c.b16 %v801, %v801
      %v854 = vpack.c.b16 %v802, %v802
      %v855 = vpack.c.b16 %v803, %v803
      %v856 = vpack.c.b16 %v804, %v804
      %v857 = vpack.c.b16 %v805, %v805
      %v858 = vpack.c.b16 %v806, %v806
      %v859 = vpack.c.b16 %v807, %v807
      %v860 = vpack.c.b16 %v808, %v808
      %v861 = vpack.c.b16 %v809, %v809
      %v862 = vpack.c.b16 %v810, %v810
      %v863 = vpack.c.b16 %v811, %v811
      %v864 = vpack.c.b16 %v812, %v812
      %v865 = vpack.c.b16 %v813, %v813
      %v866 = vpack.c.b16 %v814, %v814
      %v867 = vpack.c.b16 %v815, %v815
      %v868 = vpack.c.b16 %v816, %v816
      %v869 = vpack.c.b16 %v817, %v817
      %v870 = vpack.c.b16 %v818, %v818
      %v871 = vpack.c.b16 %v819, %v819
      %v872 = vpack.c.b16 %v820, %v820
      %v873 = vpack.c.b16 %v821, %v821
      %v874 = vpack.c.b16 %v822, %v822
      %v875 = vpack.c.b16 %v823, %v823
      %v876 = vpack.c.b16 %v824, %v824
      %v877 = vpack.c.b16 %v825, %v825
      %v878 = vpack.c.b16 %v826, %v826
      %v879 = vpack.c.b16 %v827, %v827
      %v880 = vpack.c.b16 %v828, %v828
      %v881 = vpack.c.b16 %v829, %v829
      %v882 = vpack.c.b16 %v830, %v830
      %v883 = vpack.c.b16 %v831, %v831
      %v884 = vpack.c.b16 %v832, %v832
      %v885 = vpack.c.b16 %v833, %v833
      %v886 = vpack.c.b16 %v834, %v834
      %v887 = vpack.c.b16 %v835, %v835
      %v888 = vpack.c.b16 %v836, %v836
      %v889 = vpack.c.b16 %v837, %v837
      %v890 = vpack.c.b16 %v838, %v838
      %v891 = vpack.c.b16 %v839, %v839
      %v892 = vpack.c.b16 %v840, %v840
      %v893 = vpack.c.b16 %v841, %v841
      %v894 = vpack.c.b16 %v842, %v842
      %v895 = vpack.c.b16 %v843, %v843
      %v896 = vpack.c.b16 %v844, %v844
      %v897 = vpack.c.b16 %v845, %v845
      %v898 = vpack.c.b16 %v846, %v846
      %v899 = vpack.c.b16 %v847, %v847
      %v900 = vpack.c.b16 %v848, %v848
      %v901 = vpack.c.b16 %v849, %v849
      %v902 = vpack.c.b16 %v850, %v850
      %955 = vst [vmem:[%s172] sm:$0xf] %v851
      %956 = vst [vmem:[%s172 + $0x4] sm:$0xf] %v852
      %957 = vst [vmem:[%s172 + $0x8] sm:$0xf] %v853
      %958 = vst [vmem:[%s172 + $0xc] sm:$0xf] %v854
      %959 = vst [vmem:[%s172 + $0x10] sm:$0xf] %v855
      %960 = vst [vmem:[%s172 + $0x14] sm:$0xf] %v856
      %961 = vst [vmem:[%s172 + $0x18] sm:$0xf] %v857
      %962 = vst [vmem:[%s172 + $0x1c] sm:$0xf] %v858
      %963 = vst [vmem:[%s172 + $0x20] sm:$0xf] %v859
      %964 = vst [vmem:[%s172 + $0x24] sm:$0xf] %v860
      %965 = vst [vmem:[%s172 + $0x28] sm:$0xf] %v861
      %966 = vst [vmem:[%s172 + $0x2c] sm:$0xf] %v862
      %967 = vst [vmem:[%s172 + $0x30] sm:$0xf] %v863
      %968 = vst [vmem:[%s172 + $0x34] sm:$0xf] %v864
      %969 = vst [vmem:[%s172 + $0x38] sm:$0xf] %v865
      %970 = vst [vmem:[%s172 + $0x3c] sm:$0xf] %v866
      %971 = vst [vmem:[%s172 + $0x40] sm:$0xf] %v867
      %972 = vst [vmem:[%s172 + $0x44] sm:$0xf] %v868
      %973 = vst [vmem:[%s172 + $0x48] sm:$0xf] %v869
      %974 = vst [vmem:[%s172 + $0x4c] sm:$0xf] %v870
      %975 = vst [vmem:[%s172 + $0x50] sm:$0xf] %v871
      %976 = vst [vmem:[%s172 + $0x54] sm:$0xf] %v872
      %977 = vst [vmem:[%s172 + $0x58] sm:$0xf] %v873
      %978 = vst [vmem:[%s172 + $0x5c] sm:$0xf] %v874
      %979 = vst [vmem:[%s172 + $0x60] sm:$0xf] %v875
      %980 = vst [vmem:[%s172 + $0x64] sm:$0xf] %v876
      %981 = vst [vmem:[%s172 + $0x68] sm:$0xf] %v877
      %982 = vst [vmem:[%s172 + $0x6c] sm:$0xf] %v878
      %983 = vst [vmem:[%s172 + $0x70] sm:$0xf] %v879
      %984 = vst [vmem:[%s172 + $0x74] sm:$0xf] %v880
      %985 = vst [vmem:[%s172 + $0x78] sm:$0xf] %v881
      %986 = vst [vmem:[%s172 + $0x7c] sm:$0xf] %v882
      %987 = vst [vmem:[%s172 + $0x80] sm:$0xf] %v883
      %988 = vst [vmem:[%s172 + $0x84] sm:$0xf] %v884
      %989 = vst [vmem:[%s172 + $0x88] sm:$0xf] %v885
      %990 = vst [vmem:[%s172 + $0x8c] sm:$0xf] %v886
      %991 = vst [vmem:[%s172 + $0x90] sm:$0xf] %v887
      %992 = vst [vmem:[%s172 + $0x94] sm:$0xf] %v888
      %993 = vst [vmem:[%s172 + $0x98] sm:$0xf] %v889
      %994 = vst [vmem:[%s172 + $0x9c] sm:$0xf] %v890
      %995 = vst [vmem:[%s172 + $0xa0] sm:$0xf] %v891
      %996 = vst [vmem:[%s172 + $0xa4] sm:$0xf] %v892
      %997 = vst [vmem:[%s172 + $0xa8] sm:$0xf] %v893
      %998 = vst [vmem:[%s172 + $0xac] sm:$0xf] %v894
      %999 = vst [vmem:[%s172 + $0xb0] sm:$0xf] %v895
      %1000 = vst [vmem:[%s172 + $0xb4] sm:$0xf] %v896
      %1001 = vst [vmem:[%s172 + $0xb8] sm:$0xf] %v897
      %1002 = vst [vmem:[%s172 + $0xbc] sm:$0xf] %v898
      %1003 = vst [vmem:[%s172 + $0xc0] sm:$0xf] %v899
      %1004 = vst [vmem:[%s172 + $0xc4] sm:$0xf] %v900
      %1005 = vst [vmem:[%s172 + $0xc8] sm:$0xf] %v901
      %1006 = vst [vmem:[%s172 + $0xcc] sm:$0xf] %v902
      %s1007 = smul.u32 52, %s14
      %p1008 = scmp.lt.s32.totalorder %s1007, 675
      %s1009 = scalar_select %p1008, %s1007, 675
      %s1010 = smul.addr %s1009, 4
      %s1011 = scalar_lea.vmem %s3, %s1010
      // Predicated region
      $region33: #{my_module3_forward.6} parent=31 // pred_check
        %p1012 = pneg %p100
      $region34: #{my_module3_forward.6} parent=31 // pred_check_branch
        %1014 = sbr.rel (%p1012) target = $region36
      $region35: #{my_module3_forward.6} parent=31 // pred_region
        %s1015 = smul.u32 52, %s14
      $region36: #{my_module3_forward.6} parent=31 // pred_fallthru
        _
    $region32: #{my_module3_forward.6} parent=5 // pred_fallthru
      _
    %p1016 = scmp.le.s32.totalorder 2, %s9
    // Predicated region
    $region37: #{my_module3_forward.6} parent=5 // pred_check
      %p1017 = pneg %p1016
    $region38: #{my_module3_forward.6} parent=5 // pred_check_branch
      %1019 = sbr.rel (%p1017) target = $region40
    $region39: #{my_module3_forward.6} parent=5 // pred_region
      %s1020 = ssub.s32 %s9, 2
      // Predicated region
      $region41: #{my_module3_forward.6} parent=39 // pred_check
        %p1021 = pneg %p106
      $region42: #{my_module3_forward.6} parent=39 // pred_check_branch
        %1023 = sbr.rel (%p1021) target = $region44
      $region43: #{my_module3_forward.6} parent=39 // pred_region
        %s1024 = smul.u32 52, %s15
        %p1025 = scmp.lt.s32.totalorder %s1024, 675
        %s1026 = scalar_select %p1025, %s1024, 675
        %s1027 = smul.addr %s1026, 4
        %s1028 = scalar_lea.vmem %s3, %s1027
      $region44: #{my_module3_forward.6} parent=39 // pred_fallthru
        _
    $region40: #{my_module3_forward.6} parent=5 // pred_fallthru
      _
  $region6: #{my_module3_forward.6} parent=0 // loop_footer
    %s13 = sadd.s32 1, %s9
  $region7: #{my_module3_forward.6} parent=0 // loop_footer_branch
    %8 = sbr.rel target = $region3
  $region8: #{my_module3_forward.6} parent=0 // loop_exit
    _

// kernel: my_module3_forward.7
$region0: #{my_module3_forward.7}
  #allocation0 [shape = 'u32[]', space=smem, size = 0x4, offset = 0x4, fixed_abs, tag = 'smem constant byte address 0x4 - core index']
  #allocation1 [shape = 'u32[144,128]{1,0:T(1,128)}', space=vmem, size = 0x12000, scoped, tag = 'internal scratch']
  %s0 = inlined_call_operand.vmem [shape: bf16[52,832], index: 0, kind: input, shape index: {}]
  %s1 = inlined_call_operand.vmem [shape: bf16[52,832], index: 1, kind: input, shape index: {}]
  %s2 = inlined_call_operand.vmem [shape: bf16[52,832], index: 2, kind: input, shape index: {}]
  %s3 = inlined_call_operand.vmem [shape: bf16[52,832], index: 3, kind: input, shape index: {}]
  %s4 = inlined_call_operand.vmem [shape: bf16[52,832], index: 4, kind: output, shape index: {}]
  %s5 = sld [smem:[#allocation0]]
  $region26: #{my_module3_forward.7} parent=0
    _
  %s7 = ssub.s32 1, %s5
  %s8 = scalar_select 0, %s7, %s5
  // Predicated region
  $region2: #{my_module3_forward.7} parent=0 // pred_check
    _
  $region3: #{my_module3_forward.7} parent=0 // pred_check_branch
    %10 = sbr.rel (0) target = $region5
  $region4: #{my_module3_forward.7} parent=0 // pred_region
    _
  $region5: #{my_module3_forward.7} parent=0 // pred_fallthru
    _
  // Predicated region
  $region6: #{my_module3_forward.7} parent=0 // pred_check
    _
  $region7: #{my_module3_forward.7} parent=0 // pred_check_branch
    %12 = sbr.rel (0) target = $region9
  $region8: #{my_module3_forward.7} parent=0 // pred_region
    _
  $region9: #{my_module3_forward.7} parent=0 // pred_fallthru
    _
  // Predicated region
  $region10: #{my_module3_forward.7} parent=0 // pred_check
    _
  $region11: #{my_module3_forward.7} parent=0 // pred_check_branch
    %14 = sbr.rel (0) target = $region13
  $region12: #{my_module3_forward.7} parent=0 // pred_region
    _
  $region13: #{my_module3_forward.7} parent=0 // pred_fallthru
    _
  // Predicated region
  $region14: #{my_module3_forward.7} parent=0 // pred_check
    _
  $region15: #{my_module3_forward.7} parent=0 // pred_check_branch
    %16 = sbr.rel (0) target = $region17
  $region16: #{my_module3_forward.7} parent=0 // pred_region
    _
  $region17: #{my_module3_forward.7} parent=0 // pred_fallthru
    _
  %v17 = vld [vmem:[%s0] sm:$0xff]
  %v18 = vld [vmem:[%s0 + $0x8] sm:$0xff]
  %v19 = vld [vmem:[%s0 + $0x10] sm:$0xff]
  %v20 = vld [vmem:[%s0 + $0x18] sm:$0xf]
  %v21 = vld [vmem:[%s0 + $0x1c] sm:$0xff]
  %v22 = vld [vmem:[%s0 + $0x24] sm:$0xff]
  %v23 = vld [vmem:[%s0 + $0x2c] sm:$0xff]
  %v24 = vld [vmem:[%s0 + $0x34] sm:$0xf]
  %v25 = vld [vmem:[%s0 + $0x38] sm:$0xff]
  %v26 = vld [vmem:[%s0 + $0x40] sm:$0xff]
  %v27 = vld [vmem:[%s0 + $0x48] sm:$0xff]
  %v28 = vld [vmem:[%s0 + $0x50] sm:$0xf]
  %v29 = vld [vmem:[%s0 + $0x54] sm:$0xff]
  %v30 = vld [vmem:[%s0 + $0x5c] sm:$0xff]
  %v31 = vld [vmem:[%s0 + $0x64] sm:$0xff]
  %v32 = vld [vmem:[%s0 + $0x6c] sm:$0xf]
  %v33 = vld [vmem:[%s0 + $0x70] sm:$0xff]
  %v34 = vld [vmem:[%s0 + $0x78] sm:$0xff]
  %v35 = vld [vmem:[%s0 + $0x80] sm:$0xff]
  %v36 = vld [vmem:[%s0 + $0x88] sm:$0xf]
  %v37 = vld [vmem:[%s0 + $0x8c] sm:$0xff]
  %v38 = vld [vmem:[%s0 + $0x94] sm:$0xff]
  %v39 = vld [vmem:[%s0 + $0x9c] sm:$0xff]
  %v40 = vld [vmem:[%s0 + $0xa4] sm:$0xf]
  %v41 = vld [vmem:[%s0 + $0xa8] sm:$0x33]
  %v42 = vld [vmem:[%s0 + $0xb0] sm:$0x33]
  %v43 = vld [vmem:[%s0 + $0xb8] sm:$0x33]
  %v44 = vld [vmem:[%s0 + $0xc0] sm:$0x3]
  %v45 = vld [vmem:[%s1] sm:$0xff]
  %v46 = vld [vmem:[%s1 + $0x8] sm:$0xff]
  %v47 = vld [vmem:[%s1 + $0x10] sm:$0xff]
  %v48 = vld [vmem:[%s1 + $0x18] sm:$0xf]
  %v49 = vld [vmem:[%s1 + $0x1c] sm:$0xff]
  %v50 = vld [vmem:[%s1 + $0x24] sm:$0xff]
  %v51 = vld [vmem:[%s1 + $0x2c] sm:$0xff]
  %v52 = vld [vmem:[%s1 + $0x34] sm:$0xf]
  %v53 = vld [vmem:[%s1 + $0x38] sm:$0xff]
  %v54 = vld [vmem:[%s1 + $0x40] sm:$0xff]
  %v55 = vld [vmem:[%s1 + $0x48] sm:$0xff]
  %v56 = vld [vmem:[%s1 + $0x50] sm:$0xf]
  %v57 = vld [vmem:[%s1 + $0x54] sm:$0xff]
  %v58 = vld [vmem:[%s1 + $0x5c] sm:$0xff]
  %v59 = vld [vmem:[%s1 + $0x64] sm:$0xff]
  %v60 = vld [vmem:[%s1 + $0x6c] sm:$0xf]
  %v61 = vld [vmem:[%s1 + $0x70] sm:$0xff]
  %v62 = vld [vmem:[%s1 + $0x78] sm:$0xff]
  %v63 = vld [vmem:[%s1 + $0x80] sm:$0xff]
  %v64 = vld [vmem:[%s1 + $0x88] sm:$0xf]
  %v65 = vld [vmem:[%s1 + $0x8c] sm:$0xff]
  %v66 = vld [vmem:[%s1 + $0x94] sm:$0xff]
  %v67 = vld [vmem:[%s1 + $0x9c] sm:$0xff]
  %v68 = vld [vmem:[%s1 + $0xa4] sm:$0xf]
  %v69 = vld [vmem:[%s1 + $0xa8] sm:$0x33]
  %v70 = vld [vmem:[%s1 + $0xb0] sm:$0x33]
  %v71 = vld [vmem:[%s1 + $0xb8] sm:$0x33]
  %v72 = vld [vmem:[%s1 + $0xc0] sm:$0x3]
  %v73 = vmax.bf16 %v17, %v45
  %v74 = vmax.bf16 %v18, %v46
  %v75 = vmax.bf16 %v19, %v47
  %v76 = vmax.bf16 %v20, %v48
  %v77 = vmax.bf16 %v21, %v49
  %v78 = vmax.bf16 %v22, %v50
  %v79 = vmax.bf16 %v23, %v51
  %v80 = vmax.bf16 %v24, %v52
  %v81 = vmax.bf16 %v25, %v53
  %v82 = vmax.bf16 %v26, %v54
  %v83 = vmax.bf16 %v27, %v55
  %v84 = vmax.bf16 %v28, %v56
  %v85 = vmax.bf16 %v29, %v57
  %v86 = vmax.bf16 %v30, %v58
  %v87 = vmax.bf16 %v31, %v59
  %v88 = vmax.bf16 %v32, %v60
  %v89 = vmax.bf16 %v33, %v61
  %v90 = vmax.bf16 %v34, %v62
  %v91 = vmax.bf16 %v35, %v63
  %v92 = vmax.bf16 %v36, %v64
  %v93 = vmax.bf16 %v37, %v65
  %v94 = vmax.bf16 %v38, %v66
  %v95 = vmax.bf16 %v39, %v67
  %v96 = vmax.bf16 %v40, %v68
  %v97 = vmax.bf16 %v41, %v69
  %v98 = vmax.bf16 %v42, %v70
  %v99 = vmax.bf16 %v43, %v71
  %v100 = vmax.bf16 %v44, %v72
  %v101 = vld [vmem:[%s2] sm:$0xff]
  %v102 = vld [vmem:[%s2 + $0x8] sm:$0xff]
  %v103 = vld [vmem:[%s2 + $0x10] sm:$0xff]
  %v104 = vld [vmem:[%s2 + $0x18] sm:$0xf]
  %v105 = vld [vmem:[%s2 + $0x1c] sm:$0xff]
  %v106 = vld [vmem:[%s2 + $0x24] sm:$0xff]
  %v107 = vld [vmem:[%s2 + $0x2c] sm:$0xff]
  %v108 = vld [vmem:[%s2 + $0x34] sm:$0xf]
  %v109 = vld [vmem:[%s2 + $0x38] sm:$0xff]
  %v110 = vld [vmem:[%s2 + $0x40] sm:$0xff]
  %v111 = vld [vmem:[%s2 + $0x48] sm:$0xff]
  %v112 = vld [vmem:[%s2 + $0x50] sm:$0xf]
  %v113 = vld [vmem:[%s2 + $0x54] sm:$0xff]
  %v114 = vld [vmem:[%s2 + $0x5c] sm:$0xff]
  %v115 = vld [vmem:[%s2 + $0x64] sm:$0xff]
  %v116 = vld [vmem:[%s2 + $0x6c] sm:$0xf]
  %v117 = vld [vmem:[%s2 + $0x70] sm:$0xff]
  %v118 = vld [vmem:[%s2 + $0x78] sm:$0xff]
  %v119 = vld [vmem:[%s2 + $0x80] sm:$0xff]
  %v120 = vld [vmem:[%s2 + $0x88] sm:$0xf]
  %v121 = vld [vmem:[%s2 + $0x8c] sm:$0xff]
  %v122 = vld [vmem:[%s2 + $0x94] sm:$0xff]
  %v123 = vld [vmem:[%s2 + $0x9c] sm:$0xff]
  %v124 = vld [vmem:[%s2 + $0xa4] sm:$0xf]
  %v125 = vld [vmem:[%s2 + $0xa8] sm:$0x33]
  %v126 = vld [vmem:[%s2 + $0xb0] sm:$0x33]
  %v127 = vld [vmem:[%s2 + $0xb8] sm:$0x33]
  %v128 = vld [vmem:[%s2 + $0xc0] sm:$0x3]
  %v129 = vld [vmem:[%s3] sm:$0xff]
  %v130 = vld [vmem:[%s3 + $0x8] sm:$0xff]
  %v131 = vld [vmem:[%s3 + $0x10] sm:$0xff]
  %v132 = vld [vmem:[%s3 + $0x18] sm:$0xf]
  %v133 = vld [vmem:[%s3 + $0x1c] sm:$0xff]
  %v134 = vld [vmem:[%s3 + $0x24] sm:$0xff]
  %v135 = vld [vmem:[%s3 + $0x2c] sm:$0xff]
  %v136 = vld [vmem:[%s3 + $0x34] sm:$0xf]
  %v137 = vld [vmem:[%s3 + $0x38] sm:$0xff]
  %v138 = vld [vmem:[%s3 + $0x40] sm:$0xff]
  %v139 = vld [vmem:[%s3 + $0x48] sm:$0xff]
  %v140 = vld [vmem:[%s3 + $0x50] sm:$0xf]
  %v141 = vld [vmem:[%s3 + $0x54] sm:$0xff]
  %v142 = vld [vmem:[%s3 + $0x5c] sm:$0xff]
  %v143 = vld [vmem:[%s3 + $0x64] sm:$0xff]
  %v144 = vld [vmem:[%s3 + $0x6c] sm:$0xf]
  %v145 = vld [vmem:[%s3 + $0x70] sm:$0xff]
  %v146 = vld [vmem:[%s3 + $0x78] sm:$0xff]
  %v147 = vld [vmem:[%s3 + $0x80] sm:$0xff]
  %v148 = vld [vmem:[%s3 + $0x88] sm:$0xf]
  %v149 = vld [vmem:[%s3 + $0x8c] sm:$0xff]
  %v150 = vld [vmem:[%s3 + $0x94] sm:$0xff]
  %v151 = vld [vmem:[%s3 + $0x9c] sm:$0xff]
  %v152 = vld [vmem:[%s3 + $0xa4] sm:$0xf]
  %v153 = vld [vmem:[%s3 + $0xa8] sm:$0x33]
  %v154 = vld [vmem:[%s3 + $0xb0] sm:$0x33]
  %v155 = vld [vmem:[%s3 + $0xb8] sm:$0x33]
  %v156 = vld [vmem:[%s3 + $0xc0] sm:$0x3]
  %v157 = vmax.bf16 %v101, %v129
  %v158 = vmax.bf16 %v102, %v130
  %v159 = vmax.bf16 %v103, %v131
  %v160 = vmax.bf16 %v104, %v132
  %v161 = vmax.bf16 %v105, %v133
  %v162 = vmax.bf16 %v106, %v134
  %v163 = vmax.bf16 %v107, %v135
  %v164 = vmax.bf16 %v108, %v136
  %v165 = vmax.bf16 %v109, %v137
  %v166 = vmax.bf16 %v110, %v138
  %v167 = vmax.bf16 %v111, %v139
  %v168 = vmax.bf16 %v112, %v140
  %v169 = vmax.bf16 %v113, %v141
  %v170 = vmax.bf16 %v114, %v142
  %v171 = vmax.bf16 %v115, %v143
  %v172 = vmax.bf16 %v116, %v144
  %v173 = vmax.bf16 %v117, %v145
  %v174 = vmax.bf16 %v118, %v146
  %v175 = vmax.bf16 %v119, %v147
  %v176 = vmax.bf16 %v120, %v148
  %v177 = vmax.bf16 %v121, %v149
  %v178 = vmax.bf16 %v122, %v150
  %v179 = vmax.bf16 %v123, %v151
  %v180 = vmax.bf16 %v124, %v152
  %v181 = vmax.bf16 %v125, %v153
  %v182 = vmax.bf16 %v126, %v154
  %v183 = vmax.bf16 %v127, %v155
  %v184 = vmax.bf16 %v128, %v156
  %v185 = vmax.bf16 %v73, %v157
  %v186 = vmax.bf16 %v74, %v158
  %v187 = vmax.bf16 %v75, %v159
  %v188 = vmax.bf16 %v76, %v160
  %v189 = vmax.bf16 %v77, %v161
  %v190 = vmax.bf16 %v78, %v162
  %v191 = vmax.bf16 %v79, %v163
  %v192 = vmax.bf16 %v80, %v164
  %v193 = vmax.bf16 %v81, %v165
  %v194 = vmax.bf16 %v82, %v166
  %v195 = vmax.bf16 %v83, %v167
  %v196 = vmax.bf16 %v84, %v168
  %v197 = vmax.bf16 %v85, %v169
  %v198 = vmax.bf16 %v86, %v170
  %v199 = vmax.bf16 %v87, %v171
  %v200 = vmax.bf16 %v88, %v172
  %v201 = vmax.bf16 %v89, %v173
  %v202 = vmax.bf16 %v90, %v174
  %v203 = vmax.bf16 %v91, %v175
  %v204 = vmax.bf16 %v92, %v176
  %v205 = vmax.bf16 %v93, %v177
  %v206 = vmax.bf16 %v94, %v178
  %v207 = vmax.bf16 %v95, %v179
  %v208 = vmax.bf16 %v96, %v180
  %v209 = vmax.bf16 %v97, %v181
  %v210 = vmax.bf16 %v98, %v182
  %v211 = vmax.bf16 %v99, %v183
  %v212 = vmax.bf16 %v100, %v184
  %213 = vst [vmem:[%s4] sm:$0xff] %v185
  %214 = vst [vmem:[%s4 + $0x8] sm:$0xff] %v186
  %215 = vst [vmem:[%s4 + $0x10] sm:$0xff] %v187
  %vm216 = vcmask 519168
  %217 = vst.msk [vmem:[%s4 + $0x18] sm:$0xf] %vm216, %v188
  %218 = vst [vmem:[%s4 + $0x1c] sm:$0xff] %v189
  %219 = vst [vmem:[%s4 + $0x24] sm:$0xff] %v190
  %220 = vst [vmem:[%s4 + $0x2c] sm:$0xff] %v191
  %221 = vst.msk [vmem:[%s4 + $0x34] sm:$0xf] %vm216, %v192
  %222 = vst [vmem:[%s4 + $0x38] sm:$0xff] %v193
  %223 = vst [vmem:[%s4 + $0x40] sm:$0xff] %v194
  %224 = vst [vmem:[%s4 + $0x48] sm:$0xff] %v195
  %225 = vst.msk [vmem:[%s4 + $0x50] sm:$0xf] %vm216, %v196
  %226 = vst [vmem:[%s4 + $0x54] sm:$0xff] %v197
  %227 = vst [vmem:[%s4 + $0x5c] sm:$0xff] %v198
  %228 = vst [vmem:[%s4 + $0x64] sm:$0xff] %v199
  %229 = vst.msk [vmem:[%s4 + $0x6c] sm:$0xf] %vm216, %v200
  %230 = vst [vmem:[%s4 + $0x70] sm:$0xff] %v201
  %231 = vst [vmem:[%s4 + $0x78] sm:$0xff] %v202
  %232 = vst [vmem:[%s4 + $0x80] sm:$0xff] %v203
  %233 = vst.msk [vmem:[%s4 + $0x88] sm:$0xf] %vm216, %v204
  %234 = vst [vmem:[%s4 + $0x8c] sm:$0xff] %v205
  %235 = vst [vmem:[%s4 + $0x94] sm:$0xff] %v206
  %236 = vst [vmem:[%s4 + $0x9c] sm:$0xff] %v207
  %237 = vst.msk [vmem:[%s4 + $0xa4] sm:$0xf] %vm216, %v208
  %238 = vst [vmem:[%s4 + $0xa8] sm:$0x33] %v209
  %239 = vst [vmem:[%s4 + $0xb0] sm:$0x33] %v210
  %240 = vst [vmem:[%s4 + $0xb8] sm:$0x33] %v211
  %vm241 = vcmask 517120
  %242 = vst.msk [vmem:[%s4 + $0xc0] sm:$0x3] %vm241, %v212
  // Predicated region
  $region18: #{my_module3_forward.7} parent=0 // pred_check
    _
  $region19: #{my_module3_forward.7} parent=0 // pred_check_branch
    %244 = sbr.rel (0) target = $region21
  $region20: #{my_module3_forward.7} parent=0 // pred_region
    _
  $region21: #{my_module3_forward.7} parent=0 // pred_fallthru
    _
  // Predicated region
  $region22: #{my_module3_forward.7} parent=0 // pred_check
    _
  $region23: #{my_module3_forward.7} parent=0 // pred_check_branch
    %246 = sbr.rel (0) target = $region25
  $region24: #{my_module3_forward.7} parent=0 // pred_region
    _
  $region25: #{my_module3_forward.7} parent=0 // pred_fallthru
    _

// kernel: my_module3_forward.8
$region0: #{my_module3_forward.8}
  #allocation0 [shape = 'u32[]', space=smem, size = 0x4, offset = 0x4, fixed_abs, tag = 'smem constant byte address 0x4 - core index']
  #allocation1 [shape = 'u32[144,128]{1,0:T(1,128)}', space=vmem, size = 0x12000, scoped, tag = 'internal scratch']
  %s0 = inlined_call_operand.vmem [shape: bf16[1152,384], index: 0, kind: input, shape index: {}]
  %s1 = inlined_call_operand.vmem [shape: bf16[384,128], index: 1, kind: input, shape index: {}]
  %s2 = inlined_call_operand.vmem [shape: f32[1,128], index: 2, kind: input, shape index: {}]
  %s3 = inlined_call_operand.vmem [shape: bf16[1152,128], index: 3, kind: output, shape index: {}]
  %s4 = sld [smem:[#allocation0]]
  $region45: #{my_module3_forward.8} parent=0
    _
  %s6 = ssub.s32 1, %s4
  %s7 = scalar_select 0, %s6, %s4
  loop: start=0, step=1, limit=5
  $region2: #{my_module3_forward.8} parent=0 // loop_pre_header
    _
  $region3: #{my_module3_forward.8} parent=0 // loop_header
    %s9 = sphi 0, %s13
    %p10 = scmp.ge.s32.totalorder %s9, 5
    %s19 = sphi 0, %s21
    %s22 = sphi 0, %s19
    %s23 = sphi 0, %s22
    %s39 = sphi 0, %s23
    %s43 = sphi 0, %s43
    %s45 = sphi 0, %s43
    %s46 = sphi 0, %s45
    %s60 = sphi 0, %s46
    %s64 = sphi 0, %s64
    %s66 = sphi 0, %s64
    %s67 = sphi 0, %s66
    %s81 = sphi 0, %s67
    %s87 = sphi 0, %s89
    %s90 = sphi 0, %s87
    %s91 = sphi 0, %s90
    %s107 = sphi 0, %s91
  $region4: #{my_module3_forward.8} parent=0 // loop_header_branch
    %12 = sbr.rel (%p10) target = $region8
  $region5: #{my_module3_forward.8} parent=0 // loop_body
    %s14 = ssub.s32 %s9, 1
    %s15 = ssub.s32 %s9, 2
    %s16 = sadd.s32 %s9, 1
    %s17 = ssub.s32 %s9, %s16
    %p18 = scmp.eq.s32.totalorder %s17, 0
    %s20 = sadd.s32 %s19, 1
    %s21 = scalar_select %p18, %s19, %s20
    %p24 = pneg %p18
    %p25 = scmp.eq.s32.totalorder %s9, 2
    %p26 = por %p24, %p25
    %p27 = scmp.ne.s32.totalorder %s19, %s22
    %p28 = scmp.eq.s32.totalorder %s9, 0
    %p29 = por %p27, %p28
    %p30 = scmp.ne.s32.totalorder %s19, %s22
    %p31 = scmp.eq.s32.totalorder %s14, 2
    %p32 = por %p30, %p31
    %p33 = scmp.ne.s32.totalorder %s22, %s23
    %p34 = scmp.eq.s32.totalorder %s14, 0
    %p35 = por %p33, %p34
    %p36 = scmp.ne.s32.totalorder %s22, %s23
    %p37 = scmp.eq.s32.totalorder %s15, 2
    %p38 = por %p36, %p37
    %p40 = scmp.ne.s32.totalorder %s23, %s39
    %p41 = scmp.eq.s32.totalorder %s15, 0
    %p42 = por %p40, %p41
    %s44 = sadd.s32 %s43, 1
    %p47 = scmp.eq.s32.totalorder %s9, 2
    %p48 = scmp.ne.s32.totalorder %s43, %s45
    %p49 = scmp.eq.s32.totalorder %s9, 0
    %p50 = por %p48, %p49
    %p51 = scmp.ne.s32.totalorder %s43, %s45
    %p52 = scmp.eq.s32.totalorder %s14, 2
    %p53 = por %p51, %p52
    %p54 = scmp.ne.s32.totalorder %s45, %s46
    %p55 = scmp.eq.s32.totalorder %s14, 0
    %p56 = por %p54, %p55
    %p57 = scmp.ne.s32.totalorder %s45, %s46
    %p58 = scmp.eq.s32.totalorder %s15, 2
    %p59 = por %p57, %p58
    %p61 = scmp.ne.s32.totalorder %s46, %s60
    %p62 = scmp.eq.s32.totalorder %s15, 0
    %p63 = por %p61, %p62
    %s65 = sadd.s32 %s64, 1
    %p68 = scmp.eq.s32.totalorder %s9, 2
    %p69 = scmp.ne.s32.totalorder %s64, %s66
    %p70 = scmp.eq.s32.totalorder %s9, 0
    %p71 = por %p69, %p70
    %p72 = scmp.ne.s32.totalorder %s64, %s66
    %p73 = scmp.eq.s32.totalorder %s14, 2
    %p74 = por %p72, %p73
    %p75 = scmp.ne.s32.totalorder %s66, %s67
    %p76 = scmp.eq.s32.totalorder %s14, 0
    %p77 = por %p75, %p76
    %p78 = scmp.ne.s32.totalorder %s66, %s67
    %p79 = scmp.eq.s32.totalorder %s15, 2
    %p80 = por %p78, %p79
    %p82 = scmp.ne.s32.totalorder %s67, %s81
    %p83 = scmp.eq.s32.totalorder %s15, 0
    %p84 = por %p82, %p83
    %s85 = ssub.s32 %s9, %s16
    %p86 = scmp.eq.s32.totalorder %s85, 0
    %s88 = sadd.s32 %s87, 1
    %s89 = scalar_select %p86, %s87, %s88
    %p92 = pneg %p86
    %p93 = scmp.eq.s32.totalorder %s9, 2
    %p94 = por %p92, %p93
    %p95 = scmp.ne.s32.totalorder %s87, %s90
    %p96 = scmp.eq.s32.totalorder %s9, 0
    %p97 = por %p95, %p96
    %p98 = scmp.ne.s32.totalorder %s87, %s90
    %p99 = scmp.eq.s32.totalorder %s14, 2
    %p100 = por %p98, %p99
    %p101 = scmp.ne.s32.totalorder %s90, %s91
    %p102 = scmp.eq.s32.totalorder %s14, 0
    %p103 = por %p101, %p102
    %p104 = scmp.ne.s32.totalorder %s90, %s91
    %p105 = scmp.eq.s32.totalorder %s15, 2
    %p106 = por %p104, %p105
    %p108 = scmp.ne.s32.totalorder %s91, %s107
    %p109 = scmp.eq.s32.totalorder %s15, 0
    %p110 = por %p108, %p109
    %p111 = scmp.le.s32.totalorder 1, %s9
    %p112 = scmp.lt.s32.totalorder %s9, 4
    %p113 = pnand %p111, %p112
    %p114 = pneg %p113
    // Predicated region
    $region9: #{my_module3_forward.8} parent=5 // pred_check
      _
    $region10: #{my_module3_forward.8} parent=5 // pred_check_branch
      %116 = sbr.rel (%p113) target = $region12
    $region11: #{my_module3_forward.8} parent=5 // pred_region
      %s117 = ssub.s32 %s9, 1
      // Predicated region
      $region13: #{my_module3_forward.8} parent=11 // pred_check
        %p118 = pneg %p56
      $region14: #{my_module3_forward.8} parent=11 // pred_check_branch
        %120 = sbr.rel (%p118) target = $region16
      $region15: #{my_module3_forward.8} parent=11 // pred_region
        _
      $region16: #{my_module3_forward.8} parent=11 // pred_fallthru
        _
      // Predicated region
      $region17: #{my_module3_forward.8} parent=11 // pred_check
        %p121 = pneg %p77
      $region18: #{my_module3_forward.8} parent=11 // pred_check_branch
        %123 = sbr.rel (%p121) target = $region20
      $region19: #{my_module3_forward.8} parent=11 // pred_region
        _
      $region20: #{my_module3_forward.8} parent=11 // pred_fallthru
        _
    $region12: #{my_module3_forward.8} parent=5 // pred_fallthru
      _
    %p124 = scmp.lt.s32.totalorder %s9, 3
    // Predicated region
    $region21: #{my_module3_forward.8} parent=5 // pred_check
      %p125 = pneg %p124
    $region22: #{my_module3_forward.8} parent=5 // pred_check_branch
      %127 = sbr.rel (%p125) target = $region24
    $region23: #{my_module3_forward.8} parent=5 // pred_region
      // Predicated region
      $region25: #{my_module3_forward.8} parent=23 // pred_check
        %p128 = pneg %p29
      $region26: #{my_module3_forward.8} parent=23 // pred_check_branch
        %130 = sbr.rel (%p128) target = $region28
      $region27: #{my_module3_forward.8} parent=23 // pred_region
        %s131 = smul.u32 48, %s9
        %p132 = scmp.lt.s32.totalorder %s131, 143
        %s133 = scalar_select %p132, %s131, 143
        %s134 = smul.addr %s133, 3
        %s135 = smul.addr %s134, 4
        %s136 = scalar_lea.vmem %s0, %s135
        %s137 = smul.u32 48, %s9
      $region28: #{my_module3_forward.8} parent=23 // pred_fallthru
        _
    $region24: #{my_module3_forward.8} parent=5 // pred_fallthru
      _
    %p138 = scmp.le.s32.totalorder 1, %s9
    %p139 = scmp.lt.s32.totalorder %s9, 4
    %p140 = pnand %p138, %p139
    %p141 = pneg %p140
    // Predicated region
    $region29: #{my_module3_forward.8} parent=5 // pred_check
      _
    $region30: #{my_module3_forward.8} parent=5 // pred_check_branch
      %143 = sbr.rel (%p140) target = $region32
    $region31: #{my_module3_forward.8} parent=5 // pred_region
      %s144 = ssub.s32 %s9, 1
      %s145 = smul.u32 48, %s14
      %p146 = scmp.lt.s32.totalorder %s145, 143
      %s147 = scalar_select %p146, %s145, 143
      %s148 = smul.addr %s147, 3
      %s149 = smul.addr %s148, 4
      %s150 = scalar_lea.vmem %s0, %s149
      %p151 = pneg %p35
      %p152 = pneg %p32
      %p153 = pneg %p56
      %p154 = pneg %p53
      %p155 = pneg %p77
      %p156 = pneg %p74
      %p157 = pneg %p103
      %p158 = pneg %p100
      %s159 = smul.u32 48, %s14
      %p160 = scmp.lt.s32.totalorder %s159, 143
      %s161 = scalar_select %p160, %s159, 143
      %s162 = smul.addr %s161, 4
      %s163 = scalar_lea.vmem %s3, %s162
      %s164 = smul.u32 48, %s14
      %p165 = scmp.lt.s32.totalorder %s164, 143
      %s166 = scalar_select %p165, %s164, 143
      %s167 = smul.addr %s166, 3
      %s168 = smul.addr %s167, 4
      %s169 = scalar_lea.vmem %s0, %s168
      %s170 = smul.u32 48, %s14
      %s171 = smul.u32 48, %s14
      %p172 = scmp.lt.s32.totalorder %s171, 143
      %s173 = scalar_select %p172, %s171, 143
      %s174 = smul.addr %s173, 4
      %s175 = scalar_lea.vmem %s3, %s174
      %s176 = smul.u32 48, %s14
      %v178 = vld [vmem:[%s169] sm:$0xff]
      %v179 = vld [vmem:[%s169 + $0x8] sm:$0xf]
      %v180 = vld [vmem:[%s169 + $0xc] sm:$0xff]
      %v181 = vld [vmem:[%s169 + $0x14] sm:$0xf]
      %v182 = vld [vmem:[%s169 + $0x18] sm:$0xff]
      %v183 = vld [vmem:[%s169 + $0x20] sm:$0xf]
      %v184 = vld [vmem:[%s169 + $0x24] sm:$0xff]
      %v185 = vld [vmem:[%s169 + $0x2c] sm:$0xf]
      %v186 = vld [vmem:[%s169 + $0x30] sm:$0xff]
      %v187 = vld [vmem:[%s169 + $0x38] sm:$0xf]
      %v188 = vld [vmem:[%s169 + $0x3c] sm:$0xff]
      %v189 = vld [vmem:[%s169 + $0x44] sm:$0xf]
      %v190 = vld [vmem:[%s169 + $0x48] sm:$0xff]
      %v191 = vld [vmem:[%s169 + $0x50] sm:$0xf]
      %v192 = vld [vmem:[%s169 + $0x54] sm:$0xff]
      %v193 = vld [vmem:[%s169 + $0x5c] sm:$0xf]
      %v194 = vld [vmem:[%s169 + $0x60] sm:$0xff]
      %v195 = vld [vmem:[%s169 + $0x68] sm:$0xf]
      %v196 = vld [vmem:[%s169 + $0x6c] sm:$0xff]
      %v197 = vld [vmem:[%s169 + $0x74] sm:$0xf]
      %v198 = vld [vmem:[%s169 + $0x78] sm:$0xff]
      %v199 = vld [vmem:[%s169 + $0x80] sm:$0xf]
      %v200 = vld [vmem:[%s169 + $0x84] sm:$0xff]
      %v201 = vld [vmem:[%s169 + $0x8c] sm:$0xf]
      %v202 = vld [vmem:[%s169 + $0x90] sm:$0xff]
      %v203 = vld [vmem:[%s169 + $0x98] sm:$0xf]
      %v204 = vld [vmem:[%s169 + $0x9c] sm:$0xff]
      %v205 = vld [vmem:[%s169 + $0xa4] sm:$0xf]
      %v206 = vld [vmem:[%s169 + $0xa8] sm:$0xff]
      %v207 = vld [vmem:[%s169 + $0xb0] sm:$0xf]
      %v208 = vld [vmem:[%s169 + $0xb4] sm:$0xff]
      %v209 = vld [vmem:[%s169 + $0xbc] sm:$0xf]
      %v210 = vld [vmem:[%s169 + $0xc0] sm:$0xff]
      %v211 = vld [vmem:[%s169 + $0xc8] sm:$0xf]
      %v212 = vld [vmem:[%s169 + $0xcc] sm:$0xff]
      %v213 = vld [vmem:[%s169 + $0xd4] sm:$0xf]
      %v214 = vld [vmem:[%s169 + $0xd8] sm:$0xff]
      %v215 = vld [vmem:[%s169 + $0xe0] sm:$0xf]
      %v216 = vld [vmem:[%s169 + $0xe4] sm:$0xff]
      %v217 = vld [vmem:[%s169 + $0xec] sm:$0xf]
      %v218 = vld [vmem:[%s169 + $0xf0] sm:$0xff]
      %v219 = vld [vmem:[%s169 + $0xf8] sm:$0xf]
      %v220 = vld [vmem:[%s169 + $0xfc] sm:$0xff]
      %v221 = vld [vmem:[%s169 + $0x104] sm:$0xf]
      %v222 = vld [vmem:[%s169 + $0x108] sm:$0xff]
      %v223 = vld [vmem:[%s169 + $0x110] sm:$0xf]
      %v224 = vld [vmem:[%s169 + $0x114] sm:$0xff]
      %v225 = vld [vmem:[%s169 + $0x11c] sm:$0xf]
      %v226 = vld [vmem:[%s169 + $0x120] sm:$0xff]
      %v227 = vld [vmem:[%s169 + $0x128] sm:$0xf]
      %v228 = vld [vmem:[%s169 + $0x12c] sm:$0xff]
      %v229 = vld [vmem:[%s169 + $0x134] sm:$0xf]
      %v230 = vld [vmem:[%s169 + $0x138] sm:$0xff]
      %v231 = vld [vmem:[%s169 + $0x140] sm:$0xf]
      %v232 = vld [vmem:[%s169 + $0x144] sm:$0xff]
      %v233 = vld [vmem:[%s169 + $0x14c] sm:$0xf]
      %v234 = vld [vmem:[%s169 + $0x150] sm:$0xff]
      %v235 = vld [vmem:[%s169 + $0x158] sm:$0xf]
      %v236 = vld [vmem:[%s169 + $0x15c] sm:$0xff]
      %v237 = vld [vmem:[%s169 + $0x164] sm:$0xf]
      %v238 = vld [vmem:[%s169 + $0x168] sm:$0xff]
      %v239 = vld [vmem:[%s169 + $0x170] sm:$0xf]
      %v240 = vld [vmem:[%s169 + $0x174] sm:$0xff]
      %v241 = vld [vmem:[%s169 + $0x17c] sm:$0xf]
      %v242 = vld [vmem:[%s169 + $0x180] sm:$0xff]
      %v243 = vld [vmem:[%s169 + $0x188] sm:$0xf]
      %v244 = vld [vmem:[%s169 + $0x18c] sm:$0xff]
      %v245 = vld [vmem:[%s169 + $0x194] sm:$0xf]
      %v246 = vld [vmem:[%s169 + $0x198] sm:$0xff]
      %v247 = vld [vmem:[%s169 + $0x1a0] sm:$0xf]
      %v248 = vld [vmem:[%s169 + $0x1a4] sm:$0xff]
      %v249 = vld [vmem:[%s169 + $0x1ac] sm:$0xf]
      %v250 = vld [vmem:[%s169 + $0x1b0] sm:$0xff]
      %v251 = vld [vmem:[%s169 + $0x1b8] sm:$0xf]
      %v252 = vld [vmem:[%s169 + $0x1bc] sm:$0xff]
      %v253 = vld [vmem:[%s169 + $0x1c4] sm:$0xf]
      %v254 = vld [vmem:[%s169 + $0x1c8] sm:$0xff]
      %v255 = vld [vmem:[%s169 + $0x1d0] sm:$0xf]
      %v256 = vld [vmem:[%s169 + $0x1d4] sm:$0xff]
      %v257 = vld [vmem:[%s169 + $0x1dc] sm:$0xf]
      %v258 = vld [vmem:[%s169 + $0x1e0] sm:$0xff]
      %v259 = vld [vmem:[%s169 + $0x1e8] sm:$0xf]
      %v260 = vld [vmem:[%s169 + $0x1ec] sm:$0xff]
      %v261 = vld [vmem:[%s169 + $0x1f4] sm:$0xf]
      %v262 = vld [vmem:[%s169 + $0x1f8] sm:$0xff]
      %v263 = vld [vmem:[%s169 + $0x200] sm:$0xf]
      %v264 = vld [vmem:[%s169 + $0x204] sm:$0xff]
      %v265 = vld [vmem:[%s169 + $0x20c] sm:$0xf]
      %v266 = vld [vmem:[%s169 + $0x210] sm:$0xff]
      %v267 = vld [vmem:[%s169 + $0x218] sm:$0xf]
      %v268 = vld [vmem:[%s169 + $0x21c] sm:$0xff]
      %v269 = vld [vmem:[%s169 + $0x224] sm:$0xf]
      %v270 = vld [vmem:[%s169 + $0x228] sm:$0xff]
      %v271 = vld [vmem:[%s169 + $0x230] sm:$0xf]
      %v272 = vld [vmem:[%s169 + $0x234] sm:$0xff]
      %v273 = vld [vmem:[%s169 + $0x23c] sm:$0xf]
      %v274 = vld [vmem:[%s1] sm:$0xf]
      %v275 = vld [vmem:[%s1 + $0x4] sm:$0xf]
      %v276 = vld [vmem:[%s1 + $0x8] sm:$0xf]
      %v277 = vld [vmem:[%s1 + $0xc] sm:$0xf]
      %v278 = vld [vmem:[%s1 + $0x10] sm:$0xf]
      %v279 = vld [vmem:[%s1 + $0x14] sm:$0xf]
      %v280 = vld [vmem:[%s1 + $0x18] sm:$0xf]
      %v281 = vld [vmem:[%s1 + $0x1c] sm:$0xf]
      %v282 = vld [vmem:[%s1 + $0x20] sm:$0xf]
      %v283 = vld [vmem:[%s1 + $0x24] sm:$0xf]
      %v284 = vld [vmem:[%s1 + $0x28] sm:$0xf]
      %v285 = vld [vmem:[%s1 + $0x2c] sm:$0xf]
      %v286 = vld [vmem:[%s1 + $0x30] sm:$0xf]
      %v287 = vld [vmem:[%s1 + $0x34] sm:$0xf]
      %v288 = vld [vmem:[%s1 + $0x38] sm:$0xf]
      %v289 = vld [vmem:[%s1 + $0x3c] sm:$0xf]
      %v290 = vld [vmem:[%s1 + $0x40] sm:$0xf]
      %v291 = vld [vmem:[%s1 + $0x44] sm:$0xf]
      %v292 = vld [vmem:[%s1 + $0x48] sm:$0xf]
      %v293 = vld [vmem:[%s1 + $0x4c] sm:$0xf]
      %v294 = vld [vmem:[%s1 + $0x50] sm:$0xf]
      %v295 = vld [vmem:[%s1 + $0x54] sm:$0xf]
      %v296 = vld [vmem:[%s1 + $0x58] sm:$0xf]
      %v297 = vld [vmem:[%s1 + $0x5c] sm:$0xf]
      %v298 = vld [vmem:[%s1 + $0x60] sm:$0xf]
      %v299 = vld [vmem:[%s1 + $0x64] sm:$0xf]
      %v300 = vld [vmem:[%s1 + $0x68] sm:$0xf]
      %v301 = vld [vmem:[%s1 + $0x6c] sm:$0xf]
      %v302 = vld [vmem:[%s1 + $0x70] sm:$0xf]
      %v303 = vld [vmem:[%s1 + $0x74] sm:$0xf]
      %v304 = vld [vmem:[%s1 + $0x78] sm:$0xf]
      %v305 = vld [vmem:[%s1 + $0x7c] sm:$0xf]
      %v306 = vld [vmem:[%s1 + $0x80] sm:$0xf]
      %v307 = vld [vmem:[%s1 + $0x84] sm:$0xf]
      %v308 = vld [vmem:[%s1 + $0x88] sm:$0xf]
      %v309 = vld [vmem:[%s1 + $0x8c] sm:$0xf]
      %v310 = vld [vmem:[%s1 + $0x90] sm:$0xf]
      %v311 = vld [vmem:[%s1 + $0x94] sm:$0xf]
      %v312 = vld [vmem:[%s1 + $0x98] sm:$0xf]
      %v313 = vld [vmem:[%s1 + $0x9c] sm:$0xf]
      %v314 = vld [vmem:[%s1 + $0xa0] sm:$0xf]
      %v315 = vld [vmem:[%s1 + $0xa4] sm:$0xf]
      %v316 = vld [vmem:[%s1 + $0xa8] sm:$0xf]
      %v317 = vld [vmem:[%s1 + $0xac] sm:$0xf]
      %v318 = vld [vmem:[%s1 + $0xb0] sm:$0xf]
      %v319 = vld [vmem:[%s1 + $0xb4] sm:$0xf]
      %v320 = vld [vmem:[%s1 + $0xb8] sm:$0xf]
      %v321 = vld [vmem:[%s1 + $0xbc] sm:$0xf]
      %v322 = vld [vmem:[%s2] sm:$0x1]
      %v324 = vlaneseq
      %v325 = vshrl.u32 %v324, 7
      %v326 = vsub.s32 0, %v325
      %v327 = vrot.slane %v322, %v326
      %v425 = vunpack.c.l.b16 %v178
      %v426 = vunpack.c.h.b16 %v178
      %v427 = vunpack.c.l.b16 %v179
      %v428 = vunpack.c.l.b16 %v180
      %v429 = vunpack.c.h.b16 %v180
      %v430 = vunpack.c.l.b16 %v181
      %v431 = vunpack.c.l.b16 %v182
      %v432 = vunpack.c.h.b16 %v182
      %v433 = vunpack.c.l.b16 %v183
      %v434 = vunpack.c.l.b16 %v184
      %v435 = vunpack.c.h.b16 %v184
      %v436 = vunpack.c.l.b16 %v185
      %v437 = vunpack.c.l.b16 %v186
      %v438 = vunpack.c.h.b16 %v186
      %v439 = vunpack.c.l.b16 %v187
      %v440 = vunpack.c.l.b16 %v188
      %v441 = vunpack.c.h.b16 %v188
      %v442 = vunpack.c.l.b16 %v189
      %v443 = vunpack.c.l.b16 %v190
      %v444 = vunpack.c.h.b16 %v190
      %v445 = vunpack.c.l.b16 %v191
      %v446 = vunpack.c.l.b16 %v192
      %v447 = vunpack.c.h.b16 %v192
      %v448 = vunpack.c.l.b16 %v193
      %v449 = vunpack.c.l.b16 %v194
      %v450 = vunpack.c.h.b16 %v194
      %v451 = vunpack.c.l.b16 %v195
      %v452 = vunpack.c.l.b16 %v196
      %v453 = vunpack.c.h.b16 %v196
      %v454 = vunpack.c.l.b16 %v197
      %v455 = vunpack.c.l.b16 %v198
      %v456 = vunpack.c.h.b16 %v198
      %v457 = vunpack.c.l.b16 %v199
      %v458 = vunpack.c.l.b16 %v200
      %v459 = vunpack.c.h.b16 %v200
      %v460 = vunpack.c.l.b16 %v201
      %v461 = vunpack.c.l.b16 %v202
      %v462 = vunpack.c.h.b16 %v202
      %v463 = vunpack.c.l.b16 %v203
      %v464 = vunpack.c.l.b16 %v204
      %v465 = vunpack.c.h.b16 %v204
      %v466 = vunpack.c.l.b16 %v205
      %v467 = vunpack.c.l.b16 %v206
      %v468 = vunpack.c.h.b16 %v206
      %v469 = vunpack.c.l.b16 %v207
      %v470 = vunpack.c.l.b16 %v208
      %v471 = vunpack.c.h.b16 %v208
      %v472 = vunpack.c.l.b16 %v209
      %v473 = vunpack.c.l.b16 %v210
      %v474 = vunpack.c.h.b16 %v210
      %v475 = vunpack.c.l.b16 %v211
      %v476 = vunpack.c.l.b16 %v212
      %v477 = vunpack.c.h.b16 %v212
      %v478 = vunpack.c.l.b16 %v213
      %v479 = vunpack.c.l.b16 %v214
      %v480 = vunpack.c.h.b16 %v214
      %v481 = vunpack.c.l.b16 %v215
      %v482 = vunpack.c.l.b16 %v216
      %v483 = vunpack.c.h.b16 %v216
      %v484 = vunpack.c.l.b16 %v217
      %v485 = vunpack.c.l.b16 %v218
      %v486 = vunpack.c.h.b16 %v218
      %v487 = vunpack.c.l.b16 %v219
      %v488 = vunpack.c.l.b16 %v220
      %v489 = vunpack.c.h.b16 %v220
      %v490 = vunpack.c.l.b16 %v221
      %v491 = vunpack.c.l.b16 %v222
      %v492 = vunpack.c.h.b16 %v222
      %v493 = vunpack.c.l.b16 %v223
      %v494 = vunpack.c.l.b16 %v224
      %v495 = vunpack.c.h.b16 %v224
      %v496 = vunpack.c.l.b16 %v225
      %v497 = vunpack.c.l.b16 %v226
      %v498 = vunpack.c.h.b16 %v226
      %v499 = vunpack.c.l.b16 %v227
      %v500 = vunpack.c.l.b16 %v228
      %v501 = vunpack.c.h.b16 %v228
      %v502 = vunpack.c.l.b16 %v229
      %v503 = vunpack.c.l.b16 %v230
      %v504 = vunpack.c.h.b16 %v230
      %v505 = vunpack.c.l.b16 %v231
      %v506 = vunpack.c.l.b16 %v232
      %v507 = vunpack.c.h.b16 %v232
      %v508 = vunpack.c.l.b16 %v233
      %v509 = vunpack.c.l.b16 %v234
      %v510 = vunpack.c.h.b16 %v234
      %v511 = vunpack.c.l.b16 %v235
      %v512 = vunpack.c.l.b16 %v236
      %v513 = vunpack.c.h.b16 %v236
      %v514 = vunpack.c.l.b16 %v237
      %v515 = vunpack.c.l.b16 %v238
      %v516 = vunpack.c.h.b16 %v238
      %v517 = vunpack.c.l.b16 %v239
      %v518 = vunpack.c.l.b16 %v240
      %v519 = vunpack.c.h.b16 %v240
      %v520 = vunpack.c.l.b16 %v241
      %v521 = vunpack.c.l.b16 %v242
      %v522 = vunpack.c.h.b16 %v242
      %v523 = vunpack.c.l.b16 %v243
      %v524 = vunpack.c.l.b16 %v244
      %v525 = vunpack.c.h.b16 %v244
      %v526 = vunpack.c.l.b16 %v245
      %v527 = vunpack.c.l.b16 %v246
      %v528 = vunpack.c.h.b16 %v246
      %v529 = vunpack.c.l.b16 %v247
      %v530 = vunpack.c.l.b16 %v248
      %v531 = vunpack.c.h.b16 %v248
      %v532 = vunpack.c.l.b16 %v249
      %v533 = vunpack.c.l.b16 %v250
      %v534 = vunpack.c.h.b16 %v250
      %v535 = vunpack.c.l.b16 %v251
      %v536 = vunpack.c.l.b16 %v252
      %v537 = vunpack.c.h.b16 %v252
      %v538 = vunpack.c.l.b16 %v253
      %v539 = vunpack.c.l.b16 %v254
      %v540 = vunpack.c.h.b16 %v254
      %v541 = vunpack.c.l.b16 %v255
      %v542 = vunpack.c.l.b16 %v256
      %v543 = vunpack.c.h.b16 %v256
      %v544 = vunpack.c.l.b16 %v257
      %v545 = vunpack.c.l.b16 %v258
      %v546 = vunpack.c.h.b16 %v258
      %v547 = vunpack.c.l.b16 %v259
      %v548 = vunpack.c.l.b16 %v260
      %v549 = vunpack.c.h.b16 %v260
      %v550 = vunpack.c.l.b16 %v261
      %v551 = vunpack.c.l.b16 %v262
      %v552 = vunpack.c.h.b16 %v262
      %v553 = vunpack.c.l.b16 %v263
      %v554 = vunpack.c.l.b16 %v264
      %v555 = vunpack.c.h.b16 %v264
      %v556 = vunpack.c.l.b16 %v265
      %v557 = vunpack.c.l.b16 %v266
      %v558 = vunpack.c.h.b16 %v266
      %v559 = vunpack.c.l.b16 %v267
      %v560 = vunpack.c.l.b16 %v268
      %v561 = vunpack.c.h.b16 %v268
      %v562 = vunpack.c.l.b16 %v269
      %v563 = vunpack.c.l.b16 %v270
      %v564 = vunpack.c.h.b16 %v270
      %v565 = vunpack.c.l.b16 %v271
      %v566 = vunpack.c.l.b16 %v272
      %v567 = vunpack.c.h.b16 %v272
      %v568 = vunpack.c.l.b16 %v273
      %v569 = vpack.c.b16 %v428, %v425
      %v570 = vpack.c.b16 %v429, %v426
      %v571 = vpack.c.b16 %v430, %v427
      %v572 = vpack.c.b16 %v434, %v431
      %v573 = vpack.c.b16 %v435, %v432
      %v574 = vpack.c.b16 %v436, %v433
      %v575 = vpack.c.b16 %v440, %v437
      %v576 = vpack.c.b16 %v441, %v438
      %v577 = vpack.c.b16 %v442, %v439
      %v578 = vpack.c.b16 %v446, %v443
      %v579 = vpack.c.b16 %v447, %v444
      %v580 = vpack.c.b16 %v448, %v445
      %v581 = vpack.c.b16 %v452, %v449
      %v582 = vpack.c.b16 %v453, %v450
      %v583 = vpack.c.b16 %v454, %v451
      %v584 = vpack.c.b16 %v458, %v455
      %v585 = vpack.c.b16 %v459, %v456
      %v586 = vpack.c.b16 %v460, %v457
      %v587 = vpack.c.b16 %v464, %v461
      %v588 = vpack.c.b16 %v465, %v462
      %v589 = vpack.c.b16 %v466, %v463
      %v590 = vpack.c.b16 %v470, %v467
      %v591 = vpack.c.b16 %v471, %v468
      %v592 = vpack.c.b16 %v472, %v469
      %v593 = vpack.c.b16 %v476, %v473
      %v594 = vpack.c.b16 %v477, %v474
      %v595 = vpack.c.b16 %v478, %v475
      %v596 = vpack.c.b16 %v482, %v479
      %v597 = vpack.c.b16 %v483, %v480
      %v598 = vpack.c.b16 %v484, %v481
      %v599 = vpack.c.b16 %v488, %v485
      %v600 = vpack.c.b16 %v489, %v486
      %v601 = vpack.c.b16 %v490, %v487
      %v602 = vpack.c.b16 %v494, %v491
      %v603 = vpack.c.b16 %v495, %v492
      %v604 = vpack.c.b16 %v496, %v493
      %v605 = vpack.c.b16 %v500, %v497
      %v606 = vpack.c.b16 %v501, %v498
      %v607 = vpack.c.b16 %v502, %v499
      %v608 = vpack.c.b16 %v506, %v503
      %v609 = vpack.c.b16 %v507, %v504
      %v610 = vpack.c.b16 %v508, %v505
      %v611 = vpack.c.b16 %v512, %v509
      %v612 = vpack.c.b16 %v513, %v510
      %v613 = vpack.c.b16 %v514, %v511
      %v614 = vpack.c.b16 %v518, %v515
      %v615 = vpack.c.b16 %v519, %v516
      %v616 = vpack.c.b16 %v520, %v517
      %v617 = vpack.c.b16 %v524, %v521
      %v618 = vpack.c.b16 %v525, %v522
      %v619 = vpack.c.b16 %v526, %v523
      %v620 = vpack.c.b16 %v530, %v527
      %v621 = vpack.c.b16 %v531, %v528
      %v622 = vpack.c.b16 %v532, %v529
      %v623 = vpack.c.b16 %v536, %v533
      %v624 = vpack.c.b16 %v537, %v534
      %v625 = vpack.c.b16 %v538, %v535
      %v626 = vpack.c.b16 %v542, %v539
      %v627 = vpack.c.b16 %v543, %v540
      %v628 = vpack.c.b16 %v544, %v541
      %v629 = vpack.c.b16 %v548, %v545
      %v630 = vpack.c.b16 %v549, %v546
      %v631 = vpack.c.b16 %v550, %v547
      %v632 = vpack.c.b16 %v554, %v551
      %v633 = vpack.c.b16 %v555, %v552
      %v634 = vpack.c.b16 %v556, %v553
      %v635 = vpack.c.b16 %v560, %v557
      %v636 = vpack.c.b16 %v561, %v558
      %v637 = vpack.c.b16 %v562, %v559
      %v638 = vpack.c.b16 %v566, %v563
      %v639 = vpack.c.b16 %v567, %v564
      %v640 = vpack.c.b16 %v568, %v565
      %v761 = vunpack.c.l.b16 %v274
      %v762 = vunpack.c.l.b16 %v275
      %v763 = vunpack.c.l.b16 %v276
      %v764 = vunpack.c.l.b16 %v277
      %v765 = vunpack.c.l.b16 %v278
      %v766 = vunpack.c.l.b16 %v279
      %v767 = vunpack.c.l.b16 %v280
      %v768 = vunpack.c.l.b16 %v281
      %v769 = vunpack.c.l.b16 %v282
      %v770 = vunpack.c.l.b16 %v283
      %v771 = vunpack.c.l.b16 %v284
      %v772 = vunpack.c.l.b16 %v285
      %v773 = vunpack.c.l.b16 %v286
      %v774 = vunpack.c.l.b16 %v287
      %v775 = vunpack.c.l.b16 %v288
      %v776 = vunpack.c.l.b16 %v289
      %v777 = vunpack.c.l.b16 %v290
      %v778 = vunpack.c.l.b16 %v291
      %v779 = vunpack.c.l.b16 %v292
      %v780 = vunpack.c.l.b16 %v293
      %v781 = vunpack.c.l.b16 %v294
      %v782 = vunpack.c.l.b16 %v295
      %v783 = vunpack.c.l.b16 %v296
      %v784 = vunpack.c.l.b16 %v297
      %v785 = vunpack.c.l.b16 %v298
      %v786 = vunpack.c.l.b16 %v299
      %v787 = vunpack.c.l.b16 %v300
      %v788 = vunpack.c.l.b16 %v301
      %v789 = vunpack.c.l.b16 %v302
      %v790 = vunpack.c.l.b16 %v303
      %v791 = vunpack.c.l.b16 %v304
      %v792 = vunpack.c.l.b16 %v305
      %v793 = vunpack.c.l.b16 %v306
      %v794 = vunpack.c.l.b16 %v307
      %v795 = vunpack.c.l.b16 %v308
      %v796 = vunpack.c.l.b16 %v309
      %v797 = vunpack.c.l.b16 %v310
      %v798 = vunpack.c.l.b16 %v311
      %v799 = vunpack.c.l.b16 %v312
      %v800 = vunpack.c.l.b16 %v313
      %v801 = vunpack.c.l.b16 %v314
      %v802 = vunpack.c.l.b16 %v315
      %v803 = vunpack.c.l.b16 %v316
      %v804 = vunpack.c.l.b16 %v317
      %v805 = vunpack.c.l.b16 %v318
      %v806 = vunpack.c.l.b16 %v319
      %v807 = vunpack.c.l.b16 %v320
      %v808 = vunpack.c.l.b16 %v321
      %v809 = vpack.c.b16 %v762, %v761
      %v810 = vpack.c.b16 %v764, %v763
      %v811 = vpack.c.b16 %v766, %v765
      %v812 = vpack.c.b16 %v768, %v767
      %v813 = vpack.c.b16 %v770, %v769
      %v814 = vpack.c.b16 %v772, %v771
      %v815 = vpack.c.b16 %v774, %v773
      %v816 = vpack.c.b16 %v776, %v775
      %v817 = vpack.c.b16 %v778, %v777
      %v818 = vpack.c.b16 %v780, %v779
      %v819 = vpack.c.b16 %v782, %v781
      %v820 = vpack.c.b16 %v784, %v783
      %v821 = vpack.c.b16 %v786, %v785
      %v822 = vpack.c.b16 %v788, %v787
      %v823 = vpack.c.b16 %v790, %v789
      %v824 = vpack.c.b16 %v792, %v791
      %v825 = vpack.c.b16 %v794, %v793
      %v826 = vpack.c.b16 %v796, %v795
      %v827 = vpack.c.b16 %v798, %v797
      %v828 = vpack.c.b16 %v800, %v799
      %v829 = vpack.c.b16 %v802, %v801
      %v830 = vpack.c.b16 %v804, %v803
      %v831 = vpack.c.b16 %v806, %v805
      %v832 = vpack.c.b16 %v808, %v807
      %857 = vmatprep.subr.bf16.mxu0 0
      %858 = vmatpush1.bf16.msra.mxu0 %v816
      %859 = vmatprep.subr.bf16.mxu0 0
      %860 = vmatpush1.bf16.msra.mxu0 %v815
      %861 = vmatprep.subr.bf16.mxu0 0
      %862 = vmatpush1.bf16.msra.mxu0 %v814
      %863 = vmatprep.subr.bf16.mxu0 0
      %864 = vmatpush1.bf16.msra.mxu0 %v813
      %865 = vmatprep.subr.bf16.mxu0 0
      %866 = vmatpush1.bf16.msra.mxu0 %v812
      %867 = vmatprep.subr.bf16.mxu0 0
      %868 = vmatpush1.bf16.msra.mxu0 %v811
      %869 = vmatprep.subr.bf16.mxu0 0
      %870 = vmatpush1.bf16.msra.mxu0 %v810
      %871 = vmatprep.subr.bf16.mxu0 0
      %872 = vmatpush1.bf16.msra.mxu0 %v809
      %873 = vmatprep.subr.bf16.mxu0 0
      %874 = vmatpush2.bf16.msra.mxu0 %v824
      %875 = vmatprep.subr.bf16.mxu0 0
      %876 = vmatpush2.bf16.msra.mxu0 %v823
      %877 = vmatprep.subr.bf16.mxu0 0
      %878 = vmatpush2.bf16.msra.mxu0 %v822
      %879 = vmatprep.subr.bf16.mxu0 0
      %880 = vmatpush2.bf16.msra.mxu0 %v821
      %881 = vmatprep.subr.bf16.mxu0 0
      %882 = vmatpush2.bf16.msra.mxu0 %v820
      %883 = vmatprep.subr.bf16.mxu0 0
      %884 = vmatpush2.bf16.msra.mxu0 %v819
      %885 = vmatprep.subr.bf16.mxu0 0
      %886 = vmatpush2.bf16.msra.mxu0 %v818
      %887 = vmatprep.subr.bf16.mxu0 0
      %888 = vmatpush2.bf16.msra.mxu0 %v817
      %889 = vmatprep.mubr.bf16.mxu0 %v570
      %890 = vmatmul.mubr.bf16.gmra.mxu0 %v569
      %v891 = vpop.f32.mrf.mxu0
      %v892 = vadd.f32 %v327, %v891
      %v893 = vpop.f32.mrf.mxu0
      %v894 = vpop.f32.mrf.mxu0
      %v895 = vadd.f32 %v327, %v894
      %v896 = vpop.f32.mrf.mxu0
      %897 = vmatprep.mubr.bf16.mxu0 %v573
      %898 = vmatmul.mubr.bf16.gmra.mxu0 %v572
      %v899 = vpop.f32.mrf.mxu0
      %v900 = vadd.f32 %v327, %v899
      %v901 = vpop.f32.mrf.mxu0
      %v902 = vpop.f32.mrf.mxu0
      %v903 = vadd.f32 %v327, %v902
      %v904 = vpop.f32.mrf.mxu0
      %905 = vmatprep.mubr.bf16.mxu0 %v576
      %906 = vmatmul.mubr.bf16.gmra.mxu0 %v575
      %v907 = vpop.f32.mrf.mxu0
      %v908 = vadd.f32 %v327, %v907
      %v909 = vpop.f32.mrf.mxu0
      %v910 = vpop.f32.mrf.mxu0
      %v911 = vadd.f32 %v327, %v910
      %v912 = vpop.f32.mrf.mxu0
      %913 = vmatprep.mubr.bf16.mxu0 %v579
      %914 = vmatmul.mubr.bf16.gmra.mxu0 %v578
      %v915 = vpop.f32.mrf.mxu0
      %v916 = vadd.f32 %v327, %v915
      %v917 = vpop.f32.mrf.mxu0
      %v918 = vpop.f32.mrf.mxu0
      %v919 = vadd.f32 %v327, %v918
      %v920 = vpop.f32.mrf.mxu0
      %921 = vmatprep.mubr.bf16.mxu0 %v582
      %922 = vmatmul.mubr.bf16.gmra.mxu0 %v581
      %v923 = vpop.f32.mrf.mxu0
      %v924 = vadd.f32 %v327, %v923
      %v925 = vpop.f32.mrf.mxu0
      %v926 = vpop.f32.mrf.mxu0
      %v927 = vadd.f32 %v327, %v926
      %v928 = vpop.f32.mrf.mxu0
      %929 = vmatprep.mubr.bf16.mxu0 %v585
      %930 = vmatmul.mubr.bf16.gmra.mxu0 %v584
      %v931 = vpop.f32.mrf.mxu0
      %v932 = vadd.f32 %v327, %v931
      %v933 = vpop.f32.mrf.mxu0
      %v934 = vpop.f32.mrf.mxu0
      %v935 = vadd.f32 %v327, %v934
      %v936 = vpop.f32.mrf.mxu0
      %937 = vmatprep.mubr.bf16.mxu0 %v588
      %938 = vmatmul.mubr.bf16.gmra.mxu0 %v587
      %v939 = vpop.f32.mrf.mxu0
      %v940 = vadd.f32 %v327, %v939
      %v941 = vpop.f32.mrf.mxu0
      %v942 = vpop.f32.mrf.mxu0
      %v943 = vadd.f32 %v327, %v942
      %v944 = vpop.f32.mrf.mxu0
      %945 = vmatprep.mubr.bf16.mxu0 %v591
      %946 = vmatmul.mubr.bf16.gmra.mxu0 %v590
      %v947 = vpop.f32.mrf.mxu0
      %v948 = vadd.f32 %v327, %v947
      %v949 = vpop.f32.mrf.mxu0
      %v950 = vpop.f32.mrf.mxu0
      %v951 = vadd.f32 %v327, %v950
      %v952 = vpop.f32.mrf.mxu0
      %953 = vmatprep.mubr.bf16.mxu0 %v594
      %954 = vmatmul.mubr.bf16.gmra.mxu0 %v593
      %v955 = vpop.f32.mrf.mxu0
      %v956 = vadd.f32 %v327, %v955
      %v957 = vpop.f32.mrf.mxu0
      %v958 = vpop.f32.mrf.mxu0
      %v959 = vadd.f32 %v327, %v958
      %v960 = vpop.f32.mrf.mxu0
      %961 = vmatprep.mubr.bf16.mxu0 %v597
      %962 = vmatmul.mubr.bf16.gmra.mxu0 %v596
      %v963 = vpop.f32.mrf.mxu0
      %v964 = vadd.f32 %v327, %v963
      %v965 = vpop.f32.mrf.mxu0
      %v966 = vpop.f32.mrf.mxu0
      %v967 = vadd.f32 %v327, %v966
      %v968 = vpop.f32.mrf.mxu0
      %969 = vmatprep.mubr.bf16.mxu0 %v600
      %970 = vmatmul.mubr.bf16.gmra.mxu0 %v599
      %v971 = vpop.f32.mrf.mxu0
      %v972 = vadd.f32 %v327, %v971
      %v973 = vpop.f32.mrf.mxu0
      %v974 = vpop.f32.mrf.mxu0
      %v975 = vadd.f32 %v327, %v974
      %v976 = vpop.f32.mrf.mxu0
      %977 = vmatprep.mubr.bf16.mxu0 %v603
      %978 = vmatmul.mubr.bf16.gmra.mxu0 %v602
      %v979 = vpop.f32.mrf.mxu0
      %v980 = vadd.f32 %v327, %v979
      %v981 = vpop.f32.mrf.mxu0
      %v982 = vpop.f32.mrf.mxu0
      %v983 = vadd.f32 %v327, %v982
      %v984 = vpop.f32.mrf.mxu0
      %985 = vmatprep.mubr.bf16.mxu0 %v606
      %986 = vmatmul.mubr.bf16.gmra.mxu0 %v605
      %v987 = vpop.f32.mrf.mxu0
      %v988 = vadd.f32 %v327, %v987
      %v989 = vpop.f32.mrf.mxu0
      %v990 = vpop.f32.mrf.mxu0
      %v991 = vadd.f32 %v327, %v990
      %v992 = vpop.f32.mrf.mxu0
      %993 = vmatprep.mubr.bf16.mxu0 %v609
      %994 = vmatmul.mubr.bf16.gmra.mxu0 %v608
      %v995 = vpop.f32.mrf.mxu0
      %v996 = vadd.f32 %v327, %v995
      %v997 = vpop.f32.mrf.mxu0
      %v998 = vpop.f32.mrf.mxu0
      %v999 = vadd.f32 %v327, %v998
      %v1000 = vpop.f32.mrf.mxu0
      %1001 = vmatprep.mubr.bf16.mxu0 %v612
      %1002 = vmatmul.mubr.bf16.gmra.mxu0 %v611
      %v1003 = vpop.f32.mrf.mxu0
      %v1004 = vadd.f32 %v327, %v1003
      %v1005 = vpop.f32.mrf.mxu0
      %v1006 = vpop.f32.mrf.mxu0
      %v1007 = vadd.f32 %v327, %v1006
      %v1008 = vpop.f32.mrf.mxu0
      %1009 = vmatprep.mubr.bf16.mxu0 %v615
      %1010 = vmatmul.mubr.bf16.gmra.mxu0 %v614
      %v1011 = vpop.f32.mrf.mxu0
      %v1012 = vadd.f32 %v327, %v1011
      %v1013 = vpop.f32.mrf.mxu0
      %v1014 = vpop.f32.mrf.mxu0
      %v1015 = vadd.f32 %v327, %v1014
      %v1016 = vpop.f32.mrf.mxu0
      %1017 = vmatprep.mubr.bf16.mxu0 %v618
      %1018 = vmatmul.mubr.bf16.gmra.mxu0 %v617
      %v1019 = vpop.f32.mrf.mxu0
      %v1020 = vadd.f32 %v327, %v1019
      %v1021 = vpop.f32.mrf.mxu0
      %v1022 = vpop.f32.mrf.mxu0
      %v1023 = vadd.f32 %v327, %v1022
      %v1024 = vpop.f32.mrf.mxu0
      %1025 = vmatprep.mubr.bf16.mxu0 %v621
      %1026 = vmatmul.mubr.bf16.gmra.mxu0 %v620
      %v1027 = vpop.f32.mrf.mxu0
      %v1028 = vadd.f32 %v327, %v1027
      %v1029 = vpop.f32.mrf.mxu0
      %v1030 = vpop.f32.mrf.mxu0
      %v1031 = vadd.f32 %v327, %v1030
      %v1032 = vpop.f32.mrf.mxu0
      %1033 = vmatprep.mubr.bf16.mxu0 %v624
      %1034 = vmatmul.mubr.bf16.gmra.mxu0 %v623
      %v1035 = vpop.f32.mrf.mxu0
      %v1036 = vadd.f32 %v327, %v1035
      %v1037 = vpop.f32.mrf.mxu0
      %v1038 = vpop.f32.mrf.mxu0
      %v1039 = vadd.f32 %v327, %v1038
      %v1040 = vpop.f32.mrf.mxu0
      %1041 = vmatprep.mubr.bf16.mxu0 %v627
      %1042 = vmatmul.mubr.bf16.gmra.mxu0 %v626
      %v1043 = vpop.f32.mrf.mxu0
      %v1044 = vadd.f32 %v327, %v1043
      %v1045 = vpop.f32.mrf.mxu0
      %v1046 = vpop.f32.mrf.mxu0
      %v1047 = vadd.f32 %v327, %v1046
      %v1048 = vpop.f32.mrf.mxu0
      %1049 = vmatprep.mubr.bf16.mxu0 %v630
      %1050 = vmatmul.mubr.bf16.gmra.mxu0 %v629
      %v1051 = vpop.f32.mrf.mxu0
      %v1052 = vadd.f32 %v327, %v1051
      %v1053 = vpop.f32.mrf.mxu0
      %v1054 = vpop.f32.mrf.mxu0
      %v1055 = vadd.f32 %v327, %v1054
      %v1056 = vpop.f32.mrf.mxu0
      %1057 = vmatprep.mubr.bf16.mxu0 %v633
      %1058 = vmatmul.mubr.bf16.gmra.mxu0 %v632
      %v1059 = vpop.f32.mrf.mxu0
      %v1060 = vadd.f32 %v327, %v1059
      %v1061 = vpop.f32.mrf.mxu0
      %v1062 = vpop.f32.mrf.mxu0
      %v1063 = vadd.f32 %v327, %v1062
      %v1064 = vpop.f32.mrf.mxu0
      %1065 = vmatprep.mubr.bf16.mxu0 %v636
      %1066 = vmatmul.mubr.bf16.gmra.mxu0 %v635
      %v1067 = vpop.f32.mrf.mxu0
      %v1068 = vadd.f32 %v327, %v1067
      %v1069 = vpop.f32.mrf.mxu0
      %v1070 = vpop.f32.mrf.mxu0
      %v1071 = vadd.f32 %v327, %v1070
      %v1072 = vpop.f32.mrf.mxu0
      %1073 = vmatprep.mubr.bf16.mxu0 %v639
      %1074 = vmatmul.mubr.bf16.gmra.mxu0 %v638
      %v1075 = vpop.f32.mrf.mxu0
      %v1076 = vadd.f32 %v327, %v1075
      %v1077 = vpop.f32.mrf.mxu0
      %v1078 = vpop.f32.mrf.mxu0
      %v1079 = vadd.f32 %v327, %v1078
      %v1080 = vpop.f32.mrf.mxu0
      %1081 = vdwg.mxu0
      %1082 = vmatprep.subr.bf16.mxu0 0
      %1083 = vmatpush1.bf16.msra.mxu0 %v832
      %1084 = vmatprep.subr.bf16.mxu0 0
      %1085 = vmatpush1.bf16.msra.mxu0 %v831
      %1086 = vmatprep.subr.bf16.mxu0 0
      %1087 = vmatpush1.bf16.msra.mxu0 %v830
      %1088 = vmatprep.subr.bf16.mxu0 0
      %1089 = vmatpush1.bf16.msra.mxu0 %v829
      %1090 = vmatprep.subr.bf16.mxu0 0
      %1091 = vmatpush1.bf16.msra.mxu0 %v828
      %1092 = vmatprep.subr.bf16.mxu0 0
      %1093 = vmatpush1.bf16.msra.mxu0 %v827
      %1094 = vmatprep.subr.bf16.mxu0 0
      %1095 = vmatpush1.bf16.msra.mxu0 %v826
      %1096 = vmatprep.subr.bf16.mxu0 0
      %1097 = vmatpush1.bf16.msra.mxu0 %v825
      %1098 = vmatprep.subr.bf16.mxu0 0
      %1099 = vmatpush2.bf16.msra.mxu0 0
      %1100 = vmatprep.subr.bf16.mxu0 0
      %1101 = vmatpush2.bf16.msra.mxu0 0
      %1102 = vmatprep.subr.bf16.mxu0 0
      %1103 = vmatpush2.bf16.msra.mxu0 0
      %1104 = vmatprep.subr.bf16.mxu0 0
      %1105 = vmatpush2.bf16.msra.mxu0 0
      %1106 = vmatprep.subr.bf16.mxu0 0
      %1107 = vmatpush2.bf16.msra.mxu0 0
      %1108 = vmatprep.subr.bf16.mxu0 0
      %1109 = vmatpush2.bf16.msra.mxu0 0
      %1110 = vmatprep.subr.bf16.mxu0 0
      %1111 = vmatpush2.bf16.msra.mxu0 0
      %1112 = vmatprep.subr.bf16.mxu0 0
      %1113 = vmatpush2.bf16.msra.mxu0 0
      %1114 = vmatprep.mubr.bf16.mxu0 0
      %1115 = vmatmul.mubr.bf16.gmra.mxu0 %v571
      %v1116 = vpop.f32.mrf.mxu0
      %v1117 = vadd.f32 %v892, %v1116
      %v1118 = vpop.f32.mrf.mxu0
      %v1119 = vpop.f32.mrf.mxu0
      %v1120 = vadd.f32 %v895, %v1119
      %v1121 = vpop.f32.mrf.mxu0
      %1122 = vmatprep.mubr.bf16.mxu0 0
      %1123 = vmatmul.mubr.bf16.gmra.mxu0 %v574
      %v1124 = vpop.f32.mrf.mxu0
      %v1125 = vadd.f32 %v900, %v1124
      %v1126 = vpop.f32.mrf.mxu0
      %v1127 = vpop.f32.mrf.mxu0
      %v1128 = vadd.f32 %v903, %v1127
      %v1129 = vpop.f32.mrf.mxu0
      %1130 = vmatprep.mubr.bf16.mxu0 0
      %1131 = vmatmul.mubr.bf16.gmra.mxu0 %v577
      %v1132 = vpop.f32.mrf.mxu0
      %v1133 = vadd.f32 %v908, %v1132
      %v1134 = vpop.f32.mrf.mxu0
      %v1135 = vpop.f32.mrf.mxu0
      %v1136 = vadd.f32 %v911, %v1135
      %v1137 = vpop.f32.mrf.mxu0
      %1138 = vmatprep.mubr.bf16.mxu0 0
      %1139 = vmatmul.mubr.bf16.gmra.mxu0 %v580
      %v1140 = vpop.f32.mrf.mxu0
      %v1141 = vadd.f32 %v916, %v1140
      %v1142 = vpop.f32.mrf.mxu0
      %v1143 = vpop.f32.mrf.mxu0
      %v1144 = vadd.f32 %v919, %v1143
      %v1145 = vpop.f32.mrf.mxu0
      %1146 = vmatprep.mubr.bf16.mxu0 0
      %1147 = vmatmul.mubr.bf16.gmra.mxu0 %v583
      %v1148 = vpop.f32.mrf.mxu0
      %v1149 = vadd.f32 %v924, %v1148
      %v1150 = vpop.f32.mrf.mxu0
      %v1151 = vpop.f32.mrf.mxu0
      %v1152 = vadd.f32 %v927, %v1151
      %v1153 = vpop.f32.mrf.mxu0
      %1154 = vmatprep.mubr.bf16.mxu0 0
      %1155 = vmatmul.mubr.bf16.gmra.mxu0 %v586
      %v1156 = vpop.f32.mrf.mxu0
      %v1157 = vadd.f32 %v932, %v1156
      %v1158 = vpop.f32.mrf.mxu0
      %v1159 = vpop.f32.mrf.mxu0
      %v1160 = vadd.f32 %v935, %v1159
      %v1161 = vpop.f32.mrf.mxu0
      %1162 = vmatprep.mubr.bf16.mxu0 0
      %1163 = vmatmul.mubr.bf16.gmra.mxu0 %v589
      %v1164 = vpop.f32.mrf.mxu0
      %v1165 = vadd.f32 %v940, %v1164
      %v1166 = vpop.f32.mrf.mxu0
      %v1167 = vpop.f32.mrf.mxu0
      %v1168 = vadd.f32 %v943, %v1167
      %v1169 = vpop.f32.mrf.mxu0
      %1170 = vmatprep.mubr.bf16.mxu0 0
      %1171 = vmatmul.mubr.bf16.gmra.mxu0 %v592
      %v1172 = vpop.f32.mrf.mxu0
      %v1173 = vadd.f32 %v948, %v1172
      %v1174 = vpop.f32.mrf.mxu0
      %v1175 = vpop.f32.mrf.mxu0
      %v1176 = vadd.f32 %v951, %v1175
      %v1177 = vpop.f32.mrf.mxu0
      %1178 = vmatprep.mubr.bf16.mxu0 0
      %1179 = vmatmul.mubr.bf16.gmra.mxu0 %v595
      %v1180 = vpop.f32.mrf.mxu0
      %v1181 = vadd.f32 %v956, %v1180
      %v1182 = vpop.f32.mrf.mxu0
      %v1183 = vpop.f32.mrf.mxu0
      %v1184 = vadd.f32 %v959, %v1183
      %v1185 = vpop.f32.mrf.mxu0
      %1186 = vmatprep.mubr.bf16.mxu0 0
      %1187 = vmatmul.mubr.bf16.gmra.mxu0 %v598
      %v1188 = vpop.f32.mrf.mxu0
      %v1189 = vadd.f32 %v964, %v1188
      %v1190 = vpop.f32.mrf.mxu0
      %v1191 = vpop.f32.mrf.mxu0
      %v1192 = vadd.f32 %v967, %v1191
      %v1193 = vpop.f32.mrf.mxu0
      %1194 = vmatprep.mubr.bf16.mxu0 0
      %1195 = vmatmul.mubr.bf16.gmra.mxu0 %v601
      %v1196 = vpop.f32.mrf.mxu0
      %v1197 = vadd.f32 %v972, %v1196
      %v1198 = vpop.f32.mrf.mxu0
      %v1199 = vpop.f32.mrf.mxu0
      %v1200 = vadd.f32 %v975, %v1199
      %v1201 = vpop.f32.mrf.mxu0
      %1202 = vmatprep.mubr.bf16.mxu0 0
      %1203 = vmatmul.mubr.bf16.gmra.mxu0 %v604
      %v1204 = vpop.f32.mrf.mxu0
      %v1205 = vadd.f32 %v980, %v1204
      %v1206 = vpop.f32.mrf.mxu0
      %v1207 = vpop.f32.mrf.mxu0
      %v1208 = vadd.f32 %v983, %v1207
      %v1209 = vpop.f32.mrf.mxu0
      %1210 = vmatprep.mubr.bf16.mxu0 0
      %1211 = vmatmul.mubr.bf16.gmra.mxu0 %v607
      %v1212 = vpop.f32.mrf.mxu0
      %v1213 = vadd.f32 %v988, %v1212
      %v1214 = vpop.f32.mrf.mxu0
      %v1215 = vpop.f32.mrf.mxu0
      %v1216 = vadd.f32 %v991, %v1215
      %v1217 = vpop.f32.mrf.mxu0
      %1218 = vmatprep.mubr.bf16.mxu0 0
      %1219 = vmatmul.mubr.bf16.gmra.mxu0 %v610
      %v1220 = vpop.f32.mrf.mxu0
      %v1221 = vadd.f32 %v996, %v1220
      %v1222 = vpop.f32.mrf.mxu0
      %v1223 = vpop.f32.mrf.mxu0
      %v1224 = vadd.f32 %v999, %v1223
      %v1225 = vpop.f32.mrf.mxu0
      %1226 = vmatprep.mubr.bf16.mxu0 0
      %1227 = vmatmul.mubr.bf16.gmra.mxu0 %v613
      %v1228 = vpop.f32.mrf.mxu0
      %v1229 = vadd.f32 %v1004, %v1228
      %v1230 = vpop.f32.mrf.mxu0
      %v1231 = vpop.f32.mrf.mxu0
      %v1232 = vadd.f32 %v1007, %v1231
      %v1233 = vpop.f32.mrf.mxu0
      %1234 = vmatprep.mubr.bf16.mxu0 0
      %1235 = vmatmul.mubr.bf16.gmra.mxu0 %v616
      %v1236 = vpop.f32.mrf.mxu0
      %v1237 = vadd.f32 %v1012, %v1236
      %v1238 = vpop.f32.mrf.mxu0
      %v1239 = vpop.f32.mrf.mxu0
      %v1240 = vadd.f32 %v1015, %v1239
      %v1241 = vpop.f32.mrf.mxu0
      %1242 = vmatprep.mubr.bf16.mxu0 0
      %1243 = vmatmul.mubr.bf16.gmra.mxu0 %v619
      %v1244 = vpop.f32.mrf.mxu0
      %v1245 = vadd.f32 %v1020, %v1244
      %v1246 = vpop.f32.mrf.mxu0
      %v1247 = vpop.f32.mrf.mxu0
      %v1248 = vadd.f32 %v1023, %v1247
      %v1249 = vpop.f32.mrf.mxu0
      %1250 = vmatprep.mubr.bf16.mxu0 0
      %1251 = vmatmul.mubr.bf16.gmra.mxu0 %v622
      %v1252 = vpop.f32.mrf.mxu0
      %v1253 = vadd.f32 %v1028, %v1252
      %v1254 = vpop.f32.mrf.mxu0
      %v1255 = vpop.f32.mrf.mxu0
      %v1256 = vadd.f32 %v1031, %v1255
      %v1257 = vpop.f32.mrf.mxu0
      %1258 = vmatprep.mubr.bf16.mxu0 0
      %1259 = vmatmul.mubr.bf16.gmra.mxu0 %v625
      %v1260 = vpop.f32.mrf.mxu0
      %v1261 = vadd.f32 %v1036, %v1260
      %v1262 = vpop.f32.mrf.mxu0
      %v1263 = vpop.f32.mrf.mxu0
      %v1264 = vadd.f32 %v1039, %v1263
      %v1265 = vpop.f32.mrf.mxu0
      %1266 = vmatprep.mubr.bf16.mxu0 0
      %1267 = vmatmul.mubr.bf16.gmra.mxu0 %v628
      %v1268 = vpop.f32.mrf.mxu0
      %v1269 = vadd.f32 %v1044, %v1268
      %v1270 = vpop.f32.mrf.mxu0
      %v1271 = vpop.f32.mrf.mxu0
      %v1272 = vadd.f32 %v1047, %v1271
      %v1273 = vpop.f32.mrf.mxu0
      %1274 = vmatprep.mubr.bf16.mxu0 0
      %1275 = vmatmul.mubr.bf16.gmra.mxu0 %v631
      %v1276 = vpop.f32.mrf.mxu0
      %v1277 = vadd.f32 %v1052, %v1276
      %v1278 = vpop.f32.mrf.mxu0
      %v1279 = vpop.f32.mrf.mxu0
      %v1280 = vadd.f32 %v1055, %v1279
      %v1281 = vpop.f32.mrf.mxu0
      %1282 = vmatprep.mubr.bf16.mxu0 0
      %1283 = vmatmul.mubr.bf16.gmra.mxu0 %v634
      %v1284 = vpop.f32.mrf.mxu0
      %v1285 = vadd.f32 %v1060, %v1284
      %v1286 = vpop.f32.mrf.mxu0
      %v1287 = vpop.f32.mrf.mxu0
      %v1288 = vadd.f32 %v1063, %v1287
      %v1289 = vpop.f32.mrf.mxu0
      %1290 = vmatprep.mubr.bf16.mxu0 0
      %1291 = vmatmul.mubr.bf16.gmra.mxu0 %v637
      %v1292 = vpop.f32.mrf.mxu0
      %v1293 = vadd.f32 %v1068, %v1292
      %v1294 = vpop.f32.mrf.mxu0
      %v1295 = vpop.f32.mrf.mxu0
      %v1296 = vadd.f32 %v1071, %v1295
      %v1297 = vpop.f32.mrf.mxu0
      %1298 = vmatprep.mubr.bf16.mxu0 0
      %1299 = vmatmul.mubr.bf16.gmra.mxu0 %v640
      %v1300 = vpop.f32.mrf.mxu0
      %v1301 = vadd.f32 %v1076, %v1300
      %v1302 = vpop.f32.mrf.mxu0
      %v1303 = vpop.f32.mrf.mxu0
      %v1304 = vadd.f32 %v1079, %v1303
      %v1305 = vpop.f32.mrf.mxu0
      %1306 = vdwg.mxu0
      %v1307 = vmax.f32 %v1117, 0.0
      %v1308 = vmax.f32 %v1120, 0.0
      %v1309 = vmax.f32 %v1125, 0.0
      %v1310 = vmax.f32 %v1128, 0.0
      %v1311 = vmax.f32 %v1133, 0.0
      %v1312 = vmax.f32 %v1136, 0.0
      %v1313 = vmax.f32 %v1141, 0.0
      %v1314 = vmax.f32 %v1144, 0.0
      %v1315 = vmax.f32 %v1149, 0.0
      %v1316 = vmax.f32 %v1152, 0.0
      %v1317 = vmax.f32 %v1157, 0.0
      %v1318 = vmax.f32 %v1160, 0.0
      %v1319 = vmax.f32 %v1165, 0.0
      %v1320 = vmax.f32 %v1168, 0.0
      %v1321 = vmax.f32 %v1173, 0.0
      %v1322 = vmax.f32 %v1176, 0.0
      %v1323 = vmax.f32 %v1181, 0.0
      %v1324 = vmax.f32 %v1184, 0.0
      %v1325 = vmax.f32 %v1189, 0.0
      %v1326 = vmax.f32 %v1192, 0.0
      %v1327 = vmax.f32 %v1197, 0.0
      %v1328 = vmax.f32 %v1200, 0.0
      %v1329 = vmax.f32 %v1205, 0.0
      %v1330 = vmax.f32 %v1208, 0.0
      %v1331 = vmax.f32 %v1213, 0.0
      %v1332 = vmax.f32 %v1216, 0.0
      %v1333 = vmax.f32 %v1221, 0.0
      %v1334 = vmax.f32 %v1224, 0.0
      %v1335 = vmax.f32 %v1229, 0.0
      %v1336 = vmax.f32 %v1232, 0.0
      %v1337 = vmax.f32 %v1237, 0.0
      %v1338 = vmax.f32 %v1240, 0.0
      %v1339 = vmax.f32 %v1245, 0.0
      %v1340 = vmax.f32 %v1248, 0.0
      %v1341 = vmax.f32 %v1253, 0.0
      %v1342 = vmax.f32 %v1256, 0.0
      %v1343 = vmax.f32 %v1261, 0.0
      %v1344 = vmax.f32 %v1264, 0.0
      %v1345 = vmax.f32 %v1269, 0.0
      %v1346 = vmax.f32 %v1272, 0.0
      %v1347 = vmax.f32 %v1277, 0.0
      %v1348 = vmax.f32 %v1280, 0.0
      %v1349 = vmax.f32 %v1285, 0.0
      %v1350 = vmax.f32 %v1288, 0.0
      %v1351 = vmax.f32 %v1293, 0.0
      %v1352 = vmax.f32 %v1296, 0.0
      %v1353 = vmax.f32 %v1301, 0.0
      %v1354 = vmax.f32 %v1304, 0.0
      %v1355 = vpack.c.bf16 %v1308, %v1307
      %v1356 = vpack.c.bf16 %v1310, %v1309
      %v1357 = vpack.c.bf16 %v1312, %v1311
      %v1358 = vpack.c.bf16 %v1314, %v1313
      %v1359 = vpack.c.bf16 %v1316, %v1315
      %v1360 = vpack.c.bf16 %v1318, %v1317
      %v1361 = vpack.c.bf16 %v1320, %v1319
      %v1362 = vpack.c.bf16 %v1322, %v1321
      %v1363 = vpack.c.bf16 %v1324, %v1323
      %v1364 = vpack.c.bf16 %v1326, %v1325
      %v1365 = vpack.c.bf16 %v1328, %v1327
      %v1366 = vpack.c.bf16 %v1330, %v1329
      %v1367 = vpack.c.bf16 %v1332, %v1331
      %v1368 = vpack.c.bf16 %v1334, %v1333
      %v1369 = vpack.c.bf16 %v1336, %v1335
      %v1370 = vpack.c.bf16 %v1338, %v1337
      %v1371 = vpack.c.bf16 %v1340, %v1339
      %v1372 = vpack.c.bf16 %v1342, %v1341
      %v1373 = vpack.c.bf16 %v1344, %v1343
      %v1374 = vpack.c.bf16 %v1346, %v1345
      %v1375 = vpack.c.bf16 %v1348, %v1347
      %v1376 = vpack.c.bf16 %v1350, %v1349
      %v1377 = vpack.c.bf16 %v1352, %v1351
      %v1378 = vpack.c.bf16 %v1354, %v1353
      %v1403 = vunpack.c.l.b16 %v1355
      %v1404 = vunpack.c.h.b16 %v1355
      %v1405 = vunpack.c.l.b16 %v1356
      %v1406 = vunpack.c.h.b16 %v1356
      %v1407 = vunpack.c.l.b16 %v1357
      %v1408 = vunpack.c.h.b16 %v1357
      %v1409 = vunpack.c.l.b16 %v1358
      %v1410 = vunpack.c.h.b16 %v1358
      %v1411 = vunpack.c.l.b16 %v1359
      %v1412 = vunpack.c.h.b16 %v1359
      %v1413 = vunpack.c.l.b16 %v1360
      %v1414 = vunpack.c.h.b16 %v1360
      %v1415 = vunpack.c.l.b16 %v1361
      %v1416 = vunpack.c.h.b16 %v1361
      %v1417 = vunpack.c.l.b16 %v1362
      %v1418 = vunpack.c.h.b16 %v1362
      %v1419 = vunpack.c.l.b16 %v1363
      %v1420 = vunpack.c.h.b16 %v1363
      %v1421 = vunpack.c.l.b16 %v1364
      %v1422 = vunpack.c.h.b16 %v1364
      %v1423 = vunpack.c.l.b16 %v1365
      %v1424 = vunpack.c.h.b16 %v1365
      %v1425 = vunpack.c.l.b16 %v1366
      %v1426 = vunpack.c.h.b16 %v1366
      %v1427 = vunpack.c.l.b16 %v1367
      %v1428 = vunpack.c.h.b16 %v1367
      %v1429 = vunpack.c.l.b16 %v1368
      %v1430 = vunpack.c.h.b16 %v1368
      %v1431 = vunpack.c.l.b16 %v1369
      %v1432 = vunpack.c.h.b16 %v1369
      %v1433 = vunpack.c.l.b16 %v1370
      %v1434 = vunpack.c.h.b16 %v1370
      %v1435 = vunpack.c.l.b16 %v1371
      %v1436 = vunpack.c.h.b16 %v1371
      %v1437 = vunpack.c.l.b16 %v1372
      %v1438 = vunpack.c.h.b16 %v1372
      %v1439 = vunpack.c.l.b16 %v1373
      %v1440 = vunpack.c.h.b16 %v1373
      %v1441 = vunpack.c.l.b16 %v1374
      %v1442 = vunpack.c.h.b16 %v1374
      %v1443 = vunpack.c.l.b16 %v1375
      %v1444 = vunpack.c.h.b16 %v1375
      %v1445 = vunpack.c.l.b16 %v1376
      %v1446 = vunpack.c.h.b16 %v1376
      %v1447 = vunpack.c.l.b16 %v1377
      %v1448 = vunpack.c.h.b16 %v1377
      %v1449 = vunpack.c.l.b16 %v1378
      %v1450 = vunpack.c.h.b16 %v1378
      %v1451 = vpack.c.b16 %v1403, %v1403
      %v1452 = vpack.c.b16 %v1404, %v1404
      %v1453 = vpack.c.b16 %v1405, %v1405
      %v1454 = vpack.c.b16 %v1406, %v1406
      %v1455 = vpack.c.b16 %v1407, %v1407
      %v1456 = vpack.c.b16 %v1408, %v1408
      %v1457 = vpack.c.b16 %v1409, %v1409
      %v1458 = vpack.c.b16 %v1410, %v1410
      %v1459 = vpack.c.b16 %v1411, %v1411
      %v1460 = vpack.c.b16 %v1412, %v1412
      %v1461 = vpack.c.b16 %v1413, %v1413
      %v1462 = vpack.c.b16 %v1414, %v1414
      %v1463 = vpack.c.b16 %v1415, %v1415
      %v1464 = vpack.c.b16 %v1416, %v1416
      %v1465 = vpack.c.b16 %v1417, %v1417
      %v1466 = vpack.c.b16 %v1418, %v1418
      %v1467 = vpack.c.b16 %v1419, %v1419
      %v1468 = vpack.c.b16 %v1420, %v1420
      %v1469 = vpack.c.b16 %v1421, %v1421
      %v1470 = vpack.c.b16 %v1422, %v1422
      %v1471 = vpack.c.b16 %v1423, %v1423
      %v1472 = vpack.c.b16 %v1424, %v1424
      %v1473 = vpack.c.b16 %v1425, %v1425
      %v1474 = vpack.c.b16 %v1426, %v1426
      %v1475 = vpack.c.b16 %v1427, %v1427
      %v1476 = vpack.c.b16 %v1428, %v1428
      %v1477 = vpack.c.b16 %v1429, %v1429
      %v1478 = vpack.c.b16 %v1430, %v1430
      %v1479 = vpack.c.b16 %v1431, %v1431
      %v1480 = vpack.c.b16 %v1432, %v1432
      %v1481 = vpack.c.b16 %v1433, %v1433
      %v1482 = vpack.c.b16 %v1434, %v1434
      %v1483 = vpack.c.b16 %v1435, %v1435
      %v1484 = vpack.c.b16 %v1436, %v1436
      %v1485 = vpack.c.b16 %v1437, %v1437
      %v1486 = vpack.c.b16 %v1438, %v1438
      %v1487 = vpack.c.b16 %v1439, %v1439
      %v1488 = vpack.c.b16 %v1440, %v1440
      %v1489 = vpack.c.b16 %v1441, %v1441
      %v1490 = vpack.c.b16 %v1442, %v1442
      %v1491 = vpack.c.b16 %v1443, %v1443
      %v1492 = vpack.c.b16 %v1444, %v1444
      %v1493 = vpack.c.b16 %v1445, %v1445
      %v1494 = vpack.c.b16 %v1446, %v1446
      %v1495 = vpack.c.b16 %v1447, %v1447
      %v1496 = vpack.c.b16 %v1448, %v1448
      %v1497 = vpack.c.b16 %v1449, %v1449
      %v1498 = vpack.c.b16 %v1450, %v1450
      %1547 = vst [vmem:[%s175] sm:$0xf] %v1451
      %1548 = vst [vmem:[%s175 + $0x4] sm:$0xf] %v1452
      %1549 = vst [vmem:[%s175 + $0x8] sm:$0xf] %v1453
      %1550 = vst [vmem:[%s175 + $0xc] sm:$0xf] %v1454
      %1551 = vst [vmem:[%s175 + $0x10] sm:$0xf] %v1455
      %1552 = vst [vmem:[%s175 + $0x14] sm:$0xf] %v1456
      %1553 = vst [vmem:[%s175 + $0x18] sm:$0xf] %v1457
      %1554 = vst [vmem:[%s175 + $0x1c] sm:$0xf] %v1458
      %1555 = vst [vmem:[%s175 + $0x20] sm:$0xf] %v1459
      %1556 = vst [vmem:[%s175 + $0x24] sm:$0xf] %v1460
      %1557 = vst [vmem:[%s175 + $0x28] sm:$0xf] %v1461
      %1558 = vst [vmem:[%s175 + $0x2c] sm:$0xf] %v1462
      %1559 = vst [vmem:[%s175 + $0x30] sm:$0xf] %v1463
      %1560 = vst [vmem:[%s175 + $0x34] sm:$0xf] %v1464
      %1561 = vst [vmem:[%s175 + $0x38] sm:$0xf] %v1465
      %1562 = vst [vmem:[%s175 + $0x3c] sm:$0xf] %v1466
      %1563 = vst [vmem:[%s175 + $0x40] sm:$0xf] %v1467
      %1564 = vst [vmem:[%s175 + $0x44] sm:$0xf] %v1468
      %1565 = vst [vmem:[%s175 + $0x48] sm:$0xf] %v1469
      %1566 = vst [vmem:[%s175 + $0x4c] sm:$0xf] %v1470
      %1567 = vst [vmem:[%s175 + $0x50] sm:$0xf] %v1471
      %1568 = vst [vmem:[%s175 + $0x54] sm:$0xf] %v1472
      %1569 = vst [vmem:[%s175 + $0x58] sm:$0xf] %v1473
      %1570 = vst [vmem:[%s175 + $0x5c] sm:$0xf] %v1474
      %1571 = vst [vmem:[%s175 + $0x60] sm:$0xf] %v1475
      %1572 = vst [vmem:[%s175 + $0x64] sm:$0xf] %v1476
      %1573 = vst [vmem:[%s175 + $0x68] sm:$0xf] %v1477
      %1574 = vst [vmem:[%s175 + $0x6c] sm:$0xf] %v1478
      %1575 = vst [vmem:[%s175 + $0x70] sm:$0xf] %v1479
      %1576 = vst [vmem:[%s175 + $0x74] sm:$0xf] %v1480
      %1577 = vst [vmem:[%s175 + $0x78] sm:$0xf] %v1481
      %1578 = vst [vmem:[%s175 + $0x7c] sm:$0xf] %v1482
      %1579 = vst [vmem:[%s175 + $0x80] sm:$0xf] %v1483
      %1580 = vst [vmem:[%s175 + $0x84] sm:$0xf] %v1484
      %1581 = vst [vmem:[%s175 + $0x88] sm:$0xf] %v1485
      %1582 = vst [vmem:[%s175 + $0x8c] sm:$0xf] %v1486
      %1583 = vst [vmem:[%s175 + $0x90] sm:$0xf] %v1487
      %1584 = vst [vmem:[%s175 + $0x94] sm:$0xf] %v1488
      %1585 = vst [vmem:[%s175 + $0x98] sm:$0xf] %v1489
      %1586 = vst [vmem:[%s175 + $0x9c] sm:$0xf] %v1490
      %1587 = vst [vmem:[%s175 + $0xa0] sm:$0xf] %v1491
      %1588 = vst [vmem:[%s175 + $0xa4] sm:$0xf] %v1492
      %1589 = vst [vmem:[%s175 + $0xa8] sm:$0xf] %v1493
      %1590 = vst [vmem:[%s175 + $0xac] sm:$0xf] %v1494
      %1591 = vst [vmem:[%s175 + $0xb0] sm:$0xf] %v1495
      %1592 = vst [vmem:[%s175 + $0xb4] sm:$0xf] %v1496
      %1593 = vst [vmem:[%s175 + $0xb8] sm:$0xf] %v1497
      %1594 = vst [vmem:[%s175 + $0xbc] sm:$0xf] %v1498
      %s1595 = smul.u32 48, %s14
      %p1596 = scmp.lt.s32.totalorder %s1595, 143
      %s1597 = scalar_select %p1596, %s1595, 143
      %s1598 = smul.addr %s1597, 4
      %s1599 = scalar_lea.vmem %s3, %s1598
      // Predicated region
      $region33: #{my_module3_forward.8} parent=31 // pred_check
        %p1600 = pneg %p100
      $region34: #{my_module3_forward.8} parent=31 // pred_check_branch
        %1602 = sbr.rel (%p1600) target = $region36
      $region35: #{my_module3_forward.8} parent=31 // pred_region
        %s1603 = smul.u32 48, %s14
      $region36: #{my_module3_forward.8} parent=31 // pred_fallthru
        _
    $region32: #{my_module3_forward.8} parent=5 // pred_fallthru
      _
    %p1604 = scmp.le.s32.totalorder 2, %s9
    // Predicated region
    $region37: #{my_module3_forward.8} parent=5 // pred_check
      %p1605 = pneg %p1604
    $region38: #{my_module3_forward.8} parent=5 // pred_check_branch
      %1607 = sbr.rel (%p1605) target = $region40
    $region39: #{my_module3_forward.8} parent=5 // pred_region
      %s1608 = ssub.s32 %s9, 2
      // Predicated region
      $region41: #{my_module3_forward.8} parent=39 // pred_check
        %p1609 = pneg %p106
      $region42: #{my_module3_forward.8} parent=39 // pred_check_branch
        %1611 = sbr.rel (%p1609) target = $region44
      $region43: #{my_module3_forward.8} parent=39 // pred_region
        %s1612 = smul.u32 48, %s15
        %p1613 = scmp.lt.s32.totalorder %s1612, 143
        %s1614 = scalar_select %p1613, %s1612, 143
        %s1615 = smul.addr %s1614, 4
        %s1616 = scalar_lea.vmem %s3, %s1615
      $region44: #{my_module3_forward.8} parent=39 // pred_fallthru
        _
    $region40: #{my_module3_forward.8} parent=5 // pred_fallthru
      _
  $region6: #{my_module3_forward.8} parent=0 // loop_footer
    %s13 = sadd.s32 1, %s9
  $region7: #{my_module3_forward.8} parent=0 // loop_footer_branch
    %8 = sbr.rel target = $region3
  $region8: #{my_module3_forward.8} parent=0 // loop_exit
    _

// kernel: my_module3_forward.9
$region0: #{my_module3_forward.9}
  #allocation0 [shape = 'u32[]', space=smem, size = 0x4, offset = 0x4, fixed_abs, tag = 'smem constant byte address 0x4 - core index']
  #allocation1 [shape = 'u32[144,128]{1,0:T(1,128)}', space=vmem, size = 0x12000, scoped, tag = 'internal scratch']
  %s0 = inlined_call_operand.vmem [shape: bf16[24,768], index: 0, kind: input, shape index: {}]
  %s1 = inlined_call_operand.vmem [shape: bf16[24,768], index: 1, kind: input, shape index: {}]
  %s2 = inlined_call_operand.vmem [shape: bf16[24,768], index: 2, kind: input, shape index: {}]
  %s3 = inlined_call_operand.vmem [shape: bf16[24,768], index: 3, kind: input, shape index: {}]
  %s4 = inlined_call_operand.vmem [shape: bf16[24,768], index: 4, kind: output, shape index: {}]
  %s5 = sld [smem:[#allocation0]]
  $region26: #{my_module3_forward.9} parent=0
    _
  %s7 = ssub.s32 1, %s5
  %s8 = scalar_select 0, %s7, %s5
  // Predicated region
  $region2: #{my_module3_forward.9} parent=0 // pred_check
    _
  $region3: #{my_module3_forward.9} parent=0 // pred_check_branch
    %10 = sbr.rel (0) target = $region5
  $region4: #{my_module3_forward.9} parent=0 // pred_region
    _
  $region5: #{my_module3_forward.9} parent=0 // pred_fallthru
    _
  // Predicated region
  $region6: #{my_module3_forward.9} parent=0 // pred_check
    _
  $region7: #{my_module3_forward.9} parent=0 // pred_check_branch
    %12 = sbr.rel (0) target = $region9
  $region8: #{my_module3_forward.9} parent=0 // pred_region
    _
  $region9: #{my_module3_forward.9} parent=0 // pred_fallthru
    _
  // Predicated region
  $region10: #{my_module3_forward.9} parent=0 // pred_check
    _
  $region11: #{my_module3_forward.9} parent=0 // pred_check_branch
    %14 = sbr.rel (0) target = $region13
  $region12: #{my_module3_forward.9} parent=0 // pred_region
    _
  $region13: #{my_module3_forward.9} parent=0 // pred_fallthru
    _
  // Predicated region
  $region14: #{my_module3_forward.9} parent=0 // pred_check
    _
  $region15: #{my_module3_forward.9} parent=0 // pred_check_branch
    %16 = sbr.rel (0) target = $region17
  $region16: #{my_module3_forward.9} parent=0 // pred_region
    _
  $region17: #{my_module3_forward.9} parent=0 // pred_fallthru
    _
  %v17 = vld [vmem:[%s0] sm:$0xff]
  %v18 = vld [vmem:[%s0 + $0x8] sm:$0xff]
  %v19 = vld [vmem:[%s0 + $0x10] sm:$0xff]
  %v20 = vld [vmem:[%s0 + $0x18] sm:$0xff]
  %v21 = vld [vmem:[%s0 + $0x20] sm:$0xff]
  %v22 = vld [vmem:[%s0 + $0x28] sm:$0xff]
  %v23 = vld [vmem:[%s0 + $0x30] sm:$0xff]
  %v24 = vld [vmem:[%s0 + $0x38] sm:$0xff]
  %v25 = vld [vmem:[%s0 + $0x40] sm:$0xff]
  %v26 = vld [vmem:[%s1] sm:$0xff]
  %v27 = vld [vmem:[%s1 + $0x8] sm:$0xff]
  %v28 = vld [vmem:[%s1 + $0x10] sm:$0xff]
  %v29 = vld [vmem:[%s1 + $0x18] sm:$0xff]
  %v30 = vld [vmem:[%s1 + $0x20] sm:$0xff]
  %v31 = vld [vmem:[%s1 + $0x28] sm:$0xff]
  %v32 = vld [vmem:[%s1 + $0x30] sm:$0xff]
  %v33 = vld [vmem:[%s1 + $0x38] sm:$0xff]
  %v34 = vld [vmem:[%s1 + $0x40] sm:$0xff]
  %v35 = vmax.bf16 %v17, %v26
  %v36 = vmax.bf16 %v18, %v27
  %v37 = vmax.bf16 %v19, %v28
  %v38 = vmax.bf16 %v20, %v29
  %v39 = vmax.bf16 %v21, %v30
  %v40 = vmax.bf16 %v22, %v31
  %v41 = vmax.bf16 %v23, %v32
  %v42 = vmax.bf16 %v24, %v33
  %v43 = vmax.bf16 %v25, %v34
  %v44 = vld [vmem:[%s2] sm:$0xff]
  %v45 = vld [vmem:[%s2 + $0x8] sm:$0xff]
  %v46 = vld [vmem:[%s2 + $0x10] sm:$0xff]
  %v47 = vld [vmem:[%s2 + $0x18] sm:$0xff]
  %v48 = vld [vmem:[%s2 + $0x20] sm:$0xff]
  %v49 = vld [vmem:[%s2 + $0x28] sm:$0xff]
  %v50 = vld [vmem:[%s2 + $0x30] sm:$0xff]
  %v51 = vld [vmem:[%s2 + $0x38] sm:$0xff]
  %v52 = vld [vmem:[%s2 + $0x40] sm:$0xff]
  %v53 = vld [vmem:[%s3] sm:$0xff]
  %v54 = vld [vmem:[%s3 + $0x8] sm:$0xff]
  %v55 = vld [vmem:[%s3 + $0x10] sm:$0xff]
  %v56 = vld [vmem:[%s3 + $0x18] sm:$0xff]
  %v57 = vld [vmem:[%s3 + $0x20] sm:$0xff]
  %v58 = vld [vmem:[%s3 + $0x28] sm:$0xff]
  %v59 = vld [vmem:[%s3 + $0x30] sm:$0xff]
  %v60 = vld [vmem:[%s3 + $0x38] sm:$0xff]
  %v61 = vld [vmem:[%s3 + $0x40] sm:$0xff]
  %v62 = vmax.bf16 %v44, %v53
  %v63 = vmax.bf16 %v45, %v54
  %v64 = vmax.bf16 %v46, %v55
  %v65 = vmax.bf16 %v47, %v56
  %v66 = vmax.bf16 %v48, %v57
  %v67 = vmax.bf16 %v49, %v58
  %v68 = vmax.bf16 %v50, %v59
  %v69 = vmax.bf16 %v51, %v60
  %v70 = vmax.bf16 %v52, %v61
  %v71 = vmax.bf16 %v35, %v62
  %v72 = vmax.bf16 %v36, %v63
  %v73 = vmax.bf16 %v37, %v64
  %v74 = vmax.bf16 %v38, %v65
  %v75 = vmax.bf16 %v39, %v66
  %v76 = vmax.bf16 %v40, %v67
  %v77 = vmax.bf16 %v41, %v68
  %v78 = vmax.bf16 %v42, %v69
  %v79 = vmax.bf16 %v43, %v70
  %80 = vst [vmem:[%s4] sm:$0xff] %v71
  %81 = vst [vmem:[%s4 + $0x8] sm:$0xff] %v72
  %82 = vst [vmem:[%s4 + $0x10] sm:$0xff] %v73
  %83 = vst [vmem:[%s4 + $0x18] sm:$0xff] %v74
  %84 = vst [vmem:[%s4 + $0x20] sm:$0xff] %v75
  %85 = vst [vmem:[%s4 + $0x28] sm:$0xff] %v76
  %86 = vst [vmem:[%s4 + $0x30] sm:$0xff] %v77
  %87 = vst [vmem:[%s4 + $0x38] sm:$0xff] %v78
  %88 = vst [vmem:[%s4 + $0x40] sm:$0xff] %v79
  // Predicated region
  $region18: #{my_module3_forward.9} parent=0 // pred_check
    _
  $region19: #{my_module3_forward.9} parent=0 // pred_check_branch
    %90 = sbr.rel (0) target = $region21
  $region20: #{my_module3_forward.9} parent=0 // pred_region
    _
  $region21: #{my_module3_forward.9} parent=0 // pred_fallthru
    _
  // Predicated region
  $region22: #{my_module3_forward.9} parent=0 // pred_check
    _
  $region23: #{my_module3_forward.9} parent=0 // pred_check_branch
    %92 = sbr.rel (0) target = $region25
  $region24: #{my_module3_forward.9} parent=0 // pred_region
    _
  $region25: #{my_module3_forward.9} parent=0 // pred_fallthru
    _

// kernel: my_module3_forward.10
$region0: #{my_module3_forward.10}
  #allocation0 [shape = 'u32[]', space=smem, size = 0x4, offset = 0x4, fixed_abs, tag = 'smem constant byte address 0x4 - core index']
  #allocation1 [shape = 'u32[144,128]{1,0:T(1,128)}', space=vmem, size = 0x12000, scoped, tag = 'internal scratch']
  %s0 = inlined_call_operand.vmem [shape: bf16[224,640], index: 0, kind: input, shape index: {}]
  %s1 = inlined_call_operand.vmem [shape: bf16[640,128], index: 1, kind: input, shape index: {}]
  %s2 = inlined_call_operand.vmem [shape: f32[1,128], index: 2, kind: input, shape index: {}]
  %s3 = inlined_call_operand.vmem [shape: bf16[224,128], index: 3, kind: output, shape index: {}]
  %s4 = sld [smem:[#allocation0]]
  $region45: #{my_module3_forward.10} parent=0
    _
  %s6 = ssub.s32 1, %s4
  %s7 = scalar_select 0, %s6, %s4
  loop: start=0, step=1, limit=4
  $region2: #{my_module3_forward.10} parent=0 // loop_pre_header
    _
  $region3: #{my_module3_forward.10} parent=0 // loop_header
    %s9 = sphi 0, %s13
    %p10 = scmp.ge.s32.totalorder %s9, 4
    %s19 = sphi 0, %s21
    %s22 = sphi 0, %s19
    %s23 = sphi 0, %s22
    %s39 = sphi 0, %s23
    %s43 = sphi 0, %s43
    %s45 = sphi 0, %s43
    %s46 = sphi 0, %s45
    %s60 = sphi 0, %s46
    %s64 = sphi 0, %s64
    %s66 = sphi 0, %s64
    %s67 = sphi 0, %s66
    %s81 = sphi 0, %s67
    %s87 = sphi 0, %s89
    %s90 = sphi 0, %s87
    %s91 = sphi 0, %s90
    %s107 = sphi 0, %s91
  $region4: #{my_module3_forward.10} parent=0 // loop_header_branch
    %12 = sbr.rel (%p10) target = $region8
  $region5: #{my_module3_forward.10} parent=0 // loop_body
    %s14 = ssub.s32 %s9, 1
    %s15 = ssub.s32 %s9, 2
    %s16 = sadd.s32 %s9, 1
    %s17 = ssub.s32 %s9, %s16
    %p18 = scmp.eq.s32.totalorder %s17, 0
    %s20 = sadd.s32 %s19, 1
    %s21 = scalar_select %p18, %s19, %s20
    %p24 = pneg %p18
    %p25 = scmp.eq.s32.totalorder %s9, 1
    %p26 = por %p24, %p25
    %p27 = scmp.ne.s32.totalorder %s19, %s22
    %p28 = scmp.eq.s32.totalorder %s9, 0
    %p29 = por %p27, %p28
    %p30 = scmp.ne.s32.totalorder %s19, %s22
    %p31 = scmp.eq.s32.totalorder %s14, 1
    %p32 = por %p30, %p31
    %p33 = scmp.ne.s32.totalorder %s22, %s23
    %p34 = scmp.eq.s32.totalorder %s14, 0
    %p35 = por %p33, %p34
    %p36 = scmp.ne.s32.totalorder %s22, %s23
    %p37 = scmp.eq.s32.totalorder %s15, 1
    %p38 = por %p36, %p37
    %p40 = scmp.ne.s32.totalorder %s23, %s39
    %p41 = scmp.eq.s32.totalorder %s15, 0
    %p42 = por %p40, %p41
    %s44 = sadd.s32 %s43, 1
    %p47 = scmp.eq.s32.totalorder %s9, 1
    %p48 = scmp.ne.s32.totalorder %s43, %s45
    %p49 = scmp.eq.s32.totalorder %s9, 0
    %p50 = por %p48, %p49
    %p51 = scmp.ne.s32.totalorder %s43, %s45
    %p52 = scmp.eq.s32.totalorder %s14, 1
    %p53 = por %p51, %p52
    %p54 = scmp.ne.s32.totalorder %s45, %s46
    %p55 = scmp.eq.s32.totalorder %s14, 0
    %p56 = por %p54, %p55
    %p57 = scmp.ne.s32.totalorder %s45, %s46
    %p58 = scmp.eq.s32.totalorder %s15, 1
    %p59 = por %p57, %p58
    %p61 = scmp.ne.s32.totalorder %s46, %s60
    %p62 = scmp.eq.s32.totalorder %s15, 0
    %p63 = por %p61, %p62
    %s65 = sadd.s32 %s64, 1
    %p68 = scmp.eq.s32.totalorder %s9, 1
    %p69 = scmp.ne.s32.totalorder %s64, %s66
    %p70 = scmp.eq.s32.totalorder %s9, 0
    %p71 = por %p69, %p70
    %p72 = scmp.ne.s32.totalorder %s64, %s66
    %p73 = scmp.eq.s32.totalorder %s14, 1
    %p74 = por %p72, %p73
    %p75 = scmp.ne.s32.totalorder %s66, %s67
    %p76 = scmp.eq.s32.totalorder %s14, 0
    %p77 = por %p75, %p76
    %p78 = scmp.ne.s32.totalorder %s66, %s67
    %p79 = scmp.eq.s32.totalorder %s15, 1
    %p80 = por %p78, %p79
    %p82 = scmp.ne.s32.totalorder %s67, %s81
    %p83 = scmp.eq.s32.totalorder %s15, 0
    %p84 = por %p82, %p83
    %s85 = ssub.s32 %s9, %s16
    %p86 = scmp.eq.s32.totalorder %s85, 0
    %s88 = sadd.s32 %s87, 1
    %s89 = scalar_select %p86, %s87, %s88
    %p92 = pneg %p86
    %p93 = scmp.eq.s32.totalorder %s9, 1
    %p94 = por %p92, %p93
    %p95 = scmp.ne.s32.totalorder %s87, %s90
    %p96 = scmp.eq.s32.totalorder %s9, 0
    %p97 = por %p95, %p96
    %p98 = scmp.ne.s32.totalorder %s87, %s90
    %p99 = scmp.eq.s32.totalorder %s14, 1
    %p100 = por %p98, %p99
    %p101 = scmp.ne.s32.totalorder %s90, %s91
    %p102 = scmp.eq.s32.totalorder %s14, 0
    %p103 = por %p101, %p102
    %p104 = scmp.ne.s32.totalorder %s90, %s91
    %p105 = scmp.eq.s32.totalorder %s15, 1
    %p106 = por %p104, %p105
    %p108 = scmp.ne.s32.totalorder %s91, %s107
    %p109 = scmp.eq.s32.totalorder %s15, 0
    %p110 = por %p108, %p109
    %p111 = scmp.le.s32.totalorder 1, %s9
    %p112 = scmp.lt.s32.totalorder %s9, 3
    %p113 = pnand %p111, %p112
    %p114 = pneg %p113
    // Predicated region
    $region9: #{my_module3_forward.10} parent=5 // pred_check
      _
    $region10: #{my_module3_forward.10} parent=5 // pred_check_branch
      %116 = sbr.rel (%p113) target = $region12
    $region11: #{my_module3_forward.10} parent=5 // pred_region
      %s117 = ssub.s32 %s9, 1
      // Predicated region
      $region13: #{my_module3_forward.10} parent=11 // pred_check
        %p118 = pneg %p56
      $region14: #{my_module3_forward.10} parent=11 // pred_check_branch
        %120 = sbr.rel (%p118) target = $region16
      $region15: #{my_module3_forward.10} parent=11 // pred_region
        _
      $region16: #{my_module3_forward.10} parent=11 // pred_fallthru
        _
      // Predicated region
      $region17: #{my_module3_forward.10} parent=11 // pred_check
        %p121 = pneg %p77
      $region18: #{my_module3_forward.10} parent=11 // pred_check_branch
        %123 = sbr.rel (%p121) target = $region20
      $region19: #{my_module3_forward.10} parent=11 // pred_region
        _
      $region20: #{my_module3_forward.10} parent=11 // pred_fallthru
        _
    $region12: #{my_module3_forward.10} parent=5 // pred_fallthru
      _
    %p124 = scmp.lt.s32.totalorder %s9, 2
    // Predicated region
    $region21: #{my_module3_forward.10} parent=5 // pred_check
      %p125 = pneg %p124
    $region22: #{my_module3_forward.10} parent=5 // pred_check_branch
      %127 = sbr.rel (%p125) target = $region24
    $region23: #{my_module3_forward.10} parent=5 // pred_region
      // Predicated region
      $region25: #{my_module3_forward.10} parent=23 // pred_check
        %p128 = pneg %p29
      $region26: #{my_module3_forward.10} parent=23 // pred_check_branch
        %130 = sbr.rel (%p128) target = $region28
      $region27: #{my_module3_forward.10} parent=23 // pred_region
        %s131 = smul.u32 14, %s9
        %p132 = scmp.lt.s32.totalorder %s131, 27
        %s133 = scalar_select %p132, %s131, 27
        %s134 = smul.addr %s133, 5
        %s135 = smul.addr %s134, 4
        %s136 = scalar_lea.vmem %s0, %s135
        %s137 = smul.u32 14, %s9
      $region28: #{my_module3_forward.10} parent=23 // pred_fallthru
        _
    $region24: #{my_module3_forward.10} parent=5 // pred_fallthru
      _
    %p138 = scmp.le.s32.totalorder 1, %s9
    %p139 = scmp.lt.s32.totalorder %s9, 3
    %p140 = pnand %p138, %p139
    %p141 = pneg %p140
    // Predicated region
    $region29: #{my_module3_forward.10} parent=5 // pred_check
      _
    $region30: #{my_module3_forward.10} parent=5 // pred_check_branch
      %143 = sbr.rel (%p140) target = $region32
    $region31: #{my_module3_forward.10} parent=5 // pred_region
      %s144 = ssub.s32 %s9, 1
      %s145 = smul.u32 14, %s14
      %p146 = scmp.lt.s32.totalorder %s145, 27
      %s147 = scalar_select %p146, %s145, 27
      %s148 = smul.addr %s147, 5
      %s149 = smul.addr %s148, 4
      %s150 = scalar_lea.vmem %s0, %s149
      %p151 = pneg %p35
      %p152 = pneg %p32
      %p153 = pneg %p56
      %p154 = pneg %p53
      %p155 = pneg %p77
      %p156 = pneg %p74
      %p157 = pneg %p103
      %p158 = pneg %p100
      %s159 = smul.u32 14, %s14
      %p160 = scmp.lt.s32.totalorder %s159, 27
      %s161 = scalar_select %p160, %s159, 27
      %s162 = smul.addr %s161, 4
      %s163 = scalar_lea.vmem %s3, %s162
      %s164 = smul.u32 14, %s14
      %p165 = scmp.lt.s32.totalorder %s164, 27
      %s166 = scalar_select %p165, %s164, 27
      %s167 = smul.addr %s166, 5
      %s168 = smul.addr %s167, 4
      %s169 = scalar_lea.vmem %s0, %s168
      %s170 = smul.u32 14, %s14
      %s171 = smul.u32 14, %s14
      %p172 = scmp.lt.s32.totalorder %s171, 27
      %s173 = scalar_select %p172, %s171, 27
      %s174 = smul.addr %s173, 4
      %s175 = scalar_lea.vmem %s3, %s174
      %s176 = smul.u32 14, %s14
      %v178 = vld [vmem:[%s169] sm:$0xff]
      %v179 = vld [vmem:[%s169 + $0x8] sm:$0xff]
      %v180 = vld [vmem:[%s169 + $0x10] sm:$0xf]
      %v181 = vld [vmem:[%s169 + $0x14] sm:$0xff]
      %v182 = vld [vmem:[%s169 + $0x1c] sm:$0xff]
      %v183 = vld [vmem:[%s169 + $0x24] sm:$0xf]
      %v184 = vld [vmem:[%s169 + $0x28] sm:$0xff]
      %v185 = vld [vmem:[%s169 + $0x30] sm:$0xff]
      %v186 = vld [vmem:[%s169 + $0x38] sm:$0xf]
      %v187 = vld [vmem:[%s169 + $0x3c] sm:$0xff]
      %v188 = vld [vmem:[%s169 + $0x44] sm:$0xff]
      %v189 = vld [vmem:[%s169 + $0x4c] sm:$0xf]
      %v190 = vld [vmem:[%s169 + $0x50] sm:$0xff]
      %v191 = vld [vmem:[%s169 + $0x58] sm:$0xff]
      %v192 = vld [vmem:[%s169 + $0x60] sm:$0xf]
      %v193 = vld [vmem:[%s169 + $0x64] sm:$0xff]
      %v194 = vld [vmem:[%s169 + $0x6c] sm:$0xff]
      %v195 = vld [vmem:[%s169 + $0x74] sm:$0xf]
      %v196 = vld [vmem:[%s169 + $0x78] sm:$0xff]
      %v197 = vld [vmem:[%s169 + $0x80] sm:$0xff]
      %v198 = vld [vmem:[%s169 + $0x88] sm:$0xf]
      %v199 = vld [vmem:[%s169 + $0x8c] sm:$0xff]
      %v200 = vld [vmem:[%s169 + $0x94] sm:$0xff]
      %v201 = vld [vmem:[%s169 + $0x9c] sm:$0xf]
      %v202 = vld [vmem:[%s169 + $0xa0] sm:$0xff]
      %v203 = vld [vmem:[%s169 + $0xa8] sm:$0xff]
      %v204 = vld [vmem:[%s169 + $0xb0] sm:$0xf]
      %v205 = vld [vmem:[%s169 + $0xb4] sm:$0xff]
      %v206 = vld [vmem:[%s169 + $0xbc] sm:$0xff]
      %v207 = vld [vmem:[%s169 + $0xc4] sm:$0xf]
      %v208 = vld [vmem:[%s169 + $0xc8] sm:$0xff]
      %v209 = vld [vmem:[%s169 + $0xd0] sm:$0xff]
      %v210 = vld [vmem:[%s169 + $0xd8] sm:$0xf]
      %v211 = vld [vmem:[%s169 + $0xdc] sm:$0xff]
      %v212 = vld [vmem:[%s169 + $0xe4] sm:$0xff]
      %v213 = vld [vmem:[%s169 + $0xec] sm:$0xf]
      %v214 = vld [vmem:[%s169 + $0xf0] sm:$0xff]
      %v215 = vld [vmem:[%s169 + $0xf8] sm:$0xff]
      %v216 = vld [vmem:[%s169 + $0x100] sm:$0xf]
      %v217 = vld [vmem:[%s169 + $0x104] sm:$0xff]
      %v218 = vld [vmem:[%s169 + $0x10c] sm:$0xff]
      %v219 = vld [vmem:[%s169 + $0x114] sm:$0xf]
      %v220 = vld [vmem:[%s1] sm:$0xf]
      %v221 = vld [vmem:[%s1 + $0x4] sm:$0xf]
      %v222 = vld [vmem:[%s1 + $0x8] sm:$0xf]
      %v223 = vld [vmem:[%s1 + $0xc] sm:$0xf]
      %v224 = vld [vmem:[%s1 + $0x10] sm:$0xf]
      %v225 = vld [vmem:[%s1 + $0x14] sm:$0xf]
      %v226 = vld [vmem:[%s1 + $0x18] sm:$0xf]
      %v227 = vld [vmem:[%s1 + $0x1c] sm:$0xf]
      %v228 = vld [vmem:[%s1 + $0x20] sm:$0xf]
      %v229 = vld [vmem:[%s1 + $0x24] sm:$0xf]
      %v230 = vld [vmem:[%s1 + $0x28] sm:$0xf]
      %v231 = vld [vmem:[%s1 + $0x2c] sm:$0xf]
      %v232 = vld [vmem:[%s1 + $0x30] sm:$0xf]
      %v233 = vld [vmem:[%s1 + $0x34] sm:$0xf]
      %v234 = vld [vmem:[%s1 + $0x38] sm:$0xf]
      %v235 = vld [vmem:[%s1 + $0x3c] sm:$0xf]
      %v236 = vld [vmem:[%s1 + $0x40] sm:$0xf]
      %v237 = vld [vmem:[%s1 + $0x44] sm:$0xf]
      %v238 = vld [vmem:[%s1 + $0x48] sm:$0xf]
      %v239 = vld [vmem:[%s1 + $0x4c] sm:$0xf]
      %v240 = vld [vmem:[%s1 + $0x50] sm:$0xf]
      %v241 = vld [vmem:[%s1 + $0x54] sm:$0xf]
      %v242 = vld [vmem:[%s1 + $0x58] sm:$0xf]
      %v243 = vld [vmem:[%s1 + $0x5c] sm:$0xf]
      %v244 = vld [vmem:[%s1 + $0x60] sm:$0xf]
      %v245 = vld [vmem:[%s1 + $0x64] sm:$0xf]
      %v246 = vld [vmem:[%s1 + $0x68] sm:$0xf]
      %v247 = vld [vmem:[%s1 + $0x6c] sm:$0xf]
      %v248 = vld [vmem:[%s1 + $0x70] sm:$0xf]
      %v249 = vld [vmem:[%s1 + $0x74] sm:$0xf]
      %v250 = vld [vmem:[%s1 + $0x78] sm:$0xf]
      %v251 = vld [vmem:[%s1 + $0x7c] sm:$0xf]
      %v252 = vld [vmem:[%s1 + $0x80] sm:$0xf]
      %v253 = vld [vmem:[%s1 + $0x84] sm:$0xf]
      %v254 = vld [vmem:[%s1 + $0x88] sm:$0xf]
      %v255 = vld [vmem:[%s1 + $0x8c] sm:$0xf]
      %v256 = vld [vmem:[%s1 + $0x90] sm:$0xf]
      %v257 = vld [vmem:[%s1 + $0x94] sm:$0xf]
      %v258 = vld [vmem:[%s1 + $0x98] sm:$0xf]
      %v259 = vld [vmem:[%s1 + $0x9c] sm:$0xf]
      %v260 = vld [vmem:[%s1 + $0xa0] sm:$0xf]
      %v261 = vld [vmem:[%s1 + $0xa4] sm:$0xf]
      %v262 = vld [vmem:[%s1 + $0xa8] sm:$0xf]
      %v263 = vld [vmem:[%s1 + $0xac] sm:$0xf]
      %v264 = vld [vmem:[%s1 + $0xb0] sm:$0xf]
      %v265 = vld [vmem:[%s1 + $0xb4] sm:$0xf]
      %v266 = vld [vmem:[%s1 + $0xb8] sm:$0xf]
      %v267 = vld [vmem:[%s1 + $0xbc] sm:$0xf]
      %v268 = vld [vmem:[%s1 + $0xc0] sm:$0xf]
      %v269 = vld [vmem:[%s1 + $0xc4] sm:$0xf]
      %v270 = vld [vmem:[%s1 + $0xc8] sm:$0xf]
      %v271 = vld [vmem:[%s1 + $0xcc] sm:$0xf]
      %v272 = vld [vmem:[%s1 + $0xd0] sm:$0xf]
      %v273 = vld [vmem:[%s1 + $0xd4] sm:$0xf]
      %v274 = vld [vmem:[%s1 + $0xd8] sm:$0xf]
      %v275 = vld [vmem:[%s1 + $0xdc] sm:$0xf]
      %v276 = vld [vmem:[%s1 + $0xe0] sm:$0xf]
      %v277 = vld [vmem:[%s1 + $0xe4] sm:$0xf]
      %v278 = vld [vmem:[%s1 + $0xe8] sm:$0xf]
      %v279 = vld [vmem:[%s1 + $0xec] sm:$0xf]
      %v280 = vld [vmem:[%s1 + $0xf0] sm:$0xf]
      %v281 = vld [vmem:[%s1 + $0xf4] sm:$0xf]
      %v282 = vld [vmem:[%s1 + $0xf8] sm:$0xf]
      %v283 = vld [vmem:[%s1 + $0xfc] sm:$0xf]
      %v284 = vld [vmem:[%s1 + $0x100] sm:$0xf]
      %v285 = vld [vmem:[%s1 + $0x104] sm:$0xf]
      %v286 = vld [vmem:[%s1 + $0x108] sm:$0xf]
      %v287 = vld [vmem:[%s1 + $0x10c] sm:$0xf]
      %v288 = vld [vmem:[%s1 + $0x110] sm:$0xf]
      %v289 = vld [vmem:[%s1 + $0x114] sm:$0xf]
      %v290 = vld [vmem:[%s1 + $0x118] sm:$0xf]
      %v291 = vld [vmem:[%s1 + $0x11c] sm:$0xf]
      %v292 = vld [vmem:[%s1 + $0x120] sm:$0xf]
      %v293 = vld [vmem:[%s1 + $0x124] sm:$0xf]
      %v294 = vld [vmem:[%s1 + $0x128] sm:$0xf]
      %v295 = vld [vmem:[%s1 + $0x12c] sm:$0xf]
      %v296 = vld [vmem:[%s1 + $0x130] sm:$0xf]
      %v297 = vld [vmem:[%s1 + $0x134] sm:$0xf]
      %v298 = vld [vmem:[%s1 + $0x138] sm:$0xf]
      %v299 = vld [vmem:[%s1 + $0x13c] sm:$0xf]
      %v300 = vld [vmem:[%s2] sm:$0x1]
      %v302 = vlaneseq
      %v303 = vshrl.u32 %v302, 7
      %v304 = vsub.s32 0, %v303
      %v305 = vrot.slane %v300, %v304
      %v349 = vunpack.c.l.b16 %v178
      %v350 = vunpack.c.h.b16 %v178
      %v351 = vunpack.c.l.b16 %v179
      %v352 = vunpack.c.h.b16 %v179
      %v353 = vunpack.c.l.b16 %v180
      %v354 = vunpack.c.l.b16 %v181
      %v355 = vunpack.c.h.b16 %v181
      %v356 = vunpack.c.l.b16 %v182
      %v357 = vunpack.c.h.b16 %v182
      %v358 = vunpack.c.l.b16 %v183
      %v359 = vunpack.c.l.b16 %v184
      %v360 = vunpack.c.h.b16 %v184
      %v361 = vunpack.c.l.b16 %v185
      %v362 = vunpack.c.h.b16 %v185
      %v363 = vunpack.c.l.b16 %v186
      %v364 = vunpack.c.l.b16 %v187
      %v365 = vunpack.c.h.b16 %v187
      %v366 = vunpack.c.l.b16 %v188
      %v367 = vunpack.c.h.b16 %v188
      %v368 = vunpack.c.l.b16 %v189
      %v369 = vunpack.c.l.b16 %v190
      %v370 = vunpack.c.h.b16 %v190
      %v371 = vunpack.c.l.b16 %v191
      %v372 = vunpack.c.h.b16 %v191
      %v373 = vunpack.c.l.b16 %v192
      %v374 = vunpack.c.l.b16 %v193
      %v375 = vunpack.c.h.b16 %v193
      %v376 = vunpack.c.l.b16 %v194
      %v377 = vunpack.c.h.b16 %v194
      %v378 = vunpack.c.l.b16 %v195
      %v379 = vunpack.c.l.b16 %v196
      %v380 = vunpack.c.h.b16 %v196
      %v381 = vunpack.c.l.b16 %v197
      %v382 = vunpack.c.h.b16 %v197
      %v383 = vunpack.c.l.b16 %v198
      %v384 = vunpack.c.l.b16 %v199
      %v385 = vunpack.c.h.b16 %v199
      %v386 = vunpack.c.l.b16 %v200
      %v387 = vunpack.c.h.b16 %v200
      %v388 = vunpack.c.l.b16 %v201
      %v389 = vunpack.c.l.b16 %v202
      %v390 = vunpack.c.h.b16 %v202
      %v391 = vunpack.c.l.b16 %v203
      %v392 = vunpack.c.h.b16 %v203
      %v393 = vunpack.c.l.b16 %v204
      %v394 = vunpack.c.l.b16 %v205
      %v395 = vunpack.c.h.b16 %v205
      %v396 = vunpack.c.l.b16 %v206
      %v397 = vunpack.c.h.b16 %v206
      %v398 = vunpack.c.l.b16 %v207
      %v399 = vunpack.c.l.b16 %v208
      %v400 = vunpack.c.h.b16 %v208
      %v401 = vunpack.c.l.b16 %v209
      %v402 = vunpack.c.h.b16 %v209
      %v403 = vunpack.c.l.b16 %v210
      %v404 = vunpack.c.l.b16 %v211
      %v405 = vunpack.c.h.b16 %v211
      %v406 = vunpack.c.l.b16 %v212
      %v407 = vunpack.c.h.b16 %v212
      %v408 = vunpack.c.l.b16 %v213
      %v409 = vunpack.c.l.b16 %v214
      %v410 = vunpack.c.h.b16 %v214
      %v411 = vunpack.c.l.b16 %v215
      %v412 = vunpack.c.h.b16 %v215
      %v413 = vunpack.c.l.b16 %v216
      %v414 = vunpack.c.l.b16 %v217
      %v415 = vunpack.c.h.b16 %v217
      %v416 = vunpack.c.l.b16 %v218
      %v417 = vunpack.c.h.b16 %v218
      %v418 = vunpack.c.l.b16 %v219
      %v419 = vpack.c.b16 %v354, %v349
      %v420 = vpack.c.b16 %v355, %v350
      %v421 = vpack.c.b16 %v356, %v351
      %v422 = vpack.c.b16 %v357, %v352
      %v423 = vpack.c.b16 %v358, %v353
      %v424 = vpack.c.b16 %v364, %v359
      %v425 = vpack.c.b16 %v365, %v360
      %v426 = vpack.c.b16 %v366, %v361
      %v427 = vpack.c.b16 %v367, %v362
      %v428 = vpack.c.b16 %v368, %v363
      %v429 = vpack.c.b16 %v374, %v369
      %v430 = vpack.c.b16 %v375, %v370
      %v431 = vpack.c.b16 %v376, %v371
      %v432 = vpack.c.b16 %v377, %v372
      %v433 = vpack.c.b16 %v378, %v373
      %v434 = vpack.c.b16 %v384, %v379
      %v435 = vpack.c.b16 %v385, %v380
      %v436 = vpack.c.b16 %v386, %v381
      %v437 = vpack.c.b16 %v387, %v382
      %v438 = vpack.c.b16 %v388, %v383
      %v439 = vpack.c.b16 %v394, %v389
      %v440 = vpack.c.b16 %v395, %v390
      %v441 = vpack.c.b16 %v396, %v391
      %v442 = vpack.c.b16 %v397, %v392
      %v443 = vpack.c.b16 %v398, %v393
      %v444 = vpack.c.b16 %v404, %v399
      %v445 = vpack.c.b16 %v405, %v400
      %v446 = vpack.c.b16 %v406, %v401
      %v447 = vpack.c.b16 %v407, %v402
      %v448 = vpack.c.b16 %v408, %v403
      %v449 = vpack.c.b16 %v414, %v409
      %v450 = vpack.c.b16 %v415, %v410
      %v451 = vpack.c.b16 %v416, %v411
      %v452 = vpack.c.b16 %v417, %v412
      %v453 = vpack.c.b16 %v418, %v413
      %v569 = vunpack.c.l.b16 %v220
      %v570 = vunpack.c.l.b16 %v221
      %v571 = vunpack.c.l.b16 %v222
      %v572 = vunpack.c.l.b16 %v223
      %v573 = vunpack.c.l.b16 %v224
      %v574 = vunpack.c.l.b16 %v225
      %v575 = vunpack.c.l.b16 %v226
      %v576 = vunpack.c.l.b16 %v227
      %v577 = vunpack.c.l.b16 %v228
      %v578 = vunpack.c.l.b16 %v229
      %v579 = vunpack.c.l.b16 %v230
      %v580 = vunpack.c.l.b16 %v231
      %v581 = vunpack.c.l.b16 %v232
      %v582 = vunpack.c.l.b16 %v233
      %v583 = vunpack.c.l.b16 %v234
      %v584 = vunpack.c.l.b16 %v235
      %v585 = vunpack.c.l.b16 %v236
      %v586 = vunpack.c.l.b16 %v237
      %v587 = vunpack.c.l.b16 %v238
      %v588 = vunpack.c.l.b16 %v239
      %v589 = vunpack.c.l.b16 %v240
      %v590 = vunpack.c.l.b16 %v241
      %v591 = vunpack.c.l.b16 %v242
      %v592 = vunpack.c.l.b16 %v243
      %v593 = vunpack.c.l.b16 %v244
      %v594 = vunpack.c.l.b16 %v245
      %v595 = vunpack.c.l.b16 %v246
      %v596 = vunpack.c.l.b16 %v247
      %v597 = vunpack.c.l.b16 %v248
      %v598 = vunpack.c.l.b16 %v249
      %v599 = vunpack.c.l.b16 %v250
      %v600 = vunpack.c.l.b16 %v251
      %v601 = vunpack.c.l.b16 %v252
      %v602 = vunpack.c.l.b16 %v253
      %v603 = vunpack.c.l.b16 %v254
      %v604 = vunpack.c.l.b16 %v255
      %v605 = vunpack.c.l.b16 %v256
      %v606 = vunpack.c.l.b16 %v257
      %v607 = vunpack.c.l.b16 %v258
      %v608 = vunpack.c.l.b16 %v259
      %v609 = vunpack.c.l.b16 %v260
      %v610 = vunpack.c.l.b16 %v261
      %v611 = vunpack.c.l.b16 %v262
      %v612 = vunpack.c.l.b16 %v263
      %v613 = vunpack.c.l.b16 %v264
      %v614 = vunpack.c.l.b16 %v265
      %v615 = vunpack.c.l.b16 %v266
      %v616 = vunpack.c.l.b16 %v267
      %v617 = vunpack.c.l.b16 %v268
      %v618 = vunpack.c.l.b16 %v269
      %v619 = vunpack.c.l.b16 %v270
      %v620 = vunpack.c.l.b16 %v271
      %v621 = vunpack.c.l.b16 %v272
      %v622 = vunpack.c.l.b16 %v273
      %v623 = vunpack.c.l.b16 %v274
      %v624 = vunpack.c.l.b16 %v275
      %v625 = vunpack.c.l.b16 %v276
      %v626 = vunpack.c.l.b16 %v277
      %v627 = vunpack.c.l.b16 %v278
      %v628 = vunpack.c.l.b16 %v279
      %v629 = vunpack.c.l.b16 %v280
      %v630 = vunpack.c.l.b16 %v281
      %v631 = vunpack.c.l.b16 %v282
      %v632 = vunpack.c.l.b16 %v283
      %v633 = vunpack.c.l.b16 %v284
      %v634 = vunpack.c.l.b16 %v285
      %v635 = vunpack.c.l.b16 %v286
      %v636 = vunpack.c.l.b16 %v287
      %v637 = vunpack.c.l.b16 %v288
      %v638 = vunpack.c.l.b16 %v289
      %v639 = vunpack.c.l.b16 %v290
      %v640 = vunpack.c.l.b16 %v291
      %v641 = vunpack.c.l.b16 %v292
      %v642 = vunpack.c.l.b16 %v293
      %v643 = vunpack.c.l.b16 %v294
      %v644 = vunpack.c.l.b16 %v295
      %v645 = vunpack.c.l.b16 %v296
      %v646 = vunpack.c.l.b16 %v297
      %v647 = vunpack.c.l.b16 %v298
      %v648 = vunpack.c.l.b16 %v299
      %v649 = vpack.c.b16 %v570, %v569
      %v650 = vpack.c.b16 %v572, %v571
      %v651 = vpack.c.b16 %v574, %v573
      %v652 = vpack.c.b16 %v576, %v575
      %v653 = vpack.c.b16 %v578, %v577
      %v654 = vpack.c.b16 %v580, %v579
      %v655 = vpack.c.b16 %v582, %v581
      %v656 = vpack.c.b16 %v584, %v583
      %v657 = vpack.c.b16 %v586, %v585
      %v658 = vpack.c.b16 %v588, %v587
      %v659 = vpack.c.b16 %v590, %v589
      %v660 = vpack.c.b16 %v592, %v591
      %v661 = vpack.c.b16 %v594, %v593
      %v662 = vpack.c.b16 %v596, %v595
      %v663 = vpack.c.b16 %v598, %v597
      %v664 = vpack.c.b16 %v600, %v599
      %v665 = vpack.c.b16 %v602, %v601
      %v666 = vpack.c.b16 %v604, %v603
      %v667 = vpack.c.b16 %v606, %v605
      %v668 = vpack.c.b16 %v608, %v607
      %v669 = vpack.c.b16 %v610, %v609
      %v670 = vpack.c.b16 %v612, %v611
      %v671 = vpack.c.b16 %v614, %v613
      %v672 = vpack.c.b16 %v616, %v615
      %v673 = vpack.c.b16 %v618, %v617
      %v674 = vpack.c.b16 %v620, %v619
      %v675 = vpack.c.b16 %v622, %v621
      %v676 = vpack.c.b16 %v624, %v623
      %v677 = vpack.c.b16 %v626, %v625
      %v678 = vpack.c.b16 %v628, %v627
      %v679 = vpack.c.b16 %v630, %v629
      %v680 = vpack.c.b16 %v632, %v631
      %v681 = vpack.c.b16 %v634, %v633
      %v682 = vpack.c.b16 %v636, %v635
      %v683 = vpack.c.b16 %v638, %v637
      %v684 = vpack.c.b16 %v640, %v639
      %v685 = vpack.c.b16 %v642, %v641
      %v686 = vpack.c.b16 %v644, %v643
      %v687 = vpack.c.b16 %v646, %v645
      %v688 = vpack.c.b16 %v648, %v647
      %729 = vmatprep.subr.bf16.mxu0 0
      %730 = vmatpush1.bf16.msra.mxu0 %v656
      %731 = vmatprep.subr.bf16.mxu0 0
      %732 = vmatpush1.bf16.msra.mxu0 %v655
      %733 = vmatprep.subr.bf16.mxu0 0
      %734 = vmatpush1.bf16.msra.mxu0 %v654
      %735 = vmatprep.subr.bf16.mxu0 0
      %736 = vmatpush1.bf16.msra.mxu0 %v653
      %737 = vmatprep.subr.bf16.mxu0 0
      %738 = vmatpush1.bf16.msra.mxu0 %v652
      %739 = vmatprep.subr.bf16.mxu0 0
      %740 = vmatpush1.bf16.msra.mxu0 %v651
      %741 = vmatprep.subr.bf16.mxu0 0
      %742 = vmatpush1.bf16.msra.mxu0 %v650
      %743 = vmatprep.subr.bf16.mxu0 0
      %744 = vmatpush1.bf16.msra.mxu0 %v649
      %745 = vmatprep.subr.bf16.mxu0 0
      %746 = vmatpush2.bf16.msra.mxu0 %v664
      %747 = vmatprep.subr.bf16.mxu0 0
      %748 = vmatpush2.bf16.msra.mxu0 %v663
      %749 = vmatprep.subr.bf16.mxu0 0
      %750 = vmatpush2.bf16.msra.mxu0 %v662
      %751 = vmatprep.subr.bf16.mxu0 0
      %752 = vmatpush2.bf16.msra.mxu0 %v661
      %753 = vmatprep.subr.bf16.mxu0 0
      %754 = vmatpush2.bf16.msra.mxu0 %v660
      %755 = vmatprep.subr.bf16.mxu0 0
      %756 = vmatpush2.bf16.msra.mxu0 %v659
      %757 = vmatprep.subr.bf16.mxu0 0
      %758 = vmatpush2.bf16.msra.mxu0 %v658
      %759 = vmatprep.subr.bf16.mxu0 0
      %760 = vmatpush2.bf16.msra.mxu0 %v657
      %761 = vmatprep.mubr.bf16.mxu0 %v420
      %762 = vmatmul.mubr.bf16.gmra.mxu0 %v419
      %v763 = vpop.f32.mrf.mxu0
      %v764 = vadd.f32 %v305, %v763
      %v765 = vpop.f32.mrf.mxu0
      %v766 = vpop.f32.mrf.mxu0
      %v767 = vadd.f32 %v305, %v766
      %v768 = vpop.f32.mrf.mxu0
      %769 = vmatprep.mubr.bf16.mxu0 %v425
      %770 = vmatmul.mubr.bf16.gmra.mxu0 %v424
      %v771 = vpop.f32.mrf.mxu0
      %v772 = vadd.f32 %v305, %v771
      %v773 = vpop.f32.mrf.mxu0
      %v774 = vpop.f32.mrf.mxu0
      %v775 = vadd.f32 %v305, %v774
      %v776 = vpop.f32.mrf.mxu0
      %777 = vmatprep.mubr.bf16.mxu0 %v430
      %778 = vmatmul.mubr.bf16.gmra.mxu0 %v429
      %v779 = vpop.f32.mrf.mxu0
      %v780 = vadd.f32 %v305, %v779
      %v781 = vpop.f32.mrf.mxu0
      %v782 = vpop.f32.mrf.mxu0
      %v783 = vadd.f32 %v305, %v782
      %v784 = vpop.f32.mrf.mxu0
      %785 = vmatprep.mubr.bf16.mxu0 %v435
      %786 = vmatmul.mubr.bf16.gmra.mxu0 %v434
      %v787 = vpop.f32.mrf.mxu0
      %v788 = vadd.f32 %v305, %v787
      %v789 = vpop.f32.mrf.mxu0
      %v790 = vpop.f32.mrf.mxu0
      %v791 = vadd.f32 %v305, %v790
      %v792 = vpop.f32.mrf.mxu0
      %793 = vmatprep.mubr.bf16.mxu0 %v440
      %794 = vmatmul.mubr.bf16.gmra.mxu0 %v439
      %v795 = vpop.f32.mrf.mxu0
      %v796 = vadd.f32 %v305, %v795
      %v797 = vpop.f32.mrf.mxu0
      %v798 = vpop.f32.mrf.mxu0
      %v799 = vadd.f32 %v305, %v798
      %v800 = vpop.f32.mrf.mxu0
      %801 = vmatprep.mubr.bf16.mxu0 %v445
      %802 = vmatmul.mubr.bf16.gmra.mxu0 %v444
      %v803 = vpop.f32.mrf.mxu0
      %v804 = vadd.f32 %v305, %v803
      %v805 = vpop.f32.mrf.mxu0
      %v806 = vpop.f32.mrf.mxu0
      %v807 = vadd.f32 %v305, %v806
      %v808 = vpop.f32.mrf.mxu0
      %809 = vmatprep.mubr.bf16.mxu0 %v450
      %810 = vmatmul.mubr.bf16.gmra.mxu0 %v449
      %v811 = vpop.f32.mrf.mxu0
      %v812 = vadd.f32 %v305, %v811
      %v813 = vpop.f32.mrf.mxu0
      %v814 = vpop.f32.mrf.mxu0
      %v815 = vadd.f32 %v305, %v814
      %v816 = vpop.f32.mrf.mxu0
      %817 = vdwg.mxu0
      %818 = vmatprep.subr.bf16.mxu0 0
      %819 = vmatpush1.bf16.msra.mxu0 %v672
      %820 = vmatprep.subr.bf16.mxu0 0
      %821 = vmatpush1.bf16.msra.mxu0 %v671
      %822 = vmatprep.subr.bf16.mxu0 0
      %823 = vmatpush1.bf16.msra.mxu0 %v670
      %824 = vmatprep.subr.bf16.mxu0 0
      %825 = vmatpush1.bf16.msra.mxu0 %v669
      %826 = vmatprep.subr.bf16.mxu0 0
      %827 = vmatpush1.bf16.msra.mxu0 %v668
      %828 = vmatprep.subr.bf16.mxu0 0
      %829 = vmatpush1.bf16.msra.mxu0 %v667
      %830 = vmatprep.subr.bf16.mxu0 0
      %831 = vmatpush1.bf16.msra.mxu0 %v666
      %832 = vmatprep.subr.bf16.mxu0 0
      %833 = vmatpush1.bf16.msra.mxu0 %v665
      %834 = vmatprep.subr.bf16.mxu0 0
      %835 = vmatpush2.bf16.msra.mxu0 %v680
      %836 = vmatprep.subr.bf16.mxu0 0
      %837 = vmatpush2.bf16.msra.mxu0 %v679
      %838 = vmatprep.subr.bf16.mxu0 0
      %839 = vmatpush2.bf16.msra.mxu0 %v678
      %840 = vmatprep.subr.bf16.mxu0 0
      %841 = vmatpush2.bf16.msra.mxu0 %v677
      %842 = vmatprep.subr.bf16.mxu0 0
      %843 = vmatpush2.bf16.msra.mxu0 %v676
      %844 = vmatprep.subr.bf16.mxu0 0
      %845 = vmatpush2.bf16.msra.mxu0 %v675
      %846 = vmatprep.subr.bf16.mxu0 0
      %847 = vmatpush2.bf16.msra.mxu0 %v674
      %848 = vmatprep.subr.bf16.mxu0 0
      %849 = vmatpush2.bf16.msra.mxu0 %v673
      %850 = vmatprep.mubr.bf16.mxu0 %v422
      %851 = vmatmul.mubr.bf16.gmra.mxu0 %v421
      %v852 = vpop.f32.mrf.mxu0
      %v853 = vadd.f32 %v764, %v852
      %v854 = vpop.f32.mrf.mxu0
      %v855 = vpop.f32.mrf.mxu0
      %v856 = vadd.f32 %v767, %v855
      %v857 = vpop.f32.mrf.mxu0
      %858 = vmatprep.mubr.bf16.mxu0 %v427
      %859 = vmatmul.mubr.bf16.gmra.mxu0 %v426
      %v860 = vpop.f32.mrf.mxu0
      %v861 = vadd.f32 %v772, %v860
      %v862 = vpop.f32.mrf.mxu0
      %v863 = vpop.f32.mrf.mxu0
      %v864 = vadd.f32 %v775, %v863
      %v865 = vpop.f32.mrf.mxu0
      %866 = vmatprep.mubr.bf16.mxu0 %v432
      %867 = vmatmul.mubr.bf16.gmra.mxu0 %v431
      %v868 = vpop.f32.mrf.mxu0
      %v869 = vadd.f32 %v780, %v868
      %v870 = vpop.f32.mrf.mxu0
      %v871 = vpop.f32.mrf.mxu0
      %v872 = vadd.f32 %v783, %v871
      %v873 = vpop.f32.mrf.mxu0
      %874 = vmatprep.mubr.bf16.mxu0 %v437
      %875 = vmatmul.mubr.bf16.gmra.mxu0 %v436
      %v876 = vpop.f32.mrf.mxu0
      %v877 = vadd.f32 %v788, %v876
      %v878 = vpop.f32.mrf.mxu0
      %v879 = vpop.f32.mrf.mxu0
      %v880 = vadd.f32 %v791, %v879
      %v881 = vpop.f32.mrf.mxu0
      %882 = vmatprep.mubr.bf16.mxu0 %v442
      %883 = vmatmul.mubr.bf16.gmra.mxu0 %v441
      %v884 = vpop.f32.mrf.mxu0
      %v885 = vadd.f32 %v796, %v884
      %v886 = vpop.f32.mrf.mxu0
      %v887 = vpop.f32.mrf.mxu0
      %v888 = vadd.f32 %v799, %v887
      %v889 = vpop.f32.mrf.mxu0
      %890 = vmatprep.mubr.bf16.mxu0 %v447
      %891 = vmatmul.mubr.bf16.gmra.mxu0 %v446
      %v892 = vpop.f32.mrf.mxu0
      %v893 = vadd.f32 %v804, %v892
      %v894 = vpop.f32.mrf.mxu0
      %v895 = vpop.f32.mrf.mxu0
      %v896 = vadd.f32 %v807, %v895
      %v897 = vpop.f32.mrf.mxu0
      %898 = vmatprep.mubr.bf16.mxu0 %v452
      %899 = vmatmul.mubr.bf16.gmra.mxu0 %v451
      %v900 = vpop.f32.mrf.mxu0
      %v901 = vadd.f32 %v812, %v900
      %v902 = vpop.f32.mrf.mxu0
      %v903 = vpop.f32.mrf.mxu0
      %v904 = vadd.f32 %v815, %v903
      %v905 = vpop.f32.mrf.mxu0
      %906 = vdwg.mxu0
      %907 = vmatprep.subr.bf16.mxu0 0
      %908 = vmatpush1.bf16.msra.mxu0 %v688
      %909 = vmatprep.subr.bf16.mxu0 0
      %910 = vmatpush1.bf16.msra.mxu0 %v687
      %911 = vmatprep.subr.bf16.mxu0 0
      %912 = vmatpush1.bf16.msra.mxu0 %v686
      %913 = vmatprep.subr.bf16.mxu0 0
      %914 = vmatpush1.bf16.msra.mxu0 %v685
      %915 = vmatprep.subr.bf16.mxu0 0
      %916 = vmatpush1.bf16.msra.mxu0 %v684
      %917 = vmatprep.subr.bf16.mxu0 0
      %918 = vmatpush1.bf16.msra.mxu0 %v683
      %919 = vmatprep.subr.bf16.mxu0 0
      %920 = vmatpush1.bf16.msra.mxu0 %v682
      %921 = vmatprep.subr.bf16.mxu0 0
      %922 = vmatpush1.bf16.msra.mxu0 %v681
      %923 = vmatprep.subr.bf16.mxu0 0
      %924 = vmatpush2.bf16.msra.mxu0 0
      %925 = vmatprep.subr.bf16.mxu0 0
      %926 = vmatpush2.bf16.msra.mxu0 0
      %927 = vmatprep.subr.bf16.mxu0 0
      %928 = vmatpush2.bf16.msra.mxu0 0
      %929 = vmatprep.subr.bf16.mxu0 0
      %930 = vmatpush2.bf16.msra.mxu0 0
      %931 = vmatprep.subr.bf16.mxu0 0
      %932 = vmatpush2.bf16.msra.mxu0 0
      %933 = vmatprep.subr.bf16.mxu0 0
      %934 = vmatpush2.bf16.msra.mxu0 0
      %935 = vmatprep.subr.bf16.mxu0 0
      %936 = vmatpush2.bf16.msra.mxu0 0
      %937 = vmatprep.subr.bf16.mxu0 0
      %938 = vmatpush2.bf16.msra.mxu0 0
      %939 = vmatprep.mubr.bf16.mxu0 0
      %940 = vmatmul.mubr.bf16.gmra.mxu0 %v423
      %v941 = vpop.f32.mrf.mxu0
      %v942 = vadd.f32 %v853, %v941
      %v943 = vpop.f32.mrf.mxu0
      %v944 = vpop.f32.mrf.mxu0
      %v945 = vadd.f32 %v856, %v944
      %v946 = vpop.f32.mrf.mxu0
      %947 = vmatprep.mubr.bf16.mxu0 0
      %948 = vmatmul.mubr.bf16.gmra.mxu0 %v428
      %v949 = vpop.f32.mrf.mxu0
      %v950 = vadd.f32 %v861, %v949
      %v951 = vpop.f32.mrf.mxu0
      %v952 = vpop.f32.mrf.mxu0
      %v953 = vadd.f32 %v864, %v952
      %v954 = vpop.f32.mrf.mxu0
      %955 = vmatprep.mubr.bf16.mxu0 0
      %956 = vmatmul.mubr.bf16.gmra.mxu0 %v433
      %v957 = vpop.f32.mrf.mxu0
      %v958 = vadd.f32 %v869, %v957
      %v959 = vpop.f32.mrf.mxu0
      %v960 = vpop.f32.mrf.mxu0
      %v961 = vadd.f32 %v872, %v960
      %v962 = vpop.f32.mrf.mxu0
      %963 = vmatprep.mubr.bf16.mxu0 0
      %964 = vmatmul.mubr.bf16.gmra.mxu0 %v438
      %v965 = vpop.f32.mrf.mxu0
      %v966 = vadd.f32 %v877, %v965
      %v967 = vpop.f32.mrf.mxu0
      %v968 = vpop.f32.mrf.mxu0
      %v969 = vadd.f32 %v880, %v968
      %v970 = vpop.f32.mrf.mxu0
      %971 = vmatprep.mubr.bf16.mxu0 0
      %972 = vmatmul.mubr.bf16.gmra.mxu0 %v443
      %v973 = vpop.f32.mrf.mxu0
      %v974 = vadd.f32 %v885, %v973
      %v975 = vpop.f32.mrf.mxu0
      %v976 = vpop.f32.mrf.mxu0
      %v977 = vadd.f32 %v888, %v976
      %v978 = vpop.f32.mrf.mxu0
      %979 = vmatprep.mubr.bf16.mxu0 0
      %980 = vmatmul.mubr.bf16.gmra.mxu0 %v448
      %v981 = vpop.f32.mrf.mxu0
      %v982 = vadd.f32 %v893, %v981
      %v983 = vpop.f32.mrf.mxu0
      %v984 = vpop.f32.mrf.mxu0
      %v985 = vadd.f32 %v896, %v984
      %v986 = vpop.f32.mrf.mxu0
      %987 = vmatprep.mubr.bf16.mxu0 0
      %988 = vmatmul.mubr.bf16.gmra.mxu0 %v453
      %v989 = vpop.f32.mrf.mxu0
      %v990 = vadd.f32 %v901, %v989
      %v991 = vpop.f32.mrf.mxu0
      %v992 = vpop.f32.mrf.mxu0
      %v993 = vadd.f32 %v904, %v992
      %v994 = vpop.f32.mrf.mxu0
      %995 = vdwg.mxu0
      %v996 = vmax.f32 %v942, 0.0
      %v997 = vmax.f32 %v945, 0.0
      %v998 = vmax.f32 %v950, 0.0
      %v999 = vmax.f32 %v953, 0.0
      %v1000 = vmax.f32 %v958, 0.0
      %v1001 = vmax.f32 %v961, 0.0
      %v1002 = vmax.f32 %v966, 0.0
      %v1003 = vmax.f32 %v969, 0.0
      %v1004 = vmax.f32 %v974, 0.0
      %v1005 = vmax.f32 %v977, 0.0
      %v1006 = vmax.f32 %v982, 0.0
      %v1007 = vmax.f32 %v985, 0.0
      %v1008 = vmax.f32 %v990, 0.0
      %v1009 = vmax.f32 %v993, 0.0
      %v1010 = vpack.c.bf16 %v997, %v996
      %v1011 = vpack.c.bf16 %v999, %v998
      %v1012 = vpack.c.bf16 %v1001, %v1000
      %v1013 = vpack.c.bf16 %v1003, %v1002
      %v1014 = vpack.c.bf16 %v1005, %v1004
      %v1015 = vpack.c.bf16 %v1007, %v1006
      %v1016 = vpack.c.bf16 %v1009, %v1008
      %v1024 = vunpack.c.l.b16 %v1010
      %v1025 = vunpack.c.h.b16 %v1010
      %v1026 = vunpack.c.l.b16 %v1011
      %v1027 = vunpack.c.h.b16 %v1011
      %v1028 = vunpack.c.l.b16 %v1012
      %v1029 = vunpack.c.h.b16 %v1012
      %v1030 = vunpack.c.l.b16 %v1013
      %v1031 = vunpack.c.h.b16 %v1013
      %v1032 = vunpack.c.l.b16 %v1014
      %v1033 = vunpack.c.h.b16 %v1014
      %v1034 = vunpack.c.l.b16 %v1015
      %v1035 = vunpack.c.h.b16 %v1015
      %v1036 = vunpack.c.l.b16 %v1016
      %v1037 = vunpack.c.h.b16 %v1016
      %v1038 = vpack.c.b16 %v1024, %v1024
      %v1039 = vpack.c.b16 %v1025, %v1025
      %v1040 = vpack.c.b16 %v1026, %v1026
      %v1041 = vpack.c.b16 %v1027, %v1027
      %v1042 = vpack.c.b16 %v1028, %v1028
      %v1043 = vpack.c.b16 %v1029, %v1029
      %v1044 = vpack.c.b16 %v1030, %v1030
      %v1045 = vpack.c.b16 %v1031, %v1031
      %v1046 = vpack.c.b16 %v1032, %v1032
      %v1047 = vpack.c.b16 %v1033, %v1033
      %v1048 = vpack.c.b16 %v1034, %v1034
      %v1049 = vpack.c.b16 %v1035, %v1035
      %v1050 = vpack.c.b16 %v1036, %v1036
      %v1051 = vpack.c.b16 %v1037, %v1037
      %1066 = vst [vmem:[%s175] sm:$0xf] %v1038
      %1067 = vst [vmem:[%s175 + $0x4] sm:$0xf] %v1039
      %1068 = vst [vmem:[%s175 + $0x8] sm:$0xf] %v1040
      %1069 = vst [vmem:[%s175 + $0xc] sm:$0xf] %v1041
      %1070 = vst [vmem:[%s175 + $0x10] sm:$0xf] %v1042
      %1071 = vst [vmem:[%s175 + $0x14] sm:$0xf] %v1043
      %1072 = vst [vmem:[%s175 + $0x18] sm:$0xf] %v1044
      %1073 = vst [vmem:[%s175 + $0x1c] sm:$0xf] %v1045
      %1074 = vst [vmem:[%s175 + $0x20] sm:$0xf] %v1046
      %1075 = vst [vmem:[%s175 + $0x24] sm:$0xf] %v1047
      %1076 = vst [vmem:[%s175 + $0x28] sm:$0xf] %v1048
      %1077 = vst [vmem:[%s175 + $0x2c] sm:$0xf] %v1049
      %1078 = vst [vmem:[%s175 + $0x30] sm:$0xf] %v1050
      %1079 = vst [vmem:[%s175 + $0x34] sm:$0xf] %v1051
      %s1080 = smul.u32 14, %s14
      %p1081 = scmp.lt.s32.totalorder %s1080, 27
      %s1082 = scalar_select %p1081, %s1080, 27
      %s1083 = smul.addr %s1082, 4
      %s1084 = scalar_lea.vmem %s3, %s1083
      // Predicated region
      $region33: #{my_module3_forward.10} parent=31 // pred_check
        %p1085 = pneg %p100
      $region34: #{my_module3_forward.10} parent=31 // pred_check_branch
        %1087 = sbr.rel (%p1085) target = $region36
      $region35: #{my_module3_forward.10} parent=31 // pred_region
        %s1088 = smul.u32 14, %s14
      $region36: #{my_module3_forward.10} parent=31 // pred_fallthru
        _
    $region32: #{my_module3_forward.10} parent=5 // pred_fallthru
      _
    %p1089 = scmp.le.s32.totalorder 2, %s9
    // Predicated region
    $region37: #{my_module3_forward.10} parent=5 // pred_check
      %p1090 = pneg %p1089
    $region38: #{my_module3_forward.10} parent=5 // pred_check_branch
      %1092 = sbr.rel (%p1090) target = $region40
    $region39: #{my_module3_forward.10} parent=5 // pred_region
      %s1093 = ssub.s32 %s9, 2
      // Predicated region
      $region41: #{my_module3_forward.10} parent=39 // pred_check
        %p1094 = pneg %p106
      $region42: #{my_module3_forward.10} parent=39 // pred_check_branch
        %1096 = sbr.rel (%p1094) target = $region44
      $region43: #{my_module3_forward.10} parent=39 // pred_region
        %s1097 = smul.u32 14, %s15
        %p1098 = scmp.lt.s32.totalorder %s1097, 27
        %s1099 = scalar_select %p1098, %s1097, 27
        %s1100 = smul.addr %s1099, 4
        %s1101 = scalar_lea.vmem %s3, %s1100
      $region44: #{my_module3_forward.10} parent=39 // pred_fallthru
        _
    $region40: #{my_module3_forward.10} parent=5 // pred_fallthru
      _
  $region6: #{my_module3_forward.10} parent=0 // loop_footer
    %s13 = sadd.s32 1, %s9
  $region7: #{my_module3_forward.10} parent=0 // loop_footer_branch
    %8 = sbr.rel target = $region3
  $region8: #{my_module3_forward.10} parent=0 // loop_exit
    _

// kernel: my_module3_forward.11
$region0: #{my_module3_forward.11}
  #allocation0 [shape = 'u32[]', space=smem, size = 0x4, offset = 0x4, fixed_abs, tag = 'smem constant byte address 0x4 - core index']
  #allocation1 [shape = 'u32[144,128]{1,0:T(1,128)}', space=vmem, size = 0x12000, scoped, tag = 'internal scratch']
  #allocation2 [shape = 'f32[16,512]{1,0:T(8,128)}', space=vmem, size = 0x8000, scoped, tag = 'scratch operand']
  %s0 = inlined_call_operand.vmem [shape: bf16[16,12800], index: 0, kind: input, shape index: {}]
  %s1 = inlined_call_operand.vmem [shape: bf16[12800,512], index: 1, kind: input, shape index: {}]
  %s2 = inlined_call_operand.vmem [shape: f32[1,512], index: 2, kind: input, shape index: {}]
  %s3 = inlined_call_operand.vmem [shape: bf16[512,128], index: 3, kind: input, shape index: {}]
  %s4 = inlined_call_operand.vmem [shape: f32[1,128], index: 4, kind: input, shape index: {}]
  %s5 = inlined_call_operand.vmem [shape: f32[16,128], index: 5, kind: output, shape index: {}]
  %s6 = sld [smem:[#allocation0]]
  $region87: #{my_module3_forward.11} parent=0
    _
  %s8 = ssub.s32 1, %s6
  %s9 = scalar_select 0, %s8, %s6
  $region1: #{my_module3_forward.11} parent=0
    #allocation3 [shape = 'u8[40960]{0}', space=vmem, size = 0xa000, scoped, tag = 'input window, operand 0']
    loop: start=0, step=1, limit=22
    $region2: #{my_module3_forward.11} parent=1 // loop_pre_header
      _
    $region3: #{my_module3_forward.11} parent=1 // loop_header
      %s11 = sphi 0, %s15
      %p12 = scmp.ge.s32.totalorder %s11, 22
      %s21 = sphi 0, %s23
      %s24 = sphi 0, %s21
      %s25 = sphi 0, %s24
      %s41 = sphi 0, %s25
      %s47 = sphi 0, %s49
      %s50 = sphi 0, %s47
      %s51 = sphi 0, %s50
      %s67 = sphi 0, %s51
      %s71 = sphi 0, %s71
      %s73 = sphi 0, %s71
      %s74 = sphi 0, %s73
      %s88 = sphi 0, %s74
      %s92 = sphi 0, %s92
      %s94 = sphi 0, %s92
      %s95 = sphi 0, %s94
      %s109 = sphi 0, %s95
      %s113 = sphi 0, %s113
      %s115 = sphi 0, %s113
      %s116 = sphi 0, %s115
      %s130 = sphi 0, %s116
      %s134 = sphi 0, %s134
      %s136 = sphi 0, %s134
      %s137 = sphi 0, %s136
      %s151 = sphi 0, %s137
    $region4: #{my_module3_forward.11} parent=1 // loop_header_branch
      %14 = sbr.rel (%p12) target = $region8
    $region5: #{my_module3_forward.11} parent=1 // loop_body
      %s16 = ssub.s32 %s11, 1
      %s17 = ssub.s32 %s11, 2
      %s18 = sadd.s32 %s11, 1
      %s19 = ssub.s32 %s11, %s18
      %p20 = scmp.eq.s32.totalorder %s19, 0
      %s22 = sadd.s32 %s21, 1
      %s23 = scalar_select %p20, %s21, %s22
      %p26 = pneg %p20
      %p27 = scmp.eq.s32.totalorder %s11, 19
      %p28 = por %p26, %p27
      %p29 = scmp.ne.s32.totalorder %s21, %s24
      %p30 = scmp.eq.s32.totalorder %s11, 0
      %p31 = por %p29, %p30
      %p32 = scmp.ne.s32.totalorder %s21, %s24
      %p33 = scmp.eq.s32.totalorder %s16, 19
      %p34 = por %p32, %p33
      %p35 = scmp.ne.s32.totalorder %s24, %s25
      %p36 = scmp.eq.s32.totalorder %s16, 0
      %p37 = por %p35, %p36
      %p38 = scmp.ne.s32.totalorder %s24, %s25
      %p39 = scmp.eq.s32.totalorder %s17, 19
      %p40 = por %p38, %p39
      %p42 = scmp.ne.s32.totalorder %s25, %s41
      %p43 = scmp.eq.s32.totalorder %s17, 0
      %p44 = por %p42, %p43
      %s45 = ssub.s32 %s11, %s18
      %p46 = scmp.eq.s32.totalorder %s45, 0
      %s48 = sadd.s32 %s47, 1
      %s49 = scalar_select %p46, %s47, %s48
      %p52 = pneg %p46
      %p53 = scmp.eq.s32.totalorder %s11, 19
      %p54 = por %p52, %p53
      %p55 = scmp.ne.s32.totalorder %s47, %s50
      %p56 = scmp.eq.s32.totalorder %s11, 0
      %p57 = por %p55, %p56
      %p58 = scmp.ne.s32.totalorder %s47, %s50
      %p59 = scmp.eq.s32.totalorder %s16, 19
      %p60 = por %p58, %p59
      %p61 = scmp.ne.s32.totalorder %s50, %s51
      %p62 = scmp.eq.s32.totalorder %s16, 0
      %p63 = por %p61, %p62
      %p64 = scmp.ne.s32.totalorder %s50, %s51
      %p65 = scmp.eq.s32.totalorder %s17, 19
      %p66 = por %p64, %p65
      %p68 = scmp.ne.s32.totalorder %s51, %s67
      %p69 = scmp.eq.s32.totalorder %s17, 0
      %p70 = por %p68, %p69
      %s72 = sadd.s32 %s71, 1
      %p75 = scmp.eq.s32.totalorder %s11, 19
      %p76 = scmp.ne.s32.totalorder %s71, %s73
      %p77 = scmp.eq.s32.totalorder %s11, 0
      %p78 = por %p76, %p77
      %p79 = scmp.ne.s32.totalorder %s71, %s73
      %p80 = scmp.eq.s32.totalorder %s16, 19
      %p81 = por %p79, %p80
      %p82 = scmp.ne.s32.totalorder %s73, %s74
      %p83 = scmp.eq.s32.totalorder %s16, 0
      %p84 = por %p82, %p83
      %p85 = scmp.ne.s32.totalorder %s73, %s74
      %p86 = scmp.eq.s32.totalorder %s17, 19
      %p87 = por %p85, %p86
      %p89 = scmp.ne.s32.totalorder %s74, %s88
      %p90 = scmp.eq.s32.totalorder %s17, 0
      %p91 = por %p89, %p90
      %s93 = sadd.s32 %s92, 1
      %p96 = scmp.eq.s32.totalorder %s11, 19
      %p97 = scmp.ne.s32.totalorder %s92, %s94
      %p98 = scmp.eq.s32.totalorder %s11, 0
      %p99 = por %p97, %p98
      %p100 = scmp.ne.s32.totalorder %s92, %s94
      %p101 = scmp.eq.s32.totalorder %s16, 19
      %p102 = por %p100, %p101
      %p103 = scmp.ne.s32.totalorder %s94, %s95
      %p104 = scmp.eq.s32.totalorder %s16, 0
      %p105 = por %p103, %p104
      %p106 = scmp.ne.s32.totalorder %s94, %s95
      %p107 = scmp.eq.s32.totalorder %s17, 19
      %p108 = por %p106, %p107
      %p110 = scmp.ne.s32.totalorder %s95, %s109
      %p111 = scmp.eq.s32.totalorder %s17, 0
      %p112 = por %p110, %p111
      %s114 = sadd.s32 %s113, 1
      %p117 = scmp.eq.s32.totalorder %s11, 19
      %p118 = scmp.ne.s32.totalorder %s113, %s115
      %p119 = scmp.eq.s32.totalorder %s11, 0
      %p120 = por %p118, %p119
      %p121 = scmp.ne.s32.totalorder %s113, %s115
      %p122 = scmp.eq.s32.totalorder %s16, 19
      %p123 = por %p121, %p122
      %p124 = scmp.ne.s32.totalorder %s115, %s116
      %p125 = scmp.eq.s32.totalorder %s16, 0
      %p126 = por %p124, %p125
      %p127 = scmp.ne.s32.totalorder %s115, %s116
      %p128 = scmp.eq.s32.totalorder %s17, 19
      %p129 = por %p127, %p128
      %p131 = scmp.ne.s32.totalorder %s116, %s130
      %p132 = scmp.eq.s32.totalorder %s17, 0
      %p133 = por %p131, %p132
      %s135 = sadd.s32 %s134, 1
      %p138 = scmp.eq.s32.totalorder %s11, 19
      %p139 = scmp.ne.s32.totalorder %s134, %s136
      %p140 = scmp.eq.s32.totalorder %s11, 0
      %p141 = por %p139, %p140
      %p142 = scmp.ne.s32.totalorder %s134, %s136
      %p143 = scmp.eq.s32.totalorder %s16, 19
      %p144 = por %p142, %p143
      %p145 = scmp.ne.s32.totalorder %s136, %s137
      %p146 = scmp.eq.s32.totalorder %s16, 0
      %p147 = por %p145, %p146
      %p148 = scmp.ne.s32.totalorder %s136, %s137
      %p149 = scmp.eq.s32.totalorder %s17, 19
      %p150 = por %p148, %p149
      %p152 = scmp.ne.s32.totalorder %s137, %s151
      %p153 = scmp.eq.s32.totalorder %s17, 0
      %p154 = por %p152, %p153
      %p155 = scmp.le.s32.totalorder 1, %s11
      %p156 = scmp.lt.s32.totalorder %s11, 21
      %p157 = pnand %p155, %p156
      %p158 = pneg %p157
      // Predicated region
      $region9: #{my_module3_forward.11} parent=5 // pred_check
        _
      $region10: #{my_module3_forward.11} parent=5 // pred_check_branch
        %160 = sbr.rel (%p157) target = $region12
      $region11: #{my_module3_forward.11} parent=5 // pred_region
        %s161 = ssub.s32 %s11, 1
        // Predicated region
        $region13: #{my_module3_forward.11} parent=11 // pred_check
          %p162 = pneg %p84
        $region14: #{my_module3_forward.11} parent=11 // pred_check_branch
          %164 = sbr.rel (%p162) target = $region16
        $region15: #{my_module3_forward.11} parent=11 // pred_region
          _
        $region16: #{my_module3_forward.11} parent=11 // pred_fallthru
          _
        // Predicated region
        $region17: #{my_module3_forward.11} parent=11 // pred_check
          %p165 = pneg %p105
        $region18: #{my_module3_forward.11} parent=11 // pred_check_branch
          %167 = sbr.rel (%p165) target = $region20
        $region19: #{my_module3_forward.11} parent=11 // pred_region
          _
        $region20: #{my_module3_forward.11} parent=11 // pred_fallthru
          _
        // Predicated region
        $region21: #{my_module3_forward.11} parent=11 // pred_check
          %p168 = pneg %p126
        $region22: #{my_module3_forward.11} parent=11 // pred_check_branch
          %170 = sbr.rel (%p168) target = $region24
        $region23: #{my_module3_forward.11} parent=11 // pred_region
          _
        $region24: #{my_module3_forward.11} parent=11 // pred_fallthru
          _
      $region12: #{my_module3_forward.11} parent=5 // pred_fallthru
        _
      %p171 = scmp.lt.s32.totalorder %s11, 20
      // Predicated region
      $region25: #{my_module3_forward.11} parent=5 // pred_check
        %p172 = pneg %p171
      $region26: #{my_module3_forward.11} parent=5 // pred_check_branch
        %174 = sbr.rel (%p172) target = $region28
      $region27: #{my_module3_forward.11} parent=5 // pred_region
        // Predicated region
        $region29: #{my_module3_forward.11} parent=27 // pred_check
          %p175 = pneg %p31
        $region30: #{my_module3_forward.11} parent=27 // pred_check_branch
          %177 = sbr.rel (%p175) target = $region32
        $region31: #{my_module3_forward.11} parent=27 // pred_region
          %s178 = sand.u32 %s21, 1
          %s179 = sand.u32 %s21, 1
          %s180 = smul.addr %s179, 40
          %s181 = scalar_lea.vmem [#allocation3], %s180
          %s182 = smul.u32 5, %s11
          %s183 = smul.addr %s182, 4
          %s184 = scalar_lea.vmem %s0, %s183
          // Predicated region
          $region33: #{my_module3_forward.11} parent=31 // pred_check
            _
          $region34: #{my_module3_forward.11} parent=31 // pred_check_branch
            %186 = sbr.rel (0) target = $region36
          $region35: #{my_module3_forward.11} parent=31 // pred_region
            // Predicated region
            $region37: #{my_module3_forward.11} parent=35 // pred_check
              _
            $region38: #{my_module3_forward.11} parent=35 // pred_check_branch
              %188 = sbr.rel (0) target = $region40
            $region39: #{my_module3_forward.11} parent=35 // pred_region
              %s189 = scalar_lea.vmem %s184, 16
              %s190 = scalar_lea.vmem %s181, 16 [#allocation3]
              loop: start=0, step=1, limit=1
              $region41: #{my_module3_forward.11} parent=39 // loop_pre_header
                _
              $region42: #{my_module3_forward.11} parent=39 // loop_header
                %s192 = sphi 0, %s196
                %p193 = scmp.ge.s32.totalorder %s192, 1
                %s197 = sphi %s184, %s184
                %s198 = sphi %s181, %s181
              $region43: #{my_module3_forward.11} parent=39 // loop_header_branch
                %195 = sbr.rel (%p193) target = $region47
              $region44: #{my_module3_forward.11} parent=39 // loop_body
                %v199 = vld [vmem:[%s197] sm:$0xff]
                %200 = vst [vmem:[%s198] sm:$0xff] %v199
                %v201 = vld [vmem:[%s197 + $0x8] sm:$0xff]
                %202 = vst [vmem:[%s198 + $0x8] sm:$0xff] %v201
                %v203 = vld [vmem:[%s197 + $0x190] sm:$0xff]
                %204 = vst [vmem:[%s198 + $0x14] sm:$0xff] %v203
                %v205 = vld [vmem:[%s197 + $0x198] sm:$0xff]
                %206 = vst [vmem:[%s198 + $0x1c] sm:$0xff] %v205
              $region45: #{my_module3_forward.11} parent=39 // loop_footer
                %s196 = sadd.s32 1, %s192
              $region46: #{my_module3_forward.11} parent=39 // loop_footer_branch
                %191 = sbr.rel target = $region42
              $region47: #{my_module3_forward.11} parent=39 // loop_exit
                _
              %s208 = ssub.s32 16, 1
              loop: start=0, step=1, limit=1
              $region48: #{my_module3_forward.11} parent=39 // loop_pre_header
                _
              $region49: #{my_module3_forward.11} parent=39 // loop_header
                %s210 = sphi 0, %s214
                %p211 = scmp.ge.s32.totalorder %s210, 1
                %s215 = sphi %s189, %s189
                %s216 = sphi %s190, %s190
              $region50: #{my_module3_forward.11} parent=39 // loop_header_branch
                %213 = sbr.rel (%p211) target = $region54
              $region51: #{my_module3_forward.11} parent=39 // loop_body
                %v217 = vld [vmem:[%s215] sm:%s208]
                %218 = vst [vmem:[%s216] sm:%s208] %v217
                %v219 = vld [vmem:[%s215 + $0x190] sm:%s208]
                %220 = vst [vmem:[%s216 + $0x14] sm:%s208] %v219
              $region52: #{my_module3_forward.11} parent=39 // loop_footer
                %s214 = sadd.s32 1, %s210
              $region53: #{my_module3_forward.11} parent=39 // loop_footer_branch
                %209 = sbr.rel target = $region49
              $region54: #{my_module3_forward.11} parent=39 // loop_exit
                _
            $region40: #{my_module3_forward.11} parent=35 // pred_fallthru
              _
          $region36: #{my_module3_forward.11} parent=31 // pred_fallthru
            _
          %221 = vnop
        $region32: #{my_module3_forward.11} parent=27 // pred_fallthru
          _
        // Predicated region
        $region55: #{my_module3_forward.11} parent=27 // pred_check
          %p222 = pneg %p57
        $region56: #{my_module3_forward.11} parent=27 // pred_check_branch
          %224 = sbr.rel (%p222) target = $region58
        $region57: #{my_module3_forward.11} parent=27 // pred_region
          %s225 = smul.u32 80, %s11
          %p226 = scmp.lt.s32.totalorder %s225, 1599
          %s227 = scalar_select %p226, %s225, 1599
          %s228 = smul.addr %s227, 4
          %s229 = smul.addr %s228, 4
          %s230 = scalar_lea.vmem %s1, %s229
          %s231 = smul.u32 80, %s11
        $region58: #{my_module3_forward.11} parent=27 // pred_fallthru
          _
      $region28: #{my_module3_forward.11} parent=5 // pred_fallthru
        _
      %p232 = scmp.le.s32.totalorder 1, %s11
      %p233 = scmp.lt.s32.totalorder %s11, 21
      %p234 = pnand %p232, %p233
      %p235 = pneg %p234
      // Predicated region
      $region59: #{my_module3_forward.11} parent=5 // pred_check
        _
      $region60: #{my_module3_forward.11} parent=5 // pred_check_branch
        %237 = sbr.rel (%p234) target = $region62
      $region61: #{my_module3_forward.11} parent=5 // pred_region
        %s238 = ssub.s32 %s11, 1
        %s239 = sand.u32 %s24, 1
        %s240 = sand.u32 %s24, 1
        %s241 = smul.addr %s240, 40
        %s242 = scalar_lea.vmem [#allocation3], %s241
        // Predicated region
        $region63: #{my_module3_forward.11} parent=61 // pred_check
          %p243 = pneg %p37
        $region64: #{my_module3_forward.11} parent=61 // pred_check_branch
          %245 = sbr.rel (%p243) target = $region66
        $region65: #{my_module3_forward.11} parent=61 // pred_region
          _
        $region66: #{my_module3_forward.11} parent=61 // pred_fallthru
          _
        %s246 = sand.u32 %s24, 1
        %s247 = sand.u32 %s24, 1
        %s248 = smul.addr %s247, 40
        %s249 = scalar_lea.vmem [#allocation3], %s248
        %p250 = pneg %p37
        %p251 = pneg %p34
        %s252 = smul.u32 80, %s16
        %p253 = scmp.lt.s32.totalorder %s252, 1599
        %s254 = scalar_select %p253, %s252, 1599
        %s255 = smul.addr %s254, 4
        %s256 = smul.addr %s255, 4
        %s257 = scalar_lea.vmem %s1, %s256
        %p258 = pneg %p63
        %p259 = pneg %p60
        %p260 = pneg %p84
        %p261 = pneg %p81
        %p262 = pneg %p105
        %p263 = pneg %p102
        %p264 = pneg %p126
        %p265 = pneg %p123
        %p266 = pneg %p147
        %p267 = pneg %p144
        %s268 = smul.u32 5, %s16
        %s269 = smul.u32 80, %s16
        %p270 = scmp.lt.s32.totalorder %s269, 1599
        %s271 = scalar_select %p270, %s269, 1599
        %s272 = smul.addr %s271, 4
        %s273 = smul.addr %s272, 4
        %s274 = scalar_lea.vmem %s1, %s273
        %s275 = smul.u32 80, %s16
        %p277 = scmp.eq.s32.totalorder %s16, 0
        // Predicated region
        $region67: #{my_module3_forward.11} parent=61 // pred_check
          %p278 = pneg %p277
        $region68: #{my_module3_forward.11} parent=61 // pred_check_branch
          %280 = sbr.rel (%p278) target = $region70
        $region69: #{my_module3_forward.11} parent=61 // pred_region
          %281 = vst [vmem:[#allocation2] sm:$0xff] 0.0
          %282 = vst [vmem:[#allocation2 + $0x8] sm:$0xff] 0.0
          %283 = vst [vmem:[#allocation2 + $0x10] sm:$0xff] 0.0
          %284 = vst [vmem:[#allocation2 + $0x18] sm:$0xff] 0.0
          %285 = vst [vmem:[#allocation2 + $0x20] sm:$0xff] 0.0
          %286 = vst [vmem:[#allocation2 + $0x28] sm:$0xff] 0.0
          %287 = vst [vmem:[#allocation2 + $0x30] sm:$0xff] 0.0
          %288 = vst [vmem:[#allocation2 + $0x38] sm:$0xff] 0.0
        $region70: #{my_module3_forward.11} parent=61 // pred_fallthru
          _
        %v289 = vld [vmem:[#allocation2] sm:$0xff]
        %v290 = vld [vmem:[#allocation2 + $0x8] sm:$0xff]
        %v291 = vld [vmem:[#allocation2 + $0x10] sm:$0xff]
        %v292 = vld [vmem:[#allocation2 + $0x18] sm:$0xff]
        %v293 = vld [vmem:[#allocation2 + $0x20] sm:$0xff]
        %v294 = vld [vmem:[#allocation2 + $0x28] sm:$0xff]
        %v295 = vld [vmem:[#allocation2 + $0x30] sm:$0xff]
        %v296 = vld [vmem:[#allocation2 + $0x38] sm:$0xff]
        %v297 = vld [vmem:[%s242] sm:$0xff]
        %v298 = vld [vmem:[%s242 + $0x8] sm:$0xff]
        %v299 = vld [vmem:[%s242 + $0x10] sm:$0xf]
        %v300 = vld [vmem:[%s242 + $0x14] sm:$0xff]
        %v301 = vld [vmem:[%s242 + $0x1c] sm:$0xff]
        %v302 = vld [vmem:[%s242 + $0x24] sm:$0xf]
        %v303 = vld [vmem:[%s274] sm:$0xff]
        %v304 = vld [vmem:[%s274 + $0x8] sm:$0xff]
        %v305 = vld [vmem:[%s274 + $0x10] sm:$0xff]
        %v306 = vld [vmem:[%s274 + $0x18] sm:$0xff]
        %v307 = vld [vmem:[%s274 + $0x20] sm:$0xff]
        %v308 = vld [vmem:[%s274 + $0x28] sm:$0xff]
        %v309 = vld [vmem:[%s274 + $0x30] sm:$0xff]
        %v310 = vld [vmem:[%s274 + $0x38] sm:$0xff]
        %v311 = vld [vmem:[%s274 + $0x40] sm:$0xff]
        %v312 = vld [vmem:[%s274 + $0x48] sm:$0xff]
        %v313 = vld [vmem:[%s274 + $0x50] sm:$0xff]
        %v314 = vld [vmem:[%s274 + $0x58] sm:$0xff]
        %v315 = vld [vmem:[%s274 + $0x60] sm:$0xff]
        %v316 = vld [vmem:[%s274 + $0x68] sm:$0xff]
        %v317 = vld [vmem:[%s274 + $0x70] sm:$0xff]
        %v318 = vld [vmem:[%s274 + $0x78] sm:$0xff]
        %v319 = vld [vmem:[%s274 + $0x80] sm:$0xff]
        %v320 = vld [vmem:[%s274 + $0x88] sm:$0xff]
        %v321 = vld [vmem:[%s274 + $0x90] sm:$0xff]
        %v322 = vld [vmem:[%s274 + $0x98] sm:$0xff]
        %v323 = vld [vmem:[%s274 + $0xa0] sm:$0xff]
        %v324 = vld [vmem:[%s274 + $0xa8] sm:$0xff]
        %v325 = vld [vmem:[%s274 + $0xb0] sm:$0xff]
        %v326 = vld [vmem:[%s274 + $0xb8] sm:$0xff]
        %v327 = vld [vmem:[%s274 + $0xc0] sm:$0xff]
        %v328 = vld [vmem:[%s274 + $0xc8] sm:$0xff]
        %v329 = vld [vmem:[%s274 + $0xd0] sm:$0xff]
        %v330 = vld [vmem:[%s274 + $0xd8] sm:$0xff]
        %v331 = vld [vmem:[%s274 + $0xe0] sm:$0xff]
        %v332 = vld [vmem:[%s274 + $0xe8] sm:$0xff]
        %v333 = vld [vmem:[%s274 + $0xf0] sm:$0xff]
        %v334 = vld [vmem:[%s274 + $0xf8] sm:$0xff]
        %v335 = vld [vmem:[%s274 + $0x100] sm:$0xff]
        %v336 = vld [vmem:[%s274 + $0x108] sm:$0xff]
        %v337 = vld [vmem:[%s274 + $0x110] sm:$0xff]
        %v338 = vld [vmem:[%s274 + $0x118] sm:$0xff]
        %v339 = vld [vmem:[%s274 + $0x120] sm:$0xff]
        %v340 = vld [vmem:[%s274 + $0x128] sm:$0xff]
        %v341 = vld [vmem:[%s274 + $0x130] sm:$0xff]
        %v342 = vld [vmem:[%s274 + $0x138] sm:$0xff]
        %v343 = vld [vmem:[%s274 + $0x140] sm:$0xff]
        %v344 = vld [vmem:[%s274 + $0x148] sm:$0xff]
        %v345 = vld [vmem:[%s274 + $0x150] sm:$0xff]
        %v346 = vld [vmem:[%s274 + $0x158] sm:$0xff]
        %v347 = vld [vmem:[%s274 + $0x160] sm:$0xff]
        %v348 = vld [vmem:[%s274 + $0x168] sm:$0xff]
        %v349 = vld [vmem:[%s274 + $0x170] sm:$0xff]
        %v350 = vld [vmem:[%s274 + $0x178] sm:$0xff]
        %v351 = vld [vmem:[%s274 + $0x180] sm:$0xff]
        %v352 = vld [vmem:[%s274 + $0x188] sm:$0xff]
        %v353 = vld [vmem:[%s274 + $0x190] sm:$0xff]
        %v354 = vld [vmem:[%s274 + $0x198] sm:$0xff]
        %v355 = vld [vmem:[%s274 + $0x1a0] sm:$0xff]
        %v356 = vld [vmem:[%s274 + $0x1a8] sm:$0xff]
        %v357 = vld [vmem:[%s274 + $0x1b0] sm:$0xff]
        %v358 = vld [vmem:[%s274 + $0x1b8] sm:$0xff]
        %v359 = vld [vmem:[%s274 + $0x1c0] sm:$0xff]
        %v360 = vld [vmem:[%s274 + $0x1c8] sm:$0xff]
        %v361 = vld [vmem:[%s274 + $0x1d0] sm:$0xff]
        %v362 = vld [vmem:[%s274 + $0x1d8] sm:$0xff]
        %v363 = vld [vmem:[%s274 + $0x1e0] sm:$0xff]
        %v364 = vld [vmem:[%s274 + $0x1e8] sm:$0xff]
        %v365 = vld [vmem:[%s274 + $0x1f0] sm:$0xff]
        %v366 = vld [vmem:[%s274 + $0x1f8] sm:$0xff]
        %v367 = vld [vmem:[%s274 + $0x200] sm:$0xff]
        %v368 = vld [vmem:[%s274 + $0x208] sm:$0xff]
        %v369 = vld [vmem:[%s274 + $0x210] sm:$0xff]
        %v370 = vld [vmem:[%s274 + $0x218] sm:$0xff]
        %v371 = vld [vmem:[%s274 + $0x220] sm:$0xff]
        %v372 = vld [vmem:[%s274 + $0x228] sm:$0xff]
        %v373 = vld [vmem:[%s274 + $0x230] sm:$0xff]
        %v374 = vld [vmem:[%s274 + $0x238] sm:$0xff]
        %v375 = vld [vmem:[%s274 + $0x240] sm:$0xff]
        %v376 = vld [vmem:[%s274 + $0x248] sm:$0xff]
        %v377 = vld [vmem:[%s274 + $0x250] sm:$0xff]
        %v378 = vld [vmem:[%s274 + $0x258] sm:$0xff]
        %v379 = vld [vmem:[%s274 + $0x260] sm:$0xff]
        %v380 = vld [vmem:[%s274 + $0x268] sm:$0xff]
        %v381 = vld [vmem:[%s274 + $0x270] sm:$0xff]
        %v382 = vld [vmem:[%s274 + $0x278] sm:$0xff]
        %v383 = vld [vmem:[%s274 + $0x280] sm:$0xff]
        %v384 = vld [vmem:[%s274 + $0x288] sm:$0xff]
        %v385 = vld [vmem:[%s274 + $0x290] sm:$0xff]
        %v386 = vld [vmem:[%s274 + $0x298] sm:$0xff]
        %v387 = vld [vmem:[%s274 + $0x2a0] sm:$0xff]
        %v388 = vld [vmem:[%s274 + $0x2a8] sm:$0xff]
        %v389 = vld [vmem:[%s274 + $0x2b0] sm:$0xff]
        %v390 = vld [vmem:[%s274 + $0x2b8] sm:$0xff]
        %v391 = vld [vmem:[%s274 + $0x2c0] sm:$0xff]
        %v392 = vld [vmem:[%s274 + $0x2c8] sm:$0xff]
        %v393 = vld [vmem:[%s274 + $0x2d0] sm:$0xff]
        %v394 = vld [vmem:[%s274 + $0x2d8] sm:$0xff]
        %v395 = vld [vmem:[%s274 + $0x2e0] sm:$0xff]
        %v396 = vld [vmem:[%s274 + $0x2e8] sm:$0xff]
        %v397 = vld [vmem:[%s274 + $0x2f0] sm:$0xff]
        %v398 = vld [vmem:[%s274 + $0x2f8] sm:$0xff]
        %v399 = vld [vmem:[%s274 + $0x300] sm:$0xff]
        %v400 = vld [vmem:[%s274 + $0x308] sm:$0xff]
        %v401 = vld [vmem:[%s274 + $0x310] sm:$0xff]
        %v402 = vld [vmem:[%s274 + $0x318] sm:$0xff]
        %v403 = vld [vmem:[%s274 + $0x320] sm:$0xff]
        %v404 = vld [vmem:[%s274 + $0x328] sm:$0xff]
        %v405 = vld [vmem:[%s274 + $0x330] sm:$0xff]
        %v406 = vld [vmem:[%s274 + $0x338] sm:$0xff]
        %v407 = vld [vmem:[%s274 + $0x340] sm:$0xff]
        %v408 = vld [vmem:[%s274 + $0x348] sm:$0xff]
        %v409 = vld [vmem:[%s274 + $0x350] sm:$0xff]
        %v410 = vld [vmem:[%s274 + $0x358] sm:$0xff]
        %v411 = vld [vmem:[%s274 + $0x360] sm:$0xff]
        %v412 = vld [vmem:[%s274 + $0x368] sm:$0xff]
        %v413 = vld [vmem:[%s274 + $0x370] sm:$0xff]
        %v414 = vld [vmem:[%s274 + $0x378] sm:$0xff]
        %v415 = vld [vmem:[%s274 + $0x380] sm:$0xff]
        %v416 = vld [vmem:[%s274 + $0x388] sm:$0xff]
        %v417 = vld [vmem:[%s274 + $0x390] sm:$0xff]
        %v418 = vld [vmem:[%s274 + $0x398] sm:$0xff]
        %v419 = vld [vmem:[%s274 + $0x3a0] sm:$0xff]
        %v420 = vld [vmem:[%s274 + $0x3a8] sm:$0xff]
        %v421 = vld [vmem:[%s274 + $0x3b0] sm:$0xff]
        %v422 = vld [vmem:[%s274 + $0x3b8] sm:$0xff]
        %v423 = vld [vmem:[%s274 + $0x3c0] sm:$0xff]
        %v424 = vld [vmem:[%s274 + $0x3c8] sm:$0xff]
        %v425 = vld [vmem:[%s274 + $0x3d0] sm:$0xff]
        %v426 = vld [vmem:[%s274 + $0x3d8] sm:$0xff]
        %v427 = vld [vmem:[%s274 + $0x3e0] sm:$0xff]
        %v428 = vld [vmem:[%s274 + $0x3e8] sm:$0xff]
        %v429 = vld [vmem:[%s274 + $0x3f0] sm:$0xff]
        %v430 = vld [vmem:[%s274 + $0x3f8] sm:$0xff]
        %v431 = vld [vmem:[%s274 + $0x400] sm:$0xff]
        %v432 = vld [vmem:[%s274 + $0x408] sm:$0xff]
        %v433 = vld [vmem:[%s274 + $0x410] sm:$0xff]
        %v434 = vld [vmem:[%s274 + $0x418] sm:$0xff]
        %v435 = vld [vmem:[%s274 + $0x420] sm:$0xff]
        %v436 = vld [vmem:[%s274 + $0x428] sm:$0xff]
        %v437 = vld [vmem:[%s274 + $0x430] sm:$0xff]
        %v438 = vld [vmem:[%s274 + $0x438] sm:$0xff]
        %v439 = vld [vmem:[%s274 + $0x440] sm:$0xff]
        %v440 = vld [vmem:[%s274 + $0x448] sm:$0xff]
        %v441 = vld [vmem:[%s274 + $0x450] sm:$0xff]
        %v442 = vld [vmem:[%s274 + $0x458] sm:$0xff]
        %v443 = vld [vmem:[%s274 + $0x460] sm:$0xff]
        %v444 = vld [vmem:[%s274 + $0x468] sm:$0xff]
        %v445 = vld [vmem:[%s274 + $0x470] sm:$0xff]
        %v446 = vld [vmem:[%s274 + $0x478] sm:$0xff]
        %v447 = vld [vmem:[%s274 + $0x480] sm:$0xff]
        %v448 = vld [vmem:[%s274 + $0x488] sm:$0xff]
        %v449 = vld [vmem:[%s274 + $0x490] sm:$0xff]
        %v450 = vld [vmem:[%s274 + $0x498] sm:$0xff]
        %v451 = vld [vmem:[%s274 + $0x4a0] sm:$0xff]
        %v452 = vld [vmem:[%s274 + $0x4a8] sm:$0xff]
        %v453 = vld [vmem:[%s274 + $0x4b0] sm:$0xff]
        %v454 = vld [vmem:[%s274 + $0x4b8] sm:$0xff]
        %v455 = vld [vmem:[%s274 + $0x4c0] sm:$0xff]
        %v456 = vld [vmem:[%s274 + $0x4c8] sm:$0xff]
        %v457 = vld [vmem:[%s274 + $0x4d0] sm:$0xff]
        %v458 = vld [vmem:[%s274 + $0x4d8] sm:$0xff]
        %v459 = vld [vmem:[%s274 + $0x4e0] sm:$0xff]
        %v460 = vld [vmem:[%s274 + $0x4e8] sm:$0xff]
        %v461 = vld [vmem:[%s274 + $0x4f0] sm:$0xff]
        %v462 = vld [vmem:[%s274 + $0x4f8] sm:$0xff]
        %v469 = vunpack.c.l.b16 %v297
        %v470 = vunpack.c.h.b16 %v297
        %v471 = vunpack.c.l.b16 %v298
        %v472 = vunpack.c.h.b16 %v298
        %v473 = vunpack.c.l.b16 %v299
        %v474 = vunpack.c.l.b16 %v300
        %v475 = vunpack.c.h.b16 %v300
        %v476 = vunpack.c.l.b16 %v301
        %v477 = vunpack.c.h.b16 %v301
        %v478 = vunpack.c.l.b16 %v302
        %v479 = vpack.c.b16 %v474, %v469
        %v480 = vpack.c.b16 %v475, %v470
        %v481 = vpack.c.b16 %v476, %v471
        %v482 = vpack.c.b16 %v477, %v472
        %v483 = vpack.c.b16 %v478, %v473
        %v649 = vunpack.c.l.b16 %v303
        %v650 = vunpack.c.h.b16 %v303
        %v651 = vunpack.c.l.b16 %v304
        %v652 = vunpack.c.h.b16 %v304
        %v653 = vunpack.c.l.b16 %v305
        %v654 = vunpack.c.h.b16 %v305
        %v655 = vunpack.c.l.b16 %v306
        %v656 = vunpack.c.h.b16 %v306
        %v657 = vunpack.c.l.b16 %v307
        %v658 = vunpack.c.h.b16 %v307
        %v659 = vunpack.c.l.b16 %v308
        %v660 = vunpack.c.h.b16 %v308
        %v661 = vunpack.c.l.b16 %v309
        %v662 = vunpack.c.h.b16 %v309
        %v663 = vunpack.c.l.b16 %v310
        %v664 = vunpack.c.h.b16 %v310
        %v665 = vunpack.c.l.b16 %v311
        %v666 = vunpack.c.h.b16 %v311
        %v667 = vunpack.c.l.b16 %v312
        %v668 = vunpack.c.h.b16 %v312
        %v669 = vunpack.c.l.b16 %v313
        %v670 = vunpack.c.h.b16 %v313
        %v671 = vunpack.c.l.b16 %v314
        %v672 = vunpack.c.h.b16 %v314
        %v673 = vunpack.c.l.b16 %v315
        %v674 = vunpack.c.h.b16 %v315
        %v675 = vunpack.c.l.b16 %v316
        %v676 = vunpack.c.h.b16 %v316
        %v677 = vunpack.c.l.b16 %v317
        %v678 = vunpack.c.h.b16 %v317
        %v679 = vunpack.c.l.b16 %v318
        %v680 = vunpack.c.h.b16 %v318
        %v681 = vunpack.c.l.b16 %v319
        %v682 = vunpack.c.h.b16 %v319
        %v683 = vunpack.c.l.b16 %v320
        %v684 = vunpack.c.h.b16 %v320
        %v685 = vunpack.c.l.b16 %v321
        %v686 = vunpack.c.h.b16 %v321
        %v687 = vunpack.c.l.b16 %v322
        %v688 = vunpack.c.h.b16 %v322
        %v689 = vunpack.c.l.b16 %v323
        %v690 = vunpack.c.h.b16 %v323
        %v691 = vunpack.c.l.b16 %v324
        %v692 = vunpack.c.h.b16 %v324
        %v693 = vunpack.c.l.b16 %v325
        %v694 = vunpack.c.h.b16 %v325
        %v695 = vunpack.c.l.b16 %v326
        %v696 = vunpack.c.h.b16 %v326
        %v697 = vunpack.c.l.b16 %v327
        %v698 = vunpack.c.h.b16 %v327
        %v699 = vunpack.c.l.b16 %v328
        %v700 = vunpack.c.h.b16 %v328
        %v701 = vunpack.c.l.b16 %v329
        %v702 = vunpack.c.h.b16 %v329
        %v703 = vunpack.c.l.b16 %v330
        %v704 = vunpack.c.h.b16 %v330
        %v705 = vunpack.c.l.b16 %v331
        %v706 = vunpack.c.h.b16 %v331
        %v707 = vunpack.c.l.b16 %v332
        %v708 = vunpack.c.h.b16 %v332
        %v709 = vunpack.c.l.b16 %v333
        %v710 = vunpack.c.h.b16 %v333
        %v711 = vunpack.c.l.b16 %v334
        %v712 = vunpack.c.h.b16 %v334
        %v713 = vunpack.c.l.b16 %v335
        %v714 = vunpack.c.h.b16 %v335
        %v715 = vunpack.c.l.b16 %v336
        %v716 = vunpack.c.h.b16 %v336
        %v717 = vunpack.c.l.b16 %v337
        %v718 = vunpack.c.h.b16 %v337
        %v719 = vunpack.c.l.b16 %v338
        %v720 = vunpack.c.h.b16 %v338
        %v721 = vunpack.c.l.b16 %v339
        %v722 = vunpack.c.h.b16 %v339
        %v723 = vunpack.c.l.b16 %v340
        %v724 = vunpack.c.h.b16 %v340
        %v725 = vunpack.c.l.b16 %v341
        %v726 = vunpack.c.h.b16 %v341
        %v727 = vunpack.c.l.b16 %v342
        %v728 = vunpack.c.h.b16 %v342
        %v729 = vunpack.c.l.b16 %v343
        %v730 = vunpack.c.h.b16 %v343
        %v731 = vunpack.c.l.b16 %v344
        %v732 = vunpack.c.h.b16 %v344
        %v733 = vunpack.c.l.b16 %v345
        %v734 = vunpack.c.h.b16 %v345
        %v735 = vunpack.c.l.b16 %v346
        %v736 = vunpack.c.h.b16 %v346
        %v737 = vunpack.c.l.b16 %v347
        %v738 = vunpack.c.h.b16 %v347
        %v739 = vunpack.c.l.b16 %v348
        %v740 = vunpack.c.h.b16 %v348
        %v741 = vunpack.c.l.b16 %v349
        %v742 = vunpack.c.h.b16 %v349
        %v743 = vunpack.c.l.b16 %v350
        %v744 = vunpack.c.h.b16 %v350
        %v745 = vunpack.c.l.b16 %v351
        %v746 = vunpack.c.h.b16 %v351
        %v747 = vunpack.c.l.b16 %v352
        %v748 = vunpack.c.h.b16 %v352
        %v749 = vunpack.c.l.b16 %v353
        %v750 = vunpack.c.h.b16 %v353
        %v751 = vunpack.c.l.b16 %v354
        %v752 = vunpack.c.h.b16 %v354
        %v753 = vunpack.c.l.b16 %v355
        %v754 = vunpack.c.h.b16 %v355
        %v755 = vunpack.c.l.b16 %v356
        %v756 = vunpack.c.h.b16 %v356
        %v757 = vunpack.c.l.b16 %v357
        %v758 = vunpack.c.h.b16 %v357
        %v759 = vunpack.c.l.b16 %v358
        %v760 = vunpack.c.h.b16 %v358
        %v761 = vunpack.c.l.b16 %v359
        %v762 = vunpack.c.h.b16 %v359
        %v763 = vunpack.c.l.b16 %v360
        %v764 = vunpack.c.h.b16 %v360
        %v765 = vunpack.c.l.b16 %v361
        %v766 = vunpack.c.h.b16 %v361
        %v767 = vunpack.c.l.b16 %v362
        %v768 = vunpack.c.h.b16 %v362
        %v769 = vunpack.c.l.b16 %v363
        %v770 = vunpack.c.h.b16 %v363
        %v771 = vunpack.c.l.b16 %v364
        %v772 = vunpack.c.h.b16 %v364
        %v773 = vunpack.c.l.b16 %v365
        %v774 = vunpack.c.h.b16 %v365
        %v775 = vunpack.c.l.b16 %v366
        %v776 = vunpack.c.h.b16 %v366
        %v777 = vunpack.c.l.b16 %v367
        %v778 = vunpack.c.h.b16 %v367
        %v779 = vunpack.c.l.b16 %v368
        %v780 = vunpack.c.h.b16 %v368
        %v781 = vunpack.c.l.b16 %v369
        %v782 = vunpack.c.h.b16 %v369
        %v783 = vunpack.c.l.b16 %v370
        %v784 = vunpack.c.h.b16 %v370
        %v785 = vunpack.c.l.b16 %v371
        %v786 = vunpack.c.h.b16 %v371
        %v787 = vunpack.c.l.b16 %v372
        %v788 = vunpack.c.h.b16 %v372
        %v789 = vunpack.c.l.b16 %v373
        %v790 = vunpack.c.h.b16 %v373
        %v791 = vunpack.c.l.b16 %v374
        %v792 = vunpack.c.h.b16 %v374
        %v793 = vunpack.c.l.b16 %v375
        %v794 = vunpack.c.h.b16 %v375
        %v795 = vunpack.c.l.b16 %v376
        %v796 = vunpack.c.h.b16 %v376
        %v797 = vunpack.c.l.b16 %v377
        %v798 = vunpack.c.h.b16 %v377
        %v799 = vunpack.c.l.b16 %v378
        %v800 = vunpack.c.h.b16 %v378
        %v801 = vunpack.c.l.b16 %v379
        %v802 = vunpack.c.h.b16 %v379
        %v803 = vunpack.c.l.b16 %v380
        %v804 = vunpack.c.h.b16 %v380
        %v805 = vunpack.c.l.b16 %v381
        %v806 = vunpack.c.h.b16 %v381
        %v807 = vunpack.c.l.b16 %v382
        %v808 = vunpack.c.h.b16 %v382
        %v809 = vunpack.c.l.b16 %v383
        %v810 = vunpack.c.h.b16 %v383
        %v811 = vunpack.c.l.b16 %v384
        %v812 = vunpack.c.h.b16 %v384
        %v813 = vunpack.c.l.b16 %v385
        %v814 = vunpack.c.h.b16 %v385
        %v815 = vunpack.c.l.b16 %v386
        %v816 = vunpack.c.h.b16 %v386
        %v817 = vunpack.c.l.b16 %v387
        %v818 = vunpack.c.h.b16 %v387
        %v819 = vunpack.c.l.b16 %v388
        %v820 = vunpack.c.h.b16 %v388
        %v821 = vunpack.c.l.b16 %v389
        %v822 = vunpack.c.h.b16 %v389
        %v823 = vunpack.c.l.b16 %v390
        %v824 = vunpack.c.h.b16 %v390
        %v825 = vunpack.c.l.b16 %v391
        %v826 = vunpack.c.h.b16 %v391
        %v827 = vunpack.c.l.b16 %v392
        %v828 = vunpack.c.h.b16 %v392
        %v829 = vunpack.c.l.b16 %v393
        %v830 = vunpack.c.h.b16 %v393
        %v831 = vunpack.c.l.b16 %v394
        %v832 = vunpack.c.h.b16 %v394
        %v833 = vunpack.c.l.b16 %v395
        %v834 = vunpack.c.h.b16 %v395
        %v835 = vunpack.c.l.b16 %v396
        %v836 = vunpack.c.h.b16 %v396
        %v837 = vunpack.c.l.b16 %v397
        %v838 = vunpack.c.h.b16 %v397
        %v839 = vunpack.c.l.b16 %v398
        %v840 = vunpack.c.h.b16 %v398
        %v841 = vunpack.c.l.b16 %v399
        %v842 = vunpack.c.h.b16 %v399
        %v843 = vunpack.c.l.b16 %v400
        %v844 = vunpack.c.h.b16 %v400
        %v845 = vunpack.c.l.b16 %v401
        %v846 = vunpack.c.h.b16 %v401
        %v847 = vunpack.c.l.b16 %v402
        %v848 = vunpack.c.h.b16 %v402
        %v849 = vunpack.c.l.b16 %v403
        %v850 = vunpack.c.h.b16 %v403
        %v851 = vunpack.c.l.b16 %v404
        %v852 = vunpack.c.h.b16 %v404
        %v853 = vunpack.c.l.b16 %v405
        %v854 = vunpack.c.h.b16 %v405
        %v855 = vunpack.c.l.b16 %v406
        %v856 = vunpack.c.h.b16 %v406
        %v857 = vunpack.c.l.b16 %v407
        %v858 = vunpack.c.h.b16 %v407
        %v859 = vunpack.c.l.b16 %v408
        %v860 = vunpack.c.h.b16 %v408
        %v861 = vunpack.c.l.b16 %v409
        %v862 = vunpack.c.h.b16 %v409
        %v863 = vunpack.c.l.b16 %v410
        %v864 = vunpack.c.h.b16 %v410
        %v865 = vunpack.c.l.b16 %v411
        %v866 = vunpack.c.h.b16 %v411
        %v867 = vunpack.c.l.b16 %v412
        %v868 = vunpack.c.h.b16 %v412
        %v869 = vunpack.c.l.b16 %v413
        %v870 = vunpack.c.h.b16 %v413
        %v871 = vunpack.c.l.b16 %v414
        %v872 = vunpack.c.h.b16 %v414
        %v873 = vunpack.c.l.b16 %v415
        %v874 = vunpack.c.h.b16 %v415
        %v875 = vunpack.c.l.b16 %v416
        %v876 = vunpack.c.h.b16 %v416
        %v877 = vunpack.c.l.b16 %v417
        %v878 = vunpack.c.h.b16 %v417
        %v879 = vunpack.c.l.b16 %v418
        %v880 = vunpack.c.h.b16 %v418
        %v881 = vunpack.c.l.b16 %v419
        %v882 = vunpack.c.h.b16 %v419
        %v883 = vunpack.c.l.b16 %v420
        %v884 = vunpack.c.h.b16 %v420
        %v885 = vunpack.c.l.b16 %v421
        %v886 = vunpack.c.h.b16 %v421
        %v887 = vunpack.c.l.b16 %v422
        %v888 = vunpack.c.h.b16 %v422
        %v889 = vunpack.c.l.b16 %v423
        %v890 = vunpack.c.h.b16 %v423
        %v891 = vunpack.c.l.b16 %v424
        %v892 = vunpack.c.h.b16 %v424
        %v893 = vunpack.c.l.b16 %v425
        %v894 = vunpack.c.h.b16 %v425
        %v895 = vunpack.c.l.b16 %v426
        %v896 = vunpack.c.h.b16 %v426
        %v897 = vunpack.c.l.b16 %v427
        %v898 = vunpack.c.h.b16 %v427
        %v899 = vunpack.c.l.b16 %v428
        %v900 = vunpack.c.h.b16 %v428
        %v901 = vunpack.c.l.b16 %v429
        %v902 = vunpack.c.h.b16 %v429
        %v903 = vunpack.c.l.b16 %v430
        %v904 = vunpack.c.h.b16 %v430
        %v905 = vunpack.c.l.b16 %v431
        %v906 = vunpack.c.h.b16 %v431
        %v907 = vunpack.c.l.b16 %v432
        %v908 = vunpack.c.h.b16 %v432
        %v909 = vunpack.c.l.b16 %v433
        %v910 = vunpack.c.h.b16 %v433
        %v911 = vunpack.c.l.b16 %v434
        %v912 = vunpack.c.h.b16 %v434
        %v913 = vunpack.c.l.b16 %v435
        %v914 = vunpack.c.h.b16 %v435
        %v915 = vunpack.c.l.b16 %v436
        %v916 = vunpack.c.h.b16 %v436
        %v917 = vunpack.c.l.b16 %v437
        %v918 = vunpack.c.h.b16 %v437
        %v919 = vunpack.c.l.b16 %v438
        %v920 = vunpack.c.h.b16 %v438
        %v921 = vunpack.c.l.b16 %v439
        %v922 = vunpack.c.h.b16 %v439
        %v923 = vunpack.c.l.b16 %v440
        %v924 = vunpack.c.h.b16 %v440
        %v925 = vunpack.c.l.b16 %v441
        %v926 = vunpack.c.h.b16 %v441
        %v927 = vunpack.c.l.b16 %v442
        %v928 = vunpack.c.h.b16 %v442
        %v929 = vunpack.c.l.b16 %v443
        %v930 = vunpack.c.h.b16 %v443
        %v931 = vunpack.c.l.b16 %v444
        %v932 = vunpack.c.h.b16 %v444
        %v933 = vunpack.c.l.b16 %v445
        %v934 = vunpack.c.h.b16 %v445
        %v935 = vunpack.c.l.b16 %v446
        %v936 = vunpack.c.h.b16 %v446
        %v937 = vunpack.c.l.b16 %v447
        %v938 = vunpack.c.h.b16 %v447
        %v939 = vunpack.c.l.b16 %v448
        %v940 = vunpack.c.h.b16 %v448
        %v941 = vunpack.c.l.b16 %v449
        %v942 = vunpack.c.h.b16 %v449
        %v943 = vunpack.c.l.b16 %v450
        %v944 = vunpack.c.h.b16 %v450
        %v945 = vunpack.c.l.b16 %v451
        %v946 = vunpack.c.h.b16 %v451
        %v947 = vunpack.c.l.b16 %v452
        %v948 = vunpack.c.h.b16 %v452
        %v949 = vunpack.c.l.b16 %v453
        %v950 = vunpack.c.h.b16 %v453
        %v951 = vunpack.c.l.b16 %v454
        %v952 = vunpack.c.h.b16 %v454
        %v953 = vunpack.c.l.b16 %v455
        %v954 = vunpack.c.h.b16 %v455
        %v955 = vunpack.c.l.b16 %v456
        %v956 = vunpack.c.h.b16 %v456
        %v957 = vunpack.c.l.b16 %v457
        %v958 = vunpack.c.h.b16 %v457
        %v959 = vunpack.c.l.b16 %v458
        %v960 = vunpack.c.h.b16 %v458
        %v961 = vunpack.c.l.b16 %v459
        %v962 = vunpack.c.h.b16 %v459
        %v963 = vunpack.c.l.b16 %v460
        %v964 = vunpack.c.h.b16 %v460
        %v965 = vunpack.c.l.b16 %v461
        %v966 = vunpack.c.h.b16 %v461
        %v967 = vunpack.c.l.b16 %v462
        %v968 = vunpack.c.h.b16 %v462
        %v969 = vpack.c.b16 %v653, %v649
        %v970 = vpack.c.b16 %v654, %v650
        %v971 = vpack.c.b16 %v655, %v651
        %v972 = vpack.c.b16 %v656, %v652
        %v973 = vpack.c.b16 %v661, %v657
        %v974 = vpack.c.b16 %v662, %v658
        %v975 = vpack.c.b16 %v663, %v659
        %v976 = vpack.c.b16 %v664, %v660
        %v977 = vpack.c.b16 %v669, %v665
        %v978 = vpack.c.b16 %v670, %v666
        %v979 = vpack.c.b16 %v671, %v667
        %v980 = vpack.c.b16 %v672, %v668
        %v981 = vpack.c.b16 %v677, %v673
        %v982 = vpack.c.b16 %v678, %v674
        %v983 = vpack.c.b16 %v679, %v675
        %v984 = vpack.c.b16 %v680, %v676
        %v985 = vpack.c.b16 %v685, %v681
        %v986 = vpack.c.b16 %v686, %v682
        %v987 = vpack.c.b16 %v687, %v683
        %v988 = vpack.c.b16 %v688, %v684
        %v989 = vpack.c.b16 %v693, %v689
        %v990 = vpack.c.b16 %v694, %v690
        %v991 = vpack.c.b16 %v695, %v691
        %v992 = vpack.c.b16 %v696, %v692
        %v993 = vpack.c.b16 %v701, %v697
        %v994 = vpack.c.b16 %v702, %v698
        %v995 = vpack.c.b16 %v703, %v699
        %v996 = vpack.c.b16 %v704, %v700
        %v997 = vpack.c.b16 %v709, %v705
        %v998 = vpack.c.b16 %v710, %v706
        %v999 = vpack.c.b16 %v711, %v707
        %v1000 = vpack.c.b16 %v712, %v708
        %v1001 = vpack.c.b16 %v717, %v713
        %v1002 = vpack.c.b16 %v718, %v714
        %v1003 = vpack.c.b16 %v719, %v715
        %v1004 = vpack.c.b16 %v720, %v716
        %v1005 = vpack.c.b16 %v725, %v721
        %v1006 = vpack.c.b16 %v726, %v722
        %v1007 = vpack.c.b16 %v727, %v723
        %v1008 = vpack.c.b16 %v728, %v724
        %v1009 = vpack.c.b16 %v733, %v729
        %v1010 = vpack.c.b16 %v734, %v730
        %v1011 = vpack.c.b16 %v735, %v731
        %v1012 = vpack.c.b16 %v736, %v732
        %v1013 = vpack.c.b16 %v741, %v737
        %v1014 = vpack.c.b16 %v742, %v738
        %v1015 = vpack.c.b16 %v743, %v739
        %v1016 = vpack.c.b16 %v744, %v740
        %v1017 = vpack.c.b16 %v749, %v745
        %v1018 = vpack.c.b16 %v750, %v746
        %v1019 = vpack.c.b16 %v751, %v747
        %v1020 = vpack.c.b16 %v752, %v748
        %v1021 = vpack.c.b16 %v757, %v753
        %v1022 = vpack.c.b16 %v758, %v754
        %v1023 = vpack.c.b16 %v759, %v755
        %v1024 = vpack.c.b16 %v760, %v756
        %v1025 = vpack.c.b16 %v765, %v761
        %v1026 = vpack.c.b16 %v766, %v762
        %v1027 = vpack.c.b16 %v767, %v763
        %v1028 = vpack.c.b16 %v768, %v764
        %v1029 = vpack.c.b16 %v773, %v769
        %v1030 = vpack.c.b16 %v774, %v770
        %v1031 = vpack.c.b16 %v775, %v771
        %v1032 = vpack.c.b16 %v776, %v772
        %v1033 = vpack.c.b16 %v781, %v777
        %v1034 = vpack.c.b16 %v782, %v778
        %v1035 = vpack.c.b16 %v783, %v779
        %v1036 = vpack.c.b16 %v784, %v780
        %v1037 = vpack.c.b16 %v789, %v785
        %v1038 = vpack.c.b16 %v790, %v786
        %v1039 = vpack.c.b16 %v791, %v787
        %v1040 = vpack.c.b16 %v792, %v788
        %v1041 = vpack.c.b16 %v797, %v793
        %v1042 = vpack.c.b16 %v798, %v794
        %v1043 = vpack.c.b16 %v799, %v795
        %v1044 = vpack.c.b16 %v800, %v796
        %v1045 = vpack.c.b16 %v805, %v801
        %v1046 = vpack.c.b16 %v806, %v802
        %v1047 = vpack.c.b16 %v807, %v803
        %v1048 = vpack.c.b16 %v808, %v804
        %v1049 = vpack.c.b16 %v813, %v809
        %v1050 = vpack.c.b16 %v814, %v810
        %v1051 = vpack.c.b16 %v815, %v811
        %v1052 = vpack.c.b16 %v816, %v812
        %v1053 = vpack.c.b16 %v821, %v817
        %v1054 = vpack.c.b16 %v822, %v818
        %v1055 = vpack.c.b16 %v823, %v819
        %v1056 = vpack.c.b16 %v824, %v820
        %v1057 = vpack.c.b16 %v829, %v825
        %v1058 = vpack.c.b16 %v830, %v826
        %v1059 = vpack.c.b16 %v831, %v827
        %v1060 = vpack.c.b16 %v832, %v828
        %v1061 = vpack.c.b16 %v837, %v833
        %v1062 = vpack.c.b16 %v838, %v834
        %v1063 = vpack.c.b16 %v839, %v835
        %v1064 = vpack.c.b16 %v840, %v836
        %v1065 = vpack.c.b16 %v845, %v841
        %v1066 = vpack.c.b16 %v846, %v842
        %v1067 = vpack.c.b16 %v847, %v843
        %v1068 = vpack.c.b16 %v848, %v844
        %v1069 = vpack.c.b16 %v853, %v849
        %v1070 = vpack.c.b16 %v854, %v850
        %v1071 = vpack.c.b16 %v855, %v851
        %v1072 = vpack.c.b16 %v856, %v852
        %v1073 = vpack.c.b16 %v861, %v857
        %v1074 = vpack.c.b16 %v862, %v858
        %v1075 = vpack.c.b16 %v863, %v859
        %v1076 = vpack.c.b16 %v864, %v860
        %v1077 = vpack.c.b16 %v869, %v865
        %v1078 = vpack.c.b16 %v870, %v866
        %v1079 = vpack.c.b16 %v871, %v867
        %v1080 = vpack.c.b16 %v872, %v868
        %v1081 = vpack.c.b16 %v877, %v873
        %v1082 = vpack.c.b16 %v878, %v874
        %v1083 = vpack.c.b16 %v879, %v875
        %v1084 = vpack.c.b16 %v880, %v876
        %v1085 = vpack.c.b16 %v885, %v881
        %v1086 = vpack.c.b16 %v886, %v882
        %v1087 = vpack.c.b16 %v887, %v883
        %v1088 = vpack.c.b16 %v888, %v884
        %v1089 = vpack.c.b16 %v893, %v889
        %v1090 = vpack.c.b16 %v894, %v890
        %v1091 = vpack.c.b16 %v895, %v891
        %v1092 = vpack.c.b16 %v896, %v892
        %v1093 = vpack.c.b16 %v901, %v897
        %v1094 = vpack.c.b16 %v902, %v898
        %v1095 = vpack.c.b16 %v903, %v899
        %v1096 = vpack.c.b16 %v904, %v900
        %v1097 = vpack.c.b16 %v909, %v905
        %v1098 = vpack.c.b16 %v910, %v906
        %v1099 = vpack.c.b16 %v911, %v907
        %v1100 = vpack.c.b16 %v912, %v908
        %v1101 = vpack.c.b16 %v917, %v913
        %v1102 = vpack.c.b16 %v918, %v914
        %v1103 = vpack.c.b16 %v919, %v915
        %v1104 = vpack.c.b16 %v920, %v916
        %v1105 = vpack.c.b16 %v925, %v921
        %v1106 = vpack.c.b16 %v926, %v922
        %v1107 = vpack.c.b16 %v927, %v923
        %v1108 = vpack.c.b16 %v928, %v924
        %v1109 = vpack.c.b16 %v933, %v929
        %v1110 = vpack.c.b16 %v934, %v930
        %v1111 = vpack.c.b16 %v935, %v931
        %v1112 = vpack.c.b16 %v936, %v932
        %v1113 = vpack.c.b16 %v941, %v937
        %v1114 = vpack.c.b16 %v942, %v938
        %v1115 = vpack.c.b16 %v943, %v939
        %v1116 = vpack.c.b16 %v944, %v940
        %v1117 = vpack.c.b16 %v949, %v945
        %v1118 = vpack.c.b16 %v950, %v946
        %v1119 = vpack.c.b16 %v951, %v947
        %v1120 = vpack.c.b16 %v952, %v948
        %v1121 = vpack.c.b16 %v957, %v953
        %v1122 = vpack.c.b16 %v958, %v954
        %v1123 = vpack.c.b16 %v959, %v955
        %v1124 = vpack.c.b16 %v960, %v956
        %v1125 = vpack.c.b16 %v965, %v961
        %v1126 = vpack.c.b16 %v966, %v962
        %v1127 = vpack.c.b16 %v967, %v963
        %v1128 = vpack.c.b16 %v968, %v964
        %1289 = vmatprep.subr.bf16.mxu0 %v998
        %1290 = vmatpush1.bf16.msra.mxu0 %v997
        %1291 = vmatprep.subr.bf16.mxu0 %v994
        %1292 = vmatpush1.bf16.msra.mxu0 %v993
        %1293 = vmatprep.subr.bf16.mxu0 %v990
        %1294 = vmatpush1.bf16.msra.mxu0 %v989
        %1295 = vmatprep.subr.bf16.mxu0 %v986
        %1296 = vmatpush1.bf16.msra.mxu0 %v985
        %1297 = vmatprep.subr.bf16.mxu0 %v982
        %1298 = vmatpush1.bf16.msra.mxu0 %v981
        %1299 = vmatprep.subr.bf16.mxu0 %v978
        %1300 = vmatpush1.bf16.msra.mxu0 %v977
        %1301 = vmatprep.subr.bf16.mxu0 %v974
        %1302 = vmatpush1.bf16.msra.mxu0 %v973
        %1303 = vmatprep.subr.bf16.mxu0 %v970
        %1304 = vmatpush1.bf16.msra.mxu0 %v969
        %1305 = vmatprep.subr.bf16.mxu0 %v1030
        %1306 = vmatpush2.bf16.msra.mxu0 %v1029
        %1307 = vmatprep.subr.bf16.mxu0 %v1026
        %1308 = vmatpush2.bf16.msra.mxu0 %v1025
        %1309 = vmatprep.subr.bf16.mxu0 %v1022
        %1310 = vmatpush2.bf16.msra.mxu0 %v1021
        %1311 = vmatprep.subr.bf16.mxu0 %v1018
        %1312 = vmatpush2.bf16.msra.mxu0 %v1017
        %1313 = vmatprep.subr.bf16.mxu0 %v1014
        %1314 = vmatpush2.bf16.msra.mxu0 %v1013
        %1315 = vmatprep.subr.bf16.mxu0 %v1010
        %1316 = vmatpush2.bf16.msra.mxu0 %v1009
        %1317 = vmatprep.subr.bf16.mxu0 %v1006
        %1318 = vmatpush2.bf16.msra.mxu0 %v1005
        %1319 = vmatprep.subr.bf16.mxu0 %v1002
        %1320 = vmatpush2.bf16.msra.mxu0 %v1001
        %1321 = vmatprep.mubr.bf16.mxu0 %v480
        %1322 = vmatmul.mubr.bf16.gmra.mxu0 %v479
        %v1323 = vpop.f32.mrf.mxu0
        %v1324 = vadd.f32 0.0, %v1323
        %v1325 = vpop.f32.mrf.mxu0
        %v1326 = vadd.f32 0.0, %v1325
        %v1327 = vpop.f32.mrf.mxu0
        %v1328 = vadd.f32 0.0, %v1327
        %v1329 = vpop.f32.mrf.mxu0
        %v1330 = vadd.f32 0.0, %v1329
        %1331 = vdwg.mxu0
        %1332 = vmatprep.subr.bf16.mxu0 %v1062
        %1333 = vmatpush1.bf16.msra.mxu0 %v1061
        %1334 = vmatprep.subr.bf16.mxu0 %v1058
        %1335 = vmatpush1.bf16.msra.mxu0 %v1057
        %1336 = vmatprep.subr.bf16.mxu0 %v1054
        %1337 = vmatpush1.bf16.msra.mxu0 %v1053
        %1338 = vmatprep.subr.bf16.mxu0 %v1050
        %1339 = vmatpush1.bf16.msra.mxu0 %v1049
        %1340 = vmatprep.subr.bf16.mxu0 %v1046
        %1341 = vmatpush1.bf16.msra.mxu0 %v1045
        %1342 = vmatprep.subr.bf16.mxu0 %v1042
        %1343 = vmatpush1.bf16.msra.mxu0 %v1041
        %1344 = vmatprep.subr.bf16.mxu0 %v1038
        %1345 = vmatpush1.bf16.msra.mxu0 %v1037
        %1346 = vmatprep.subr.bf16.mxu0 %v1034
        %1347 = vmatpush1.bf16.msra.mxu0 %v1033
        %1348 = vmatprep.subr.bf16.mxu0 %v1094
        %1349 = vmatpush2.bf16.msra.mxu0 %v1093
        %1350 = vmatprep.subr.bf16.mxu0 %v1090
        %1351 = vmatpush2.bf16.msra.mxu0 %v1089
        %1352 = vmatprep.subr.bf16.mxu0 %v1086
        %1353 = vmatpush2.bf16.msra.mxu0 %v1085
        %1354 = vmatprep.subr.bf16.mxu0 %v1082
        %1355 = vmatpush2.bf16.msra.mxu0 %v1081
        %1356 = vmatprep.subr.bf16.mxu0 %v1078
        %1357 = vmatpush2.bf16.msra.mxu0 %v1077
        %1358 = vmatprep.subr.bf16.mxu0 %v1074
        %1359 = vmatpush2.bf16.msra.mxu0 %v1073
        %1360 = vmatprep.subr.bf16.mxu0 %v1070
        %1361 = vmatpush2.bf16.msra.mxu0 %v1069
        %1362 = vmatprep.subr.bf16.mxu0 %v1066
        %1363 = vmatpush2.bf16.msra.mxu0 %v1065
        %1364 = vmatprep.mubr.bf16.mxu0 %v482
        %1365 = vmatmul.mubr.bf16.gmra.mxu0 %v481
        %v1366 = vpop.f32.mrf.mxu0
        %v1367 = vadd.f32 %v1324, %v1366
        %v1368 = vpop.f32.mrf.mxu0
        %v1369 = vadd.f32 %v1326, %v1368
        %v1370 = vpop.f32.mrf.mxu0
        %v1371 = vadd.f32 %v1328, %v1370
        %v1372 = vpop.f32.mrf.mxu0
        %v1373 = vadd.f32 %v1330, %v1372
        %1374 = vdwg.mxu0
        %1375 = vmatprep.subr.bf16.mxu0 %v1126
        %1376 = vmatpush1.bf16.msra.mxu0 %v1125
        %1377 = vmatprep.subr.bf16.mxu0 %v1122
        %1378 = vmatpush1.bf16.msra.mxu0 %v1121
        %1379 = vmatprep.subr.bf16.mxu0 %v1118
        %1380 = vmatpush1.bf16.msra.mxu0 %v1117
        %1381 = vmatprep.subr.bf16.mxu0 %v1114
        %1382 = vmatpush1.bf16.msra.mxu0 %v1113
        %1383 = vmatprep.subr.bf16.mxu0 %v1110
        %1384 = vmatpush1.bf16.msra.mxu0 %v1109
        %1385 = vmatprep.subr.bf16.mxu0 %v1106
        %1386 = vmatpush1.bf16.msra.mxu0 %v1105
        %1387 = vmatprep.subr.bf16.mxu0 %v1102
        %1388 = vmatpush1.bf16.msra.mxu0 %v1101
        %1389 = vmatprep.subr.bf16.mxu0 %v1098
        %1390 = vmatpush1.bf16.msra.mxu0 %v1097
        %1391 = vmatprep.subr.bf16.mxu0 0
        %1392 = vmatpush2.bf16.msra.mxu0 0
        %1393 = vmatprep.subr.bf16.mxu0 0
        %1394 = vmatpush2.bf16.msra.mxu0 0
        %1395 = vmatprep.subr.bf16.mxu0 0
        %1396 = vmatpush2.bf16.msra.mxu0 0
        %1397 = vmatprep.subr.bf16.mxu0 0
        %1398 = vmatpush2.bf16.msra.mxu0 0
        %1399 = vmatprep.subr.bf16.mxu0 0
        %1400 = vmatpush2.bf16.msra.mxu0 0
        %1401 = vmatprep.subr.bf16.mxu0 0
        %1402 = vmatpush2.bf16.msra.mxu0 0
        %1403 = vmatprep.subr.bf16.mxu0 0
        %1404 = vmatpush2.bf16.msra.mxu0 0
        %1405 = vmatprep.subr.bf16.mxu0 0
        %1406 = vmatpush2.bf16.msra.mxu0 0
        %1407 = vmatprep.mubr.bf16.mxu0 0
        %1408 = vmatmul.mubr.bf16.gmra.mxu0 %v483
        %v1409 = vpop.f32.mrf.mxu0
        %v1410 = vadd.f32 %v1367, %v1409
        %v1411 = vpop.f32.mrf.mxu0
        %v1412 = vadd.f32 %v1369, %v1411
        %v1413 = vpop.f32.mrf.mxu0
        %v1414 = vadd.f32 %v1371, %v1413
        %v1415 = vpop.f32.mrf.mxu0
        %v1416 = vadd.f32 %v1373, %v1415
        %1417 = vdwg.mxu0
        %1418 = vmatprep.subr.bf16.mxu0 %v1000
        %1419 = vmatpush1.bf16.msra.mxu0 %v999
        %1420 = vmatprep.subr.bf16.mxu0 %v996
        %1421 = vmatpush1.bf16.msra.mxu0 %v995
        %1422 = vmatprep.subr.bf16.mxu0 %v992
        %1423 = vmatpush1.bf16.msra.mxu0 %v991
        %1424 = vmatprep.subr.bf16.mxu0 %v988
        %1425 = vmatpush1.bf16.msra.mxu0 %v987
        %1426 = vmatprep.subr.bf16.mxu0 %v984
        %1427 = vmatpush1.bf16.msra.mxu0 %v983
        %1428 = vmatprep.subr.bf16.mxu0 %v980
        %1429 = vmatpush1.bf16.msra.mxu0 %v979
        %1430 = vmatprep.subr.bf16.mxu0 %v976
        %1431 = vmatpush1.bf16.msra.mxu0 %v975
        %1432 = vmatprep.subr.bf16.mxu0 %v972
        %1433 = vmatpush1.bf16.msra.mxu0 %v971
        %1434 = vmatprep.subr.bf16.mxu0 %v1032
        %1435 = vmatpush2.bf16.msra.mxu0 %v1031
        %1436 = vmatprep.subr.bf16.mxu0 %v1028
        %1437 = vmatpush2.bf16.msra.mxu0 %v1027
        %1438 = vmatprep.subr.bf16.mxu0 %v1024
        %1439 = vmatpush2.bf16.msra.mxu0 %v1023
        %1440 = vmatprep.subr.bf16.mxu0 %v1020
        %1441 = vmatpush2.bf16.msra.mxu0 %v1019
        %1442 = vmatprep.subr.bf16.mxu0 %v1016
        %1443 = vmatpush2.bf16.msra.mxu0 %v1015
        %1444 = vmatprep.subr.bf16.mxu0 %v1012
        %1445 = vmatpush2.bf16.msra.mxu0 %v1011
        %1446 = vmatprep.subr.bf16.mxu0 %v1008
        %1447 = vmatpush2.bf16.msra.mxu0 %v1007
        %1448 = vmatprep.subr.bf16.mxu0 %v1004
        %1449 = vmatpush2.bf16.msra.mxu0 %v1003
        %1450 = vmatprep.mubr.bf16.mxu0 %v480
        %1451 = vmatmul.mubr.bf16.gmra.mxu0 %v479
        %v1452 = vpop.f32.mrf.mxu0
        %v1453 = vadd.f32 0.0, %v1452
        %v1454 = vpop.f32.mrf.mxu0
        %v1455 = vadd.f32 0.0, %v1454
        %v1456 = vpop.f32.mrf.mxu0
        %v1457 = vadd.f32 0.0, %v1456
        %v1458 = vpop.f32.mrf.mxu0
        %v1459 = vadd.f32 0.0, %v1458
        %1460 = vdwg.mxu0
        %1461 = vmatprep.subr.bf16.mxu0 %v1064
        %1462 = vmatpush1.bf16.msra.mxu0 %v1063
        %1463 = vmatprep.subr.bf16.mxu0 %v1060
        %1464 = vmatpush1.bf16.msra.mxu0 %v1059
        %1465 = vmatprep.subr.bf16.mxu0 %v1056
        %1466 = vmatpush1.bf16.msra.mxu0 %v1055
        %1467 = vmatprep.subr.bf16.mxu0 %v1052
        %1468 = vmatpush1.bf16.msra.mxu0 %v1051
        %1469 = vmatprep.subr.bf16.mxu0 %v1048
        %1470 = vmatpush1.bf16.msra.mxu0 %v1047
        %1471 = vmatprep.subr.bf16.mxu0 %v1044
        %1472 = vmatpush1.bf16.msra.mxu0 %v1043
        %1473 = vmatprep.subr.bf16.mxu0 %v1040
        %1474 = vmatpush1.bf16.msra.mxu0 %v1039
        %1475 = vmatprep.subr.bf16.mxu0 %v1036
        %1476 = vmatpush1.bf16.msra.mxu0 %v1035
        %1477 = vmatprep.subr.bf16.mxu0 %v1096
        %1478 = vmatpush2.bf16.msra.mxu0 %v1095
        %1479 = vmatprep.subr.bf16.mxu0 %v1092
        %1480 = vmatpush2.bf16.msra.mxu0 %v1091
        %1481 = vmatprep.subr.bf16.mxu0 %v1088
        %1482 = vmatpush2.bf16.msra.mxu0 %v1087
        %1483 = vmatprep.subr.bf16.mxu0 %v1084
        %1484 = vmatpush2.bf16.msra.mxu0 %v1083
        %1485 = vmatprep.subr.bf16.mxu0 %v1080
        %1486 = vmatpush2.bf16.msra.mxu0 %v1079
        %1487 = vmatprep.subr.bf16.mxu0 %v1076
        %1488 = vmatpush2.bf16.msra.mxu0 %v1075
        %1489 = vmatprep.subr.bf16.mxu0 %v1072
        %1490 = vmatpush2.bf16.msra.mxu0 %v1071
        %1491 = vmatprep.subr.bf16.mxu0 %v1068
        %1492 = vmatpush2.bf16.msra.mxu0 %v1067
        %1493 = vmatprep.mubr.bf16.mxu0 %v482
        %1494 = vmatmul.mubr.bf16.gmra.mxu0 %v481
        %v1495 = vpop.f32.mrf.mxu0
        %v1496 = vadd.f32 %v1453, %v1495
        %v1497 = vpop.f32.mrf.mxu0
        %v1498 = vadd.f32 %v1455, %v1497
        %v1499 = vpop.f32.mrf.mxu0
        %v1500 = vadd.f32 %v1457, %v1499
        %v1501 = vpop.f32.mrf.mxu0
        %v1502 = vadd.f32 %v1459, %v1501
        %1503 = vdwg.mxu0
        %1504 = vmatprep.subr.bf16.mxu0 %v1128
        %1505 = vmatpush1.bf16.msra.mxu0 %v1127
        %1506 = vmatprep.subr.bf16.mxu0 %v1124
        %1507 = vmatpush1.bf16.msra.mxu0 %v1123
        %1508 = vmatprep.subr.bf16.mxu0 %v1120
        %1509 = vmatpush1.bf16.msra.mxu0 %v1119
        %1510 = vmatprep.subr.bf16.mxu0 %v1116
        %1511 = vmatpush1.bf16.msra.mxu0 %v1115
        %1512 = vmatprep.subr.bf16.mxu0 %v1112
        %1513 = vmatpush1.bf16.msra.mxu0 %v1111
        %1514 = vmatprep.subr.bf16.mxu0 %v1108
        %1515 = vmatpush1.bf16.msra.mxu0 %v1107
        %1516 = vmatprep.subr.bf16.mxu0 %v1104
        %1517 = vmatpush1.bf16.msra.mxu0 %v1103
        %1518 = vmatprep.subr.bf16.mxu0 %v1100
        %1519 = vmatpush1.bf16.msra.mxu0 %v1099
        %1520 = vmatprep.subr.bf16.mxu0 0
        %1521 = vmatpush2.bf16.msra.mxu0 0
        %1522 = vmatprep.subr.bf16.mxu0 0
        %1523 = vmatpush2.bf16.msra.mxu0 0
        %1524 = vmatprep.subr.bf16.mxu0 0
        %1525 = vmatpush2.bf16.msra.mxu0 0
        %1526 = vmatprep.subr.bf16.mxu0 0
        %1527 = vmatpush2.bf16.msra.mxu0 0
        %1528 = vmatprep.subr.bf16.mxu0 0
        %1529 = vmatpush2.bf16.msra.mxu0 0
        %1530 = vmatprep.subr.bf16.mxu0 0
        %1531 = vmatpush2.bf16.msra.mxu0 0
        %1532 = vmatprep.subr.bf16.mxu0 0
        %1533 = vmatpush2.bf16.msra.mxu0 0
        %1534 = vmatprep.subr.bf16.mxu0 0
        %1535 = vmatpush2.bf16.msra.mxu0 0
        %1536 = vmatprep.mubr.bf16.mxu0 0
        %1537 = vmatmul.mubr.bf16.gmra.mxu0 %v483
        %v1538 = vpop.f32.mrf.mxu0
        %v1539 = vadd.f32 %v1496, %v1538
        %v1540 = vpop.f32.mrf.mxu0
        %v1541 = vadd.f32 %v1498, %v1540
        %v1542 = vpop.f32.mrf.mxu0
        %v1543 = vadd.f32 %v1500, %v1542
        %v1544 = vpop.f32.mrf.mxu0
        %v1545 = vadd.f32 %v1502, %v1544
        %1546 = vdwg.mxu0
        %v1547 = vadd.f32 %v289, %v1410
        %v1548 = vadd.f32 %v290, %v1412
        %v1549 = vadd.f32 %v291, %v1539
        %v1550 = vadd.f32 %v292, %v1541
        %v1551 = vadd.f32 %v293, %v1414
        %v1552 = vadd.f32 %v294, %v1416
        %v1553 = vadd.f32 %v295, %v1543
        %v1554 = vadd.f32 %v296, %v1545
        %1555 = vst [vmem:[#allocation2] sm:$0xff] %v1547
        %1556 = vst [vmem:[#allocation2 + $0x8] sm:$0xff] %v1548
        %1557 = vst [vmem:[#allocation2 + $0x10] sm:$0xff] %v1549
        %1558 = vst [vmem:[#allocation2 + $0x18] sm:$0xff] %v1550
        %1559 = vst [vmem:[#allocation2 + $0x20] sm:$0xff] %v1551
        %1560 = vst [vmem:[#allocation2 + $0x28] sm:$0xff] %v1552
        %1561 = vst [vmem:[#allocation2 + $0x30] sm:$0xff] %v1553
        %1562 = vst [vmem:[#allocation2 + $0x38] sm:$0xff] %v1554
        %p1563 = scmp.eq.s32.totalorder %s16, 19
        // Predicated region
        $region71: #{my_module3_forward.11} parent=61 // pred_check
          %p1564 = pneg %p1563
        $region72: #{my_module3_forward.11} parent=61 // pred_check_branch
          %1566 = sbr.rel (%p1564) target = $region74
        $region73: #{my_module3_forward.11} parent=61 // pred_region
          %v1567 = vld [vmem:[#allocation2] sm:$0xff]
          %v1568 = vld [vmem:[#allocation2 + $0x8] sm:$0xff]
          %v1569 = vld [vmem:[#allocation2 + $0x10] sm:$0xff]
          %v1570 = vld [vmem:[#allocation2 + $0x18] sm:$0xff]
          %v1571 = vld [vmem:[#allocation2 + $0x20] sm:$0xff]
          %v1572 = vld [vmem:[#allocation2 + $0x28] sm:$0xff]
          %v1573 = vld [vmem:[#allocation2 + $0x30] sm:$0xff]
          %v1574 = vld [vmem:[#allocation2 + $0x38] sm:$0xff]
          %v1575 = vld [vmem:[%s2] sm:$0xf]
          %v1577 = vlaneseq
          %v1578 = vshrl.u32 %v1577, 7
          %v1579 = vsub.s32 0, %v1578
          %v1580 = vrot.slane %v1575, %v1579
          %v1581 = vlaneseq
          %v1582 = vshrl.u32 %v1581, 7
          %v1583 = vsub.s32 1, %v1582
          %v1584 = vrot.slane %v1575, %v1583
          %v1585 = vlaneseq
          %v1586 = vshrl.u32 %v1585, 7
          %v1587 = vsub.s32 2, %v1586
          %v1588 = vrot.slane %v1575, %v1587
          %v1589 = vlaneseq
          %v1590 = vshrl.u32 %v1589, 7
          %v1591 = vsub.s32 3, %v1590
          %v1592 = vrot.slane %v1575, %v1591
          %v1597 = vadd.f32 %v1567, %v1580
          %v1598 = vadd.f32 %v1568, %v1584
          %v1599 = vadd.f32 %v1569, %v1588
          %v1600 = vadd.f32 %v1570, %v1592
          %v1601 = vadd.f32 %v1571, %v1580
          %v1602 = vadd.f32 %v1572, %v1584
          %v1603 = vadd.f32 %v1573, %v1588
          %v1604 = vadd.f32 %v1574, %v1592
          %v1605 = vmax.f32 %v1597, 0.0
          %v1606 = vmax.f32 %v1598, 0.0
          %v1607 = vmax.f32 %v1599, 0.0
          %v1608 = vmax.f32 %v1600, 0.0
          %v1609 = vmax.f32 %v1601, 0.0
          %v1610 = vmax.f32 %v1602, 0.0
          %v1611 = vmax.f32 %v1603, 0.0
          %v1612 = vmax.f32 %v1604, 0.0
          %v1613 = vpack.c.bf16 %v1609, %v1605
          %v1614 = vpack.c.bf16 %v1610, %v1606
          %v1615 = vpack.c.bf16 %v1611, %v1607
          %v1616 = vpack.c.bf16 %v1612, %v1608
          %v1617 = vld [vmem:[%s3] sm:$0xf]
          %v1618 = vld [vmem:[%s3 + $0x4] sm:$0xf]
          %v1619 = vld [vmem:[%s3 + $0x8] sm:$0xf]
          %v1620 = vld [vmem:[%s3 + $0xc] sm:$0xf]
          %v1621 = vld [vmem:[%s3 + $0x10] sm:$0xf]
          %v1622 = vld [vmem:[%s3 + $0x14] sm:$0xf]
          %v1623 = vld [vmem:[%s3 + $0x18] sm:$0xf]
          %v1624 = vld [vmem:[%s3 + $0x1c] sm:$0xf]
          %v1625 = vld [vmem:[%s3 + $0x20] sm:$0xf]
          %v1626 = vld [vmem:[%s3 + $0x24] sm:$0xf]
          %v1627 = vld [vmem:[%s3 + $0x28] sm:$0xf]
          %v1628 = vld [vmem:[%s3 + $0x2c] sm:$0xf]
          %v1629 = vld [vmem:[%s3 + $0x30] sm:$0xf]
          %v1630 = vld [vmem:[%s3 + $0x34] sm:$0xf]
          %v1631 = vld [vmem:[%s3 + $0x38] sm:$0xf]
          %v1632 = vld [vmem:[%s3 + $0x3c] sm:$0xf]
          %v1633 = vld [vmem:[%s3 + $0x40] sm:$0xf]
          %v1634 = vld [vmem:[%s3 + $0x44] sm:$0xf]
          %v1635 = vld [vmem:[%s3 + $0x48] sm:$0xf]
          %v1636 = vld [vmem:[%s3 + $0x4c] sm:$0xf]
          %v1637 = vld [vmem:[%s3 + $0x50] sm:$0xf]
          %v1638 = vld [vmem:[%s3 + $0x54] sm:$0xf]
          %v1639 = vld [vmem:[%s3 + $0x58] sm:$0xf]
          %v1640 = vld [vmem:[%s3 + $0x5c] sm:$0xf]
          %v1641 = vld [vmem:[%s3 + $0x60] sm:$0xf]
          %v1642 = vld [vmem:[%s3 + $0x64] sm:$0xf]
          %v1643 = vld [vmem:[%s3 + $0x68] sm:$0xf]
          %v1644 = vld [vmem:[%s3 + $0x6c] sm:$0xf]
          %v1645 = vld [vmem:[%s3 + $0x70] sm:$0xf]
          %v1646 = vld [vmem:[%s3 + $0x74] sm:$0xf]
          %v1647 = vld [vmem:[%s3 + $0x78] sm:$0xf]
          %v1648 = vld [vmem:[%s3 + $0x7c] sm:$0xf]
          %v1649 = vld [vmem:[%s3 + $0x80] sm:$0xf]
          %v1650 = vld [vmem:[%s3 + $0x84] sm:$0xf]
          %v1651 = vld [vmem:[%s3 + $0x88] sm:$0xf]
          %v1652 = vld [vmem:[%s3 + $0x8c] sm:$0xf]
          %v1653 = vld [vmem:[%s3 + $0x90] sm:$0xf]
          %v1654 = vld [vmem:[%s3 + $0x94] sm:$0xf]
          %v1655 = vld [vmem:[%s3 + $0x98] sm:$0xf]
          %v1656 = vld [vmem:[%s3 + $0x9c] sm:$0xf]
          %v1657 = vld [vmem:[%s3 + $0xa0] sm:$0xf]
          %v1658 = vld [vmem:[%s3 + $0xa4] sm:$0xf]
          %v1659 = vld [vmem:[%s3 + $0xa8] sm:$0xf]
          %v1660 = vld [vmem:[%s3 + $0xac] sm:$0xf]
          %v1661 = vld [vmem:[%s3 + $0xb0] sm:$0xf]
          %v1662 = vld [vmem:[%s3 + $0xb4] sm:$0xf]
          %v1663 = vld [vmem:[%s3 + $0xb8] sm:$0xf]
          %v1664 = vld [vmem:[%s3 + $0xbc] sm:$0xf]
          %v1665 = vld [vmem:[%s3 + $0xc0] sm:$0xf]
          %v1666 = vld [vmem:[%s3 + $0xc4] sm:$0xf]
          %v1667 = vld [vmem:[%s3 + $0xc8] sm:$0xf]
          %v1668 = vld [vmem:[%s3 + $0xcc] sm:$0xf]
          %v1669 = vld [vmem:[%s3 + $0xd0] sm:$0xf]
          %v1670 = vld [vmem:[%s3 + $0xd4] sm:$0xf]
          %v1671 = vld [vmem:[%s3 + $0xd8] sm:$0xf]
          %v1672 = vld [vmem:[%s3 + $0xdc] sm:$0xf]
          %v1673 = vld [vmem:[%s3 + $0xe0] sm:$0xf]
          %v1674 = vld [vmem:[%s3 + $0xe4] sm:$0xf]
          %v1675 = vld [vmem:[%s3 + $0xe8] sm:$0xf]
          %v1676 = vld [vmem:[%s3 + $0xec] sm:$0xf]
          %v1677 = vld [vmem:[%s3 + $0xf0] sm:$0xf]
          %v1678 = vld [vmem:[%s3 + $0xf4] sm:$0xf]
          %v1679 = vld [vmem:[%s3 + $0xf8] sm:$0xf]
          %v1680 = vld [vmem:[%s3 + $0xfc] sm:$0xf]
          %v1681 = vld [vmem:[%s4] sm:$0x1]
          %v1683 = vlaneseq
          %v1684 = vshrl.u32 %v1683, 7
          %v1685 = vsub.s32 0, %v1684
          %v1686 = vrot.slane %v1681, %v1685
          %v1752 = vunpack.c.l.b16 %v1617
          %v1753 = vunpack.c.l.b16 %v1618
          %v1754 = vunpack.c.l.b16 %v1619
          %v1755 = vunpack.c.l.b16 %v1620
          %v1756 = vunpack.c.l.b16 %v1621
          %v1757 = vunpack.c.l.b16 %v1622
          %v1758 = vunpack.c.l.b16 %v1623
          %v1759 = vunpack.c.l.b16 %v1624
          %v1760 = vunpack.c.l.b16 %v1625
          %v1761 = vunpack.c.l.b16 %v1626
          %v1762 = vunpack.c.l.b16 %v1627
          %v1763 = vunpack.c.l.b16 %v1628
          %v1764 = vunpack.c.l.b16 %v1629
          %v1765 = vunpack.c.l.b16 %v1630
          %v1766 = vunpack.c.l.b16 %v1631
          %v1767 = vunpack.c.l.b16 %v1632
          %v1768 = vunpack.c.l.b16 %v1633
          %v1769 = vunpack.c.l.b16 %v1634
          %v1770 = vunpack.c.l.b16 %v1635
          %v1771 = vunpack.c.l.b16 %v1636
          %v1772 = vunpack.c.l.b16 %v1637
          %v1773 = vunpack.c.l.b16 %v1638
          %v1774 = vunpack.c.l.b16 %v1639
          %v1775 = vunpack.c.l.b16 %v1640
          %v1776 = vunpack.c.l.b16 %v1641
          %v1777 = vunpack.c.l.b16 %v1642
          %v1778 = vunpack.c.l.b16 %v1643
          %v1779 = vunpack.c.l.b16 %v1644
          %v1780 = vunpack.c.l.b16 %v1645
          %v1781 = vunpack.c.l.b16 %v1646
          %v1782 = vunpack.c.l.b16 %v1647
          %v1783 = vunpack.c.l.b16 %v1648
          %v1784 = vunpack.c.l.b16 %v1649
          %v1785 = vunpack.c.l.b16 %v1650
          %v1786 = vunpack.c.l.b16 %v1651
          %v1787 = vunpack.c.l.b16 %v1652
          %v1788 = vunpack.c.l.b16 %v1653
          %v1789 = vunpack.c.l.b16 %v1654
          %v1790 = vunpack.c.l.b16 %v1655
          %v1791 = vunpack.c.l.b16 %v1656
          %v1792 = vunpack.c.l.b16 %v1657
          %v1793 = vunpack.c.l.b16 %v1658
          %v1794 = vunpack.c.l.b16 %v1659
          %v1795 = vunpack.c.l.b16 %v1660
          %v1796 = vunpack.c.l.b16 %v1661
          %v1797 = vunpack.c.l.b16 %v1662
          %v1798 = vunpack.c.l.b16 %v1663
          %v1799 = vunpack.c.l.b16 %v1664
          %v1800 = vunpack.c.l.b16 %v1665
          %v1801 = vunpack.c.l.b16 %v1666
          %v1802 = vunpack.c.l.b16 %v1667
          %v1803 = vunpack.c.l.b16 %v1668
          %v1804 = vunpack.c.l.b16 %v1669
          %v1805 = vunpack.c.l.b16 %v1670
          %v1806 = vunpack.c.l.b16 %v1671
          %v1807 = vunpack.c.l.b16 %v1672
          %v1808 = vunpack.c.l.b16 %v1673
          %v1809 = vunpack.c.l.b16 %v1674
          %v1810 = vunpack.c.l.b16 %v1675
          %v1811 = vunpack.c.l.b16 %v1676
          %v1812 = vunpack.c.l.b16 %v1677
          %v1813 = vunpack.c.l.b16 %v1678
          %v1814 = vunpack.c.l.b16 %v1679
          %v1815 = vunpack.c.l.b16 %v1680
          %v1816 = vpack.c.b16 %v1753, %v1752
          %v1817 = vpack.c.b16 %v1755, %v1754
          %v1818 = vpack.c.b16 %v1757, %v1756
          %v1819 = vpack.c.b16 %v1759, %v1758
          %v1820 = vpack.c.b16 %v1761, %v1760
          %v1821 = vpack.c.b16 %v1763, %v1762
          %v1822 = vpack.c.b16 %v1765, %v1764
          %v1823 = vpack.c.b16 %v1767, %v1766
          %v1824 = vpack.c.b16 %v1769, %v1768
          %v1825 = vpack.c.b16 %v1771, %v1770
          %v1826 = vpack.c.b16 %v1773, %v1772
          %v1827 = vpack.c.b16 %v1775, %v1774
          %v1828 = vpack.c.b16 %v1777, %v1776
          %v1829 = vpack.c.b16 %v1779, %v1778
          %v1830 = vpack.c.b16 %v1781, %v1780
          %v1831 = vpack.c.b16 %v1783, %v1782
          %v1832 = vpack.c.b16 %v1785, %v1784
          %v1833 = vpack.c.b16 %v1787, %v1786
          %v1834 = vpack.c.b16 %v1789, %v1788
          %v1835 = vpack.c.b16 %v1791, %v1790
          %v1836 = vpack.c.b16 %v1793, %v1792
          %v1837 = vpack.c.b16 %v1795, %v1794
          %v1838 = vpack.c.b16 %v1797, %v1796
          %v1839 = vpack.c.b16 %v1799, %v1798
          %v1840 = vpack.c.b16 %v1801, %v1800
          %v1841 = vpack.c.b16 %v1803, %v1802
          %v1842 = vpack.c.b16 %v1805, %v1804
          %v1843 = vpack.c.b16 %v1807, %v1806
          %v1844 = vpack.c.b16 %v1809, %v1808
          %v1845 = vpack.c.b16 %v1811, %v1810
          %v1846 = vpack.c.b16 %v1813, %v1812
          %v1847 = vpack.c.b16 %v1815, %v1814
          %1880 = vmatprep.subr.bf16.mxu0 0
          %1881 = vmatpush1.bf16.msra.mxu0 %v1823
          %1882 = vmatprep.subr.bf16.mxu0 0
          %1883 = vmatpush1.bf16.msra.mxu0 %v1822
          %1884 = vmatprep.subr.bf16.mxu0 0
          %1885 = vmatpush1.bf16.msra.mxu0 %v1821
          %1886 = vmatprep.subr.bf16.mxu0 0
          %1887 = vmatpush1.bf16.msra.mxu0 %v1820
          %1888 = vmatprep.subr.bf16.mxu0 0
          %1889 = vmatpush1.bf16.msra.mxu0 %v1819
          %1890 = vmatprep.subr.bf16.mxu0 0
          %1891 = vmatpush1.bf16.msra.mxu0 %v1818
          %1892 = vmatprep.subr.bf16.mxu0 0
          %1893 = vmatpush1.bf16.msra.mxu0 %v1817
          %1894 = vmatprep.subr.bf16.mxu0 0
          %1895 = vmatpush1.bf16.msra.mxu0 %v1816
          %1896 = vmatprep.subr.bf16.mxu0 0
          %1897 = vmatpush2.bf16.msra.mxu0 %v1831
          %1898 = vmatprep.subr.bf16.mxu0 0
          %1899 = vmatpush2.bf16.msra.mxu0 %v1830
          %1900 = vmatprep.subr.bf16.mxu0 0
          %1901 = vmatpush2.bf16.msra.mxu0 %v1829
          %1902 = vmatprep.subr.bf16.mxu0 0
          %1903 = vmatpush2.bf16.msra.mxu0 %v1828
          %1904 = vmatprep.subr.bf16.mxu0 0
          %1905 = vmatpush2.bf16.msra.mxu0 %v1827
          %1906 = vmatprep.subr.bf16.mxu0 0
          %1907 = vmatpush2.bf16.msra.mxu0 %v1826
          %1908 = vmatprep.subr.bf16.mxu0 0
          %1909 = vmatpush2.bf16.msra.mxu0 %v1825
          %1910 = vmatprep.subr.bf16.mxu0 0
          %1911 = vmatpush2.bf16.msra.mxu0 %v1824
          %1912 = vmatprep.mubr.bf16.mxu0 %v1614
          %1913 = vmatmul.mubr.bf16.gmra.mxu0 %v1613
          %v1914 = vpop.f32.mrf.mxu0
          %v1915 = vadd.f32 %v1686, %v1914
          %v1916 = vpop.f32.mrf.mxu0
          %v1917 = vpop.f32.mrf.mxu0
          %v1918 = vadd.f32 %v1686, %v1917
          %v1919 = vpop.f32.mrf.mxu0
          %1920 = vdwg.mxu0
          %1921 = vmatprep.subr.bf16.mxu0 0
          %1922 = vmatpush1.bf16.msra.mxu0 %v1839
          %1923 = vmatprep.subr.bf16.mxu0 0
          %1924 = vmatpush1.bf16.msra.mxu0 %v1838
          %1925 = vmatprep.subr.bf16.mxu0 0
          %1926 = vmatpush1.bf16.msra.mxu0 %v1837
          %1927 = vmatprep.subr.bf16.mxu0 0
          %1928 = vmatpush1.bf16.msra.mxu0 %v1836
          %1929 = vmatprep.subr.bf16.mxu0 0
          %1930 = vmatpush1.bf16.msra.mxu0 %v1835
          %1931 = vmatprep.subr.bf16.mxu0 0
          %1932 = vmatpush1.bf16.msra.mxu0 %v1834
          %1933 = vmatprep.subr.bf16.mxu0 0
          %1934 = vmatpush1.bf16.msra.mxu0 %v1833
          %1935 = vmatprep.subr.bf16.mxu0 0
          %1936 = vmatpush1.bf16.msra.mxu0 %v1832
          %1937 = vmatprep.subr.bf16.mxu0 0
          %1938 = vmatpush2.bf16.msra.mxu0 %v1847
          %1939 = vmatprep.subr.bf16.mxu0 0
          %1940 = vmatpush2.bf16.msra.mxu0 %v1846
          %1941 = vmatprep.subr.bf16.mxu0 0
          %1942 = vmatpush2.bf16.msra.mxu0 %v1845
          %1943 = vmatprep.subr.bf16.mxu0 0
          %1944 = vmatpush2.bf16.msra.mxu0 %v1844
          %1945 = vmatprep.subr.bf16.mxu0 0
          %1946 = vmatpush2.bf16.msra.mxu0 %v1843
          %1947 = vmatprep.subr.bf16.mxu0 0
          %1948 = vmatpush2.bf16.msra.mxu0 %v1842
          %1949 = vmatprep.subr.bf16.mxu0 0
          %1950 = vmatpush2.bf16.msra.mxu0 %v1841
          %1951 = vmatprep.subr.bf16.mxu0 0
          %1952 = vmatpush2.bf16.msra.mxu0 %v1840
          %1953 = vmatprep.mubr.bf16.mxu0 %v1616
          %1954 = vmatmul.mubr.bf16.gmra.mxu0 %v1615
          %v1955 = vpop.f32.mrf.mxu0
          %v1956 = vadd.f32 %v1915, %v1955
          %v1957 = vpop.f32.mrf.mxu0
          %v1958 = vpop.f32.mrf.mxu0
          %v1959 = vadd.f32 %v1918, %v1958
          %v1960 = vpop.f32.mrf.mxu0
          %1961 = vdwg.mxu0
          %1962 = vst [vmem:[%s5] sm:$0xff] %v1956
          %1963 = vst [vmem:[%s5 + $0x8] sm:$0xff] %v1959
        $region74: #{my_module3_forward.11} parent=61 // pred_fallthru
          _
        // Predicated region
        $region75: #{my_module3_forward.11} parent=61 // pred_check
          %p1964 = pneg %p144
        $region76: #{my_module3_forward.11} parent=61 // pred_check_branch
          %1966 = sbr.rel (%p1964) target = $region78
        $region77: #{my_module3_forward.11} parent=61 // pred_region
          _
        $region78: #{my_module3_forward.11} parent=61 // pred_fallthru
          _
        // Predicated region
        $region79: #{my_module3_forward.11} parent=61 // pred_check
          %p1967 = pneg %p144
        $region80: #{my_module3_forward.11} parent=61 // pred_check_branch
          %1969 = sbr.rel (%p1967) target = $region82
        $region81: #{my_module3_forward.11} parent=61 // pred_region
          _
        $region82: #{my_module3_forward.11} parent=61 // pred_fallthru
          _
      $region62: #{my_module3_forward.11} parent=5 // pred_fallthru
        _
      %p1970 = scmp.le.s32.totalorder 2, %s11
      // Predicated region
      $region83: #{my_module3_forward.11} parent=5 // pred_check
        %p1971 = pneg %p1970
      $region84: #{my_module3_forward.11} parent=5 // pred_check_branch
        %1973 = sbr.rel (%p1971) target = $region86
      $region85: #{my_module3_forward.11} parent=5 // pred_region
        %s1974 = ssub.s32 %s11, 2
      $region86: #{my_module3_forward.11} parent=5 // pred_fallthru
        _
    $region6: #{my_module3_forward.11} parent=1 // loop_footer
      %s15 = sadd.s32 1, %s11
    $region7: #{my_module3_forward.11} parent=1 // loop_footer_branch
      %10 = sbr.rel target = $region3
    $region8: #{my_module3_forward.11} parent=1 // loop_exit
      _

</llo_original>
